<compile_context>
chip_gen: v5e
topology: v5e:2x2
jax: 0.10.0
libtpu: 0.0.40
codegen_flags: <defaults>
</compile_context>

<pallas_src>
import functools

import jax
import jax.numpy as jnp
from jax.experimental import pallas as pl
from jax.experimental.pallas import tpu as pltpu

H1, H2, H3 = 500, 500, 2000   # hidden sizes hard-coded in VectorEmbedding


def _round_up(x, m):
    return ((x + m - 1) // m) * m


# -------------------------- Kernel 1: MLP encoder ---------------------------
def _mlp_kernel(x_ref, w1, b1, w2, b2, w3, b3, w4, b4, o_ref):
    # bf16 MXU inputs, f32 accumulation (preferred_element_type), tanh in f32.
    h = x_ref[...].astype(jnp.bfloat16)
    h = jnp.tanh(jnp.dot(h, w1[...], preferred_element_type=jnp.float32) + b1[...])
    h = jnp.tanh(jnp.dot(h.astype(jnp.bfloat16), w2[...],
                         preferred_element_type=jnp.float32) + b2[...])
    h = jnp.tanh(jnp.dot(h.astype(jnp.bfloat16), w3[...],
                         preferred_element_type=jnp.float32) + b3[...])
    o_ref[...] = (jnp.dot(h.astype(jnp.bfloat16), w4[...],
                          preferred_element_type=jnp.float32) + b4[...]).astype(o_ref.dtype)


def vector_embedding(x, params, *, tile_n=None):
    n, d_in = x.shape
    latent = params["w4"].shape[1]
    if tile_n is None:
        # Fill the MXU M-dim (256 rows) for large batches; round tiny batches to
        # the sublane multiple (8) instead of padding all the way to 256.
        tile_n = min(256, _round_up(n, 8))
    n_pad = _round_up(n, tile_n)
    if n_pad != n:
        x = jnp.pad(x, ((0, n_pad - n), (0, 0)))
    grid = (n_pad // tile_n,)
    wdt = jnp.bfloat16                                   # halve weight DMA / VMEM
    full = lambda shp: pl.BlockSpec(shp, lambda i: (0, 0))   # constant weight block
    out = pl.pallas_call(
        _mlp_kernel,
        out_shape=jax.ShapeDtypeStruct((n_pad, latent), jnp.float32),
        grid=grid,
        in_specs=[
            pl.BlockSpec((tile_n, d_in), lambda i: (i, 0)),
            full((d_in, H1)), full((1, H1)),
            full((H1, H2)), full((1, H2)),
            full((H2, H3)), full((1, H3)),
            full((H3, latent)), full((1, latent)),
        ],
        out_specs=pl.BlockSpec((tile_n, latent), lambda i: (i, 0)),
        compiler_params=pltpu.CompilerParams(
            dimension_semantics=("parallel",),
            vmem_limit_bytes=32 << 20),      # fits v7x (64 MiB physical) budget
    )(x, params["w1"].astype(wdt), params["b1"],
      params["w2"].astype(wdt), params["b2"],
      params["w3"].astype(wdt), params["b3"],
      params["w4"].astype(wdt), params["b4"])
    return out[:n]


# -------------------- Kernel 2: constraint contrastive loss -----------------
def _contrastive_kernel(enc_ref, tgt_ref, enc_s_ref, lab_ref,
                        loss_ref, loss_lab_ref, *, alpha, num_clusters):
    # ---- unsupervised per-cluster loss -------------------------------------
    x = enc_ref[...]                                           # (N, L) f32
    n = x.shape[0]
    xsq = jnp.sum(x * x, axis=1, keepdims=True)                # (N, 1)
    gram = jnp.dot(x, x.T, preferred_element_type=jnp.float32)
    sq = jnp.maximum(xsq + xsq.T - 2.0 * gram, 0.0)            # d^2 (pre-sqrt, reused)
    d = jnp.sqrt(sq)
    r = jnp.maximum(alpha - d, 0.0)
    r2 = r * r
    a = sq - r2                                                # d^2 - relu(alpha-d)^2
    inv_nn = 1.0 / float(n * n)
    mean_r2 = jnp.sum(r2) * inv_nn

    # loss_c = mean(eq_c * (d^2 - r^2)) + mean(r^2) == mean(ct*d^2 - (ct-1)*r^2)
    t = tgt_ref[...]                                           # (N, C) cluster labels
    lane = jax.lax.broadcasted_iota(jnp.int32, (1, num_clusters), 1)
    loss_vec = jnp.zeros((1, num_clusters), jnp.float32)
    for c in range(num_clusters):                              # C is tiny -> unrolled
        col = t[:, c:c + 1]                                    # (N, 1)
        eq = col == col.T                                      # (N, N) match mask
        s = jnp.sum(jnp.where(eq, a, 0.0)) * inv_nn + mean_r2
        loss_vec = loss_vec + jnp.where(lane == c, s, 0.0)
    loss_ref[...] = loss_vec

    # ---- supervised (label) loss -------------------------------------------
    xs = enc_s_ref[...]                                        # (Ns, L)
    ns = xs.shape[0]
    lab = lab_ref[...]                                         # (1, Ns) int32
    xsq_s = jnp.sum(xs * xs, axis=1, keepdims=True)
    gram_s = jnp.dot(xs, xs.T, preferred_element_type=jnp.float32)
    sq_s = jnp.maximum(xsq_s + xsq_s.T - 2.0 * gram_s, 0.0)
    ds = jnp.sqrt(sq_s)
    rs = jnp.maximum(alpha - ds, 0.0)
    r2s = rs * rs
    truth = lab.T == lab                                       # (Ns, Ns)
    ll = (jnp.sum(jnp.where(truth, sq_s - r2s, 0.0)) + jnp.sum(r2s)) / float(ns * ns)
    loss_lab_ref[...] = ll[None, None]


def contrastive_loss(encoded, cluster_label, encoded_sup, label, *, alpha, M):
    # TODO(synk): tile the pairwise-distance loss over (i,j) blocks if N grows
    # beyond a few thousand (the full (N,N) gram would no longer fit VMEM).
    n, latent = encoded.shape
    c = cluster_label.shape[1]
    ns = encoded_sup.shape[0]
    label_row = label.reshape(1, ns).astype(jnp.int32)         # lane-major labels
    kernel = functools.partial(_contrastive_kernel, alpha=float(alpha), num_clusters=c)
    loss, loss_label = pl.pallas_call(
        kernel,
        out_shape=(jax.ShapeDtypeStruct((1, c), jnp.float32),
                   jax.ShapeDtypeStruct((1, 1), jnp.float32)),
        grid=(1,),
        in_specs=[pl.BlockSpec((n, latent), lambda i: (0, 0)),
                  pl.BlockSpec((n, c), lambda i: (0, 0)),
                  pl.BlockSpec((ns, latent), lambda i: (0, 0)),
                  pl.BlockSpec((1, ns), lambda i: (0, 0))],
        out_specs=(pl.BlockSpec((1, c), lambda i: (0, 0)),
                   pl.BlockSpec((1, 1), lambda i: (0, 0))),
        compiler_params=pltpu.CompilerParams(vmem_limit_bytes=32 << 20),
    )(encoded.astype(jnp.float32), cluster_label.astype(jnp.float32),
      encoded_sup.astype(jnp.float32), label_row)
    # tiny softmax-weight combine stays in plain JAX (glue)
    m = jnp.ones((c + 1,), jnp.float32).at[-1].set(float(M))
    m = jax.nn.softmax(m, axis=-1)
    return m[:-1] @ loss[0] + m[-1] * loss_label[0, 0]


# ------------------------------ FARE forward --------------------------------
def fare_forward(x, cluster_label, x_supervise, label, params, *, alpha=100.0, M=100.0):
    # Fused single encoder launch: weights are DMA'd once for both batches.
    n = x.shape[0]
    enc_all = vector_embedding(jnp.concatenate([x, x_supervise], axis=0), params)
    encoded, encoded_sup = enc_all[:n], enc_all[n:]
    return contrastive_loss(encoded, cluster_label, encoded_sup, label,
                            alpha=alpha, M=M)


# ------------------------------ parameter init -------------------------------
def init_params(key, input_dim, latent_dim):
    dims = [(input_dim, H1), (H1, H2), (H2, H3), (H3, latent_dim)]
    params = {}
    keys = jax.random.split(key, len(dims))
    for idx, ((fin, fout), k) in enumerate(zip(dims, keys), start=1):
        bound = 1.0 / float(jnp.sqrt(jnp.float32(fin)))
        kw, kb = jax.random.split(k)
        params[f"w{idx}"] = jax.random.uniform(kw, (fin, fout), jnp.float32, -bound, bound)
        params[f"b{idx}"] = jax.random.uniform(kb, (1, fout), jnp.float32, -bound, bound)
    return params


if __name__ == "__main__":
    key = jax.random.PRNGKey(0)
    k1, k2, k3, k4, kp = jax.random.split(key, 5)
    N, Ns, INPUT_DIM, LATENT_DIM, C = 8, 8, 32, 8, 3
    ALPHA, M = 100.0, 100.0

    x = jax.random.normal(k1, (N, INPUT_DIM), jnp.float32)
    cluster_label = jax.random.randint(k2, (N, C), 0, 4).astype(jnp.float32)
    x_sup = jax.random.normal(k3, (Ns, INPUT_DIM), jnp.float32)
    label = jax.random.randint(k4, (Ns,), 0, 4)
    params = init_params(kp, INPUT_DIM, LATENT_DIM)

    out = fare_forward(x, cluster_label, x_sup, label, params, alpha=ALPHA, M=M)
    jax.block_until_ready(out)

    # pure-JAX reference check (f32 everywhere)
    def ref_embed(z):
        h = jnp.tanh(z @ params["w1"] + params["b1"])
        h = jnp.tanh(h @ params["w2"] + params["b2"])
        h = jnp.tanh(h @ params["w3"] + params["b3"])
        return h @ params["w4"] + params["b4"]

    def pdist(z):
        zsq = jnp.sum(z * z, axis=1, keepdims=True)
        d = jnp.sqrt(jnp.maximum(zsq + zsq.T - 2.0 * z @ z.T, 0.0))
        return d * d, jnp.maximum(ALPHA - d, 0.0) ** 2

    e, es = ref_embed(x), ref_embed(x_sup)
    d2, r2 = pdist(e)
    ct = (cluster_label[:, None, :] == cluster_label[None, :, :]).astype(jnp.float32)
    loss_ref = jnp.mean(ct * d2[:, :, None] - (ct - 1.0) * r2[:, :, None], axis=(0, 1))
    d2s, r2s = pdist(es)
    truth = (label[:, None] == label[None, :]).astype(jnp.float32)
    loss_lab_ref = jnp.mean(truth * d2s - (truth - 1.0) * r2s)
    mw = jax.nn.softmax(jnp.ones((C + 1,), jnp.float32).at[-1].set(M))
    ref = mw[:-1] @ loss_ref + mw[-1] * loss_lab_ref

    assert jnp.allclose(out, ref, rtol=1e-2, atol=1e-2), (out, ref)
    print("KERNEL_OK")
</pallas_src>

<mosaic_0001>
module attributes {stable_mosaic.version = 11 : i64} {
  func.func @_mlp_kernel(%arg0: i32, %arg1: memref<16x32xf32, #tpu.memory_space<vmem>>, %arg2: memref<32x500xbf16, #tpu.memory_space<vmem>>, %arg3: memref<1x500xf32, #tpu.memory_space<vmem>>, %arg4: memref<500x500xbf16, #tpu.memory_space<vmem>>, %arg5: memref<1x500xf32, #tpu.memory_space<vmem>>, %arg6: memref<500x2000xbf16, #tpu.memory_space<vmem>>, %arg7: memref<1x2000xf32, #tpu.memory_space<vmem>>, %arg8: memref<2000x8xbf16, #tpu.memory_space<vmem>>, %arg9: memref<1x8xf32, #tpu.memory_space<vmem>>, %arg10: memref<16x8xf32, #tpu.memory_space<vmem>>) attributes {dimension_semantics = [#tpu.dimension_semantics<parallel>], iteration_bounds = array<i64: 1>, scalar_prefetch = 0 : i64, scratch_operands = 0 : i64, tpu.core_type = #tpu.core_type<tc>, window_params = [{transform_indices = @transform_0, window_bounds = array<i64: 16, 32>}, {pipeline_mode = #tpu.pipeline_mode<synchronous>, transform_indices = @transform_1, window_bounds = array<i64: 32, 500>}, {pipeline_mode = #tpu.pipeline_mode<synchronous>, transform_indices = @transform_2, window_bounds = array<i64: 1, 500>}, {pipeline_mode = #tpu.pipeline_mode<synchronous>, transform_indices = @transform_3, window_bounds = array<i64: 500, 500>}, {pipeline_mode = #tpu.pipeline_mode<synchronous>, transform_indices = @transform_4, window_bounds = array<i64: 1, 500>}, {pipeline_mode = #tpu.pipeline_mode<synchronous>, transform_indices = @transform_5, window_bounds = array<i64: 500, 2000>}, {pipeline_mode = #tpu.pipeline_mode<synchronous>, transform_indices = @transform_6, window_bounds = array<i64: 1, 2000>}, {pipeline_mode = #tpu.pipeline_mode<synchronous>, transform_indices = @transform_7, window_bounds = array<i64: 2000, 8>}, {pipeline_mode = #tpu.pipeline_mode<synchronous>, transform_indices = @transform_8, window_bounds = array<i64: 1, 8>}, {transform_indices = @transform_9, window_bounds = array<i64: 16, 8>}]} {
    %c0 = arith.constant 0 : index
    %c0_0 = arith.constant 0 : index
    %0 = vector.load %arg1[%c0, %c0_0] : memref<16x32xf32, #tpu.memory_space<vmem>>, vector<16x32xf32>
    %1 = arith.truncf %0 : vector<16x32xf32> to vector<16x32xbf16>
    %c0_1 = arith.constant 0 : index
    %c0_2 = arith.constant 0 : index
    %2 = vector.load %arg2[%c0_1, %c0_2] : memref<32x500xbf16, #tpu.memory_space<vmem>>, vector<32x500xbf16>
    %cst = arith.constant dense<0.000000e+00> : vector<16x500xf32>
    %3 = tpu.matmul %1, %2, %cst {dimension_numbers = #tpu.dot_dimension_numbers<[1], [0], [0], [1], [0, 0, 1, 1], [], []>} : vector<16x32xbf16>, vector<32x500xbf16>, vector<16x500xf32> -> vector<16x500xf32>
    %c0_3 = arith.constant 0 : index
    %c0_4 = arith.constant 0 : index
    %4 = vector.load %arg3[%c0_3, %c0_4] : memref<1x500xf32, #tpu.memory_space<vmem>>, vector<1x500xf32>
    %5 = vector.broadcast %4 : vector<1x500xf32> to vector<16x500xf32>
    %6 = arith.addf %3, %5 : vector<16x500xf32>
    %7 = math.tanh %6 : vector<16x500xf32>
    %8 = arith.truncf %7 : vector<16x500xf32> to vector<16x500xbf16>
    %c0_5 = arith.constant 0 : index
    %c0_6 = arith.constant 0 : index
    %9 = vector.load %arg4[%c0_5, %c0_6] : memref<500x500xbf16, #tpu.memory_space<vmem>>, vector<500x500xbf16>
    %cst_7 = arith.constant dense<0.000000e+00> : vector<16x500xf32>
    %10 = tpu.matmul %8, %9, %cst_7 {dimension_numbers = #tpu.dot_dimension_numbers<[1], [0], [0], [1], [0, 0, 1, 1], [], []>} : vector<16x500xbf16>, vector<500x500xbf16>, vector<16x500xf32> -> vector<16x500xf32>
    %c0_8 = arith.constant 0 : index
    %c0_9 = arith.constant 0 : index
    %11 = vector.load %arg5[%c0_8, %c0_9] : memref<1x500xf32, #tpu.memory_space<vmem>>, vector<1x500xf32>
    %12 = vector.broadcast %11 : vector<1x500xf32> to vector<16x500xf32>
    %13 = arith.addf %10, %12 : vector<16x500xf32>
    %14 = math.tanh %13 : vector<16x500xf32>
    %15 = arith.truncf %14 : vector<16x500xf32> to vector<16x500xbf16>
    %c0_10 = arith.constant 0 : index
    %c0_11 = arith.constant 0 : index
    %16 = vector.load %arg6[%c0_10, %c0_11] : memref<500x2000xbf16, #tpu.memory_space<vmem>>, vector<500x2000xbf16>
    %cst_12 = arith.constant dense<0.000000e+00> : vector<16x2000xf32>
    %17 = tpu.matmul %15, %16, %cst_12 {dimension_numbers = #tpu.dot_dimension_numbers<[1], [0], [0], [1], [0, 0, 1, 1], [], []>} : vector<16x500xbf16>, vector<500x2000xbf16>, vector<16x2000xf32> -> vector<16x2000xf32>
    %c0_13 = arith.constant 0 : index
    %c0_14 = arith.constant 0 : index
    %18 = vector.load %arg7[%c0_13, %c0_14] : memref<1x2000xf32, #tpu.memory_space<vmem>>, vector<1x2000xf32>
    %19 = vector.broadcast %18 : vector<1x2000xf32> to vector<16x2000xf32>
    %20 = arith.addf %17, %19 : vector<16x2000xf32>
    %21 = math.tanh %20 : vector<16x2000xf32>
    %22 = arith.truncf %21 : vector<16x2000xf32> to vector<16x2000xbf16>
    %c0_15 = arith.constant 0 : index
    %c0_16 = arith.constant 0 : index
    %23 = vector.load %arg8[%c0_15, %c0_16] : memref<2000x8xbf16, #tpu.memory_space<vmem>>, vector<2000x8xbf16>
    %cst_17 = arith.constant dense<0.000000e+00> : vector<16x8xf32>
    %24 = tpu.matmul %22, %23, %cst_17 {dimension_numbers = #tpu.dot_dimension_numbers<[1], [0], [0], [1], [0, 0, 1, 1], [], []>} : vector<16x2000xbf16>, vector<2000x8xbf16>, vector<16x8xf32> -> vector<16x8xf32>
    %c0_18 = arith.constant 0 : index
    %c0_19 = arith.constant 0 : index
    %25 = vector.load %arg9[%c0_18, %c0_19] : memref<1x8xf32, #tpu.memory_space<vmem>>, vector<1x8xf32>
    %26 = vector.broadcast %25 : vector<1x8xf32> to vector<16x8xf32>
    %27 = arith.addf %24, %26 : vector<16x8xf32>
    %c0_20 = arith.constant 0 : index
    %c0_21 = arith.constant 0 : index
    %28 = vector.load %arg10[%c0_20, %c0_21] : memref<16x8xf32, #tpu.memory_space<vmem>>, vector<16x8xf32>
    tpu.vector_store %arg10[%c0_20, %c0_21], %27 {strides = array<i32>} : memref<16x8xf32, #tpu.memory_space<vmem>>, vector<16x8xf32>,
    return
  }
  func.func @transform_0(%arg0: i32) -> (i32, i32) {
    %c0_i32 = arith.constant 0 : i32
    %c0_i32_0 = arith.constant 0 : i32
    return %arg0, %c0_i32 : i32, i32
  }
  func.func @transform_1(%arg0: i32) -> (i32, i32) {
    %c0_i32 = arith.constant 0 : i32
    %c0_i32_0 = arith.constant 0 : i32
    %c0_i32_1 = arith.constant 0 : i32
    return %c0_i32, %c0_i32_0 : i32, i32
  }
  func.func @transform_2(%arg0: i32) -> (i32, i32) {
    %c0_i32 = arith.constant 0 : i32
    %c0_i32_0 = arith.constant 0 : i32
    %c0_i32_1 = arith.constant 0 : i32
    return %c0_i32, %c0_i32_0 : i32, i32
  }
  func.func @transform_3(%arg0: i32) -> (i32, i32) {
    %c0_i32 = arith.constant 0 : i32
    %c0_i32_0 = arith.constant 0 : i32
    %c0_i32_1 = arith.constant 0 : i32
    return %c0_i32, %c0_i32_0 : i32, i32
  }
  func.func @transform_4(%arg0: i32) -> (i32, i32) {
    %c0_i32 = arith.constant 0 : i32
    %c0_i32_0 = arith.constant 0 : i32
    %c0_i32_1 = arith.constant 0 : i32
    return %c0_i32, %c0_i32_0 : i32, i32
  }
  func.func @transform_5(%arg0: i32) -> (i32, i32) {
    %c0_i32 = arith.constant 0 : i32
    %c0_i32_0 = arith.constant 0 : i32
    %c0_i32_1 = arith.constant 0 : i32
    return %c0_i32, %c0_i32_0 : i32, i32
  }
  func.func @transform_6(%arg0: i32) -> (i32, i32) {
    %c0_i32 = arith.constant 0 : i32
    %c0_i32_0 = arith.constant 0 : i32
    %c0_i32_1 = arith.constant 0 : i32
    return %c0_i32, %c0_i32_0 : i32, i32
  }
  func.func @transform_7(%arg0: i32) -> (i32, i32) {
    %c0_i32 = arith.constant 0 : i32
    %c0_i32_0 = arith.constant 0 : i32
    %c0_i32_1 = arith.constant 0 : i32
    return %c0_i32, %c0_i32_0 : i32, i32
  }
  func.func @transform_8(%arg0: i32) -> (i32, i32) {
    %c0_i32 = arith.constant 0 : i32
    %c0_i32_0 = arith.constant 0 : i32
    %c0_i32_1 = arith.constant 0 : i32
    return %c0_i32, %c0_i32_0 : i32, i32
  }
  func.func @transform_9(%arg0: i32) -> (i32, i32) {
    %c0_i32 = arith.constant 0 : i32
    %c0_i32_0 = arith.constant 0 : i32
    return %arg0, %c0_i32 : i32, i32
  }
}

</mosaic_0001>

<llo_original>
// kernel: tpu_custom_call.1
$region0: #{tpu_custom_call.1}
  #allocation0 [shape = 'u32[]', space=smem, size = 0x4, offset = 0x4, fixed_abs, tag = 'smem constant byte address 0x4 - core index']
  #allocation1 [shape = 'u32[72,128]{1,0:T(1,128)}', space=vmem, size = 0x9000, scoped, tag = 'internal scratch']
  %s0 = inlined_call_operand.vmem [shape: f32[16,32], index: 0, kind: input, shape index: {}]
  %s1 = inlined_call_operand.vmem [shape: bf16[32,500], index: 1, kind: input, shape index: {}]
  %s2 = inlined_call_operand.vmem [shape: f32[1,500], index: 2, kind: input, shape index: {}]
  %s3 = inlined_call_operand.vmem [shape: bf16[500,500], index: 3, kind: input, shape index: {}]
  %s4 = inlined_call_operand.vmem [shape: f32[1,500], index: 4, kind: input, shape index: {}]
  %s5 = inlined_call_operand.vmem [shape: bf16[500,2000], index: 5, kind: input, shape index: {}]
  %s6 = inlined_call_operand.vmem [shape: f32[1,2000], index: 6, kind: input, shape index: {}]
  %s7 = inlined_call_operand.vmem [shape: bf16[2000,8], index: 7, kind: input, shape index: {}]
  %s8 = inlined_call_operand.vmem [shape: f32[1,8], index: 8, kind: input, shape index: {}]
  %s9 = inlined_call_operand.vmem [shape: f32[16,8], index: 9, kind: output, shape index: {}]
  %s10 = sld [smem:[#allocation0]]
  $region46: #{tpu_custom_call.1} parent=0
    _
  %s12 = ssub.s32 1, %s10
  %s13 = scalar_select 0, %s12, %s10
  // Predicated region
  $region2: #{tpu_custom_call.1} parent=0 // pred_check
    _
  $region3: #{tpu_custom_call.1} parent=0 // pred_check_branch
    %15 = sbr.rel (0) target = $region5
  $region4: #{tpu_custom_call.1} parent=0 // pred_region
    _
  $region5: #{tpu_custom_call.1} parent=0 // pred_fallthru
    _
  // Predicated region
  $region6: #{tpu_custom_call.1} parent=0 // pred_check
    _
  $region7: #{tpu_custom_call.1} parent=0 // pred_check_branch
    %17 = sbr.rel (0) target = $region9
  $region8: #{tpu_custom_call.1} parent=0 // pred_region
    _
  $region9: #{tpu_custom_call.1} parent=0 // pred_fallthru
    _
  // Predicated region
  $region10: #{tpu_custom_call.1} parent=0 // pred_check
    _
  $region11: #{tpu_custom_call.1} parent=0 // pred_check_branch
    %19 = sbr.rel (0) target = $region13
  $region12: #{tpu_custom_call.1} parent=0 // pred_region
    _
  $region13: #{tpu_custom_call.1} parent=0 // pred_fallthru
    _
  // Predicated region
  $region14: #{tpu_custom_call.1} parent=0 // pred_check
    _
  $region15: #{tpu_custom_call.1} parent=0 // pred_check_branch
    %21 = sbr.rel (0) target = $region17
  $region16: #{tpu_custom_call.1} parent=0 // pred_region
    _
  $region17: #{tpu_custom_call.1} parent=0 // pred_fallthru
    _
  // Predicated region
  $region18: #{tpu_custom_call.1} parent=0 // pred_check
    _
  $region19: #{tpu_custom_call.1} parent=0 // pred_check_branch
    %23 = sbr.rel (0) target = $region21
  $region20: #{tpu_custom_call.1} parent=0 // pred_region
    _
  $region21: #{tpu_custom_call.1} parent=0 // pred_fallthru
    _
  // Predicated region
  $region22: #{tpu_custom_call.1} parent=0 // pred_check
    _
  $region23: #{tpu_custom_call.1} parent=0 // pred_check_branch
    %25 = sbr.rel (0) target = $region25
  $region24: #{tpu_custom_call.1} parent=0 // pred_region
    _
  $region25: #{tpu_custom_call.1} parent=0 // pred_fallthru
    _
  // Predicated region
  $region26: #{tpu_custom_call.1} parent=0 // pred_check
    _
  $region27: #{tpu_custom_call.1} parent=0 // pred_check_branch
    %27 = sbr.rel (0) target = $region29
  $region28: #{tpu_custom_call.1} parent=0 // pred_region
    _
  $region29: #{tpu_custom_call.1} parent=0 // pred_fallthru
    _
  // Predicated region
  $region30: #{tpu_custom_call.1} parent=0 // pred_check
    _
  $region31: #{tpu_custom_call.1} parent=0 // pred_check_branch
    %29 = sbr.rel (0) target = $region33
  $region32: #{tpu_custom_call.1} parent=0 // pred_region
    _
  $region33: #{tpu_custom_call.1} parent=0 // pred_fallthru
    _
  // Predicated region
  $region34: #{tpu_custom_call.1} parent=0 // pred_check
    _
  $region35: #{tpu_custom_call.1} parent=0 // pred_check_branch
    %31 = sbr.rel (0) target = $region37
  $region36: #{tpu_custom_call.1} parent=0 // pred_region
    _
  $region37: #{tpu_custom_call.1} parent=0 // pred_fallthru
    _
  %v33 = vld [vmem:[%s0] sm:$0xff]
  %v34 = vld [vmem:[%s0 + $0x8] sm:$0xff]
  %v35 = vpack.c.bf16 %v34, %v33
  %v36 = vld [vmem:[%s1] sm:$0xff]
  %v37 = vld [vmem:[%s1 + $0x8] sm:$0xff]
  %v38 = vld [vmem:[%s1 + $0x10] sm:$0xff]
  %v39 = vld [vmem:[%s1 + $0x18] sm:$0xff]
  %v40 = vld [vmem:[%s1 + $0x20] sm:$0xff]
  %v41 = vld [vmem:[%s1 + $0x28] sm:$0xff]
  %v42 = vld [vmem:[%s1 + $0x30] sm:$0xff]
  %v43 = vld [vmem:[%s1 + $0x38] sm:$0xff]
  %v44 = vld [vmem:[%s2] sm:$0xf]
  %v46 = vperm.slane %v44, 0
  %v47 = vperm.slane %v44, 1
  %v48 = vperm.slane %v44, 2
  %v49 = vperm.slane %v44, 3
  %v62 = vunpack.c.l.b16 %v36
  %v63 = vunpack.c.h.b16 %v36
  %v64 = vunpack.c.l.b16 %v37
  %v65 = vunpack.c.h.b16 %v37
  %v66 = vunpack.c.l.b16 %v38
  %v67 = vunpack.c.h.b16 %v38
  %v68 = vunpack.c.l.b16 %v39
  %v69 = vunpack.c.h.b16 %v39
  %v70 = vunpack.c.l.b16 %v40
  %v71 = vunpack.c.h.b16 %v40
  %v72 = vunpack.c.l.b16 %v41
  %v73 = vunpack.c.h.b16 %v41
  %v74 = vunpack.c.l.b16 %v42
  %v75 = vunpack.c.h.b16 %v42
  %v76 = vunpack.c.l.b16 %v43
  %v77 = vunpack.c.h.b16 %v43
  %v78 = vpack.c.b16 %v66, %v62
  %v79 = vpack.c.b16 %v67, %v63
  %v80 = vpack.c.b16 %v68, %v64
  %v81 = vpack.c.b16 %v69, %v65
  %v82 = vpack.c.b16 %v74, %v70
  %v83 = vpack.c.b16 %v75, %v71
  %v84 = vpack.c.b16 %v76, %v72
  %v85 = vpack.c.b16 %v77, %v73
  %vm94 = vcmask 261120
  %v96 = vsel %vm94, %v35, 0
  %98 = vmatpush.bf16.msra.mxu0 0
  %99 = vmatpush.bf16.msra.mxu0 0
  %100 = vmatpush.bf16.msra.mxu0 0
  %101 = vmatpush.bf16.msra.mxu0 0
  %102 = vmatpush.bf16.msra.mxu0 0
  %103 = vmatpush.bf16.msra.mxu0 0
  %104 = vmatpush.bf16.msra.mxu0 %v82
  %105 = vmatpush.bf16.msra.mxu0 %v78
  %106 = vmatmul.bf16.gmra.mxu0 %v96
  %v107 = vpop.f32.mrf.mxu0
  %v108 = vadd.f32 %v46, %v107
  %v109 = vpop.f32.mrf.mxu0
  %v110 = vadd.f32 %v46, %v109
  %111 = vdwg.mxu0
  %112 = vmatpush.bf16.msra.mxu0 0
  %113 = vmatpush.bf16.msra.mxu0 0
  %114 = vmatpush.bf16.msra.mxu0 0
  %115 = vmatpush.bf16.msra.mxu0 0
  %116 = vmatpush.bf16.msra.mxu0 0
  %117 = vmatpush.bf16.msra.mxu0 0
  %118 = vmatpush.bf16.msra.mxu0 %v83
  %119 = vmatpush.bf16.msra.mxu0 %v79
  %120 = vmatmul.bf16.gmra.mxu0 %v96
  %v121 = vpop.f32.mrf.mxu0
  %v122 = vadd.f32 %v47, %v121
  %v123 = vpop.f32.mrf.mxu0
  %v124 = vadd.f32 %v47, %v123
  %125 = vdwg.mxu0
  %126 = vmatpush.bf16.msra.mxu0 0
  %127 = vmatpush.bf16.msra.mxu0 0
  %128 = vmatpush.bf16.msra.mxu0 0
  %129 = vmatpush.bf16.msra.mxu0 0
  %130 = vmatpush.bf16.msra.mxu0 0
  %131 = vmatpush.bf16.msra.mxu0 0
  %132 = vmatpush.bf16.msra.mxu0 %v84
  %133 = vmatpush.bf16.msra.mxu0 %v80
  %134 = vmatmul.bf16.gmra.mxu0 %v96
  %v135 = vpop.f32.mrf.mxu0
  %v136 = vadd.f32 %v48, %v135
  %v137 = vpop.f32.mrf.mxu0
  %v138 = vadd.f32 %v48, %v137
  %139 = vdwg.mxu0
  %140 = vmatpush.bf16.msra.mxu0 0
  %141 = vmatpush.bf16.msra.mxu0 0
  %142 = vmatpush.bf16.msra.mxu0 0
  %143 = vmatpush.bf16.msra.mxu0 0
  %144 = vmatpush.bf16.msra.mxu0 0
  %145 = vmatpush.bf16.msra.mxu0 0
  %146 = vmatpush.bf16.msra.mxu0 %v85
  %147 = vmatpush.bf16.msra.mxu0 %v81
  %148 = vmatmul.bf16.gmra.mxu0 %v96
  %v149 = vpop.f32.mrf.mxu0
  %v150 = vadd.f32 %v49, %v149
  %v151 = vpop.f32.mrf.mxu0
  %v152 = vadd.f32 %v49, %v151
  %153 = vdwg.mxu0
  %v154 = vtanh.pop %v108
  %v155 = vtanh.pop %v122
  %v156 = vtanh.pop %v136
  %v157 = vtanh.pop %v150
  %v158 = vtanh.pop %v110
  %v159 = vtanh.pop %v124
  %v160 = vtanh.pop %v138
  %v161 = vtanh.pop %v152
  %v162 = vpack.c.bf16 %v158, %v154
  %v163 = vpack.c.bf16 %v159, %v155
  %v164 = vpack.c.bf16 %v160, %v156
  %v165 = vpack.c.bf16 %v161, %v157
  %v166 = vld [vmem:[%s3] sm:$0xff]
  %v167 = vld [vmem:[%s3 + $0x8] sm:$0xff]
  %v168 = vld [vmem:[%s3 + $0x10] sm:$0xff]
  %v169 = vld [vmem:[%s3 + $0x18] sm:$0xff]
  %v170 = vld [vmem:[%s3 + $0x20] sm:$0xff]
  %v171 = vld [vmem:[%s3 + $0x28] sm:$0xff]
  %v172 = vld [vmem:[%s3 + $0x30] sm:$0xff]
  %v173 = vld [vmem:[%s3 + $0x38] sm:$0xff]
  %v174 = vld [vmem:[%s3 + $0x40] sm:$0xff]
  %v175 = vld [vmem:[%s3 + $0x48] sm:$0xff]
  %v176 = vld [vmem:[%s3 + $0x50] sm:$0xff]
  %v177 = vld [vmem:[%s3 + $0x58] sm:$0xff]
  %v178 = vld [vmem:[%s3 + $0x60] sm:$0xff]
  %v179 = vld [vmem:[%s3 + $0x68] sm:$0xff]
  %v180 = vld [vmem:[%s3 + $0x70] sm:$0xff]
  %v181 = vld [vmem:[%s3 + $0x78] sm:$0xff]
  %v182 = vld [vmem:[%s3 + $0x80] sm:$0xff]
  %v183 = vld [vmem:[%s3 + $0x88] sm:$0xff]
  %v184 = vld [vmem:[%s3 + $0x90] sm:$0xff]
  %v185 = vld [vmem:[%s3 + $0x98] sm:$0xff]
  %v186 = vld [vmem:[%s3 + $0xa0] sm:$0xff]
  %v187 = vld [vmem:[%s3 + $0xa8] sm:$0xff]
  %v188 = vld [vmem:[%s3 + $0xb0] sm:$0xff]
  %v189 = vld [vmem:[%s3 + $0xb8] sm:$0xff]
  %v190 = vld [vmem:[%s3 + $0xc0] sm:$0xff]
  %v191 = vld [vmem:[%s3 + $0xc8] sm:$0xff]
  %v192 = vld [vmem:[%s3 + $0xd0] sm:$0xff]
  %v193 = vld [vmem:[%s3 + $0xd8] sm:$0xff]
  %v194 = vld [vmem:[%s3 + $0xe0] sm:$0xff]
  %v195 = vld [vmem:[%s3 + $0xe8] sm:$0xff]
  %v196 = vld [vmem:[%s3 + $0xf0] sm:$0xff]
  %v197 = vld [vmem:[%s3 + $0xf8] sm:$0xff]
  %v198 = vld [vmem:[%s3 + $0x100] sm:$0xff]
  %v199 = vld [vmem:[%s3 + $0x108] sm:$0xff]
  %v200 = vld [vmem:[%s3 + $0x110] sm:$0xff]
  %v201 = vld [vmem:[%s3 + $0x118] sm:$0xff]
  %v202 = vld [vmem:[%s3 + $0x120] sm:$0xff]
  %v203 = vld [vmem:[%s3 + $0x128] sm:$0xff]
  %v204 = vld [vmem:[%s3 + $0x130] sm:$0xff]
  %v205 = vld [vmem:[%s3 + $0x138] sm:$0xff]
  %v206 = vld [vmem:[%s3 + $0x140] sm:$0xff]
  %v207 = vld [vmem:[%s3 + $0x148] sm:$0xff]
  %v208 = vld [vmem:[%s3 + $0x150] sm:$0xff]
  %v209 = vld [vmem:[%s3 + $0x158] sm:$0xff]
  %v210 = vld [vmem:[%s3 + $0x160] sm:$0xff]
  %v211 = vld [vmem:[%s3 + $0x168] sm:$0xff]
  %v212 = vld [vmem:[%s3 + $0x170] sm:$0xff]
  %v213 = vld [vmem:[%s3 + $0x178] sm:$0xff]
  %v214 = vld [vmem:[%s3 + $0x180] sm:$0xff]
  %v215 = vld [vmem:[%s3 + $0x188] sm:$0xff]
  %v216 = vld [vmem:[%s3 + $0x190] sm:$0xff]
  %v217 = vld [vmem:[%s3 + $0x198] sm:$0xff]
  %v218 = vld [vmem:[%s3 + $0x1a0] sm:$0xff]
  %v219 = vld [vmem:[%s3 + $0x1a8] sm:$0xff]
  %v220 = vld [vmem:[%s3 + $0x1b0] sm:$0xff]
  %v221 = vld [vmem:[%s3 + $0x1b8] sm:$0xff]
  %v222 = vld [vmem:[%s3 + $0x1c0] sm:$0xff]
  %v223 = vld [vmem:[%s3 + $0x1c8] sm:$0xff]
  %v224 = vld [vmem:[%s3 + $0x1d0] sm:$0xff]
  %v225 = vld [vmem:[%s3 + $0x1d8] sm:$0xff]
  %v226 = vld [vmem:[%s3 + $0x1e0] sm:$0xff]
  %v227 = vld [vmem:[%s3 + $0x1e8] sm:$0xff]
  %v228 = vld [vmem:[%s3 + $0x1f0] sm:$0xff]
  %v229 = vld [vmem:[%s3 + $0x1f8] sm:$0xff]
  %v230 = vld [vmem:[%s3 + $0x200] sm:$0xff]
  %v231 = vld [vmem:[%s3 + $0x208] sm:$0xff]
  %v232 = vld [vmem:[%s3 + $0x210] sm:$0xff]
  %v233 = vld [vmem:[%s3 + $0x218] sm:$0xff]
  %v234 = vld [vmem:[%s3 + $0x220] sm:$0xff]
  %v235 = vld [vmem:[%s3 + $0x228] sm:$0xff]
  %v236 = vld [vmem:[%s3 + $0x230] sm:$0xff]
  %v237 = vld [vmem:[%s3 + $0x238] sm:$0xff]
  %v238 = vld [vmem:[%s3 + $0x240] sm:$0xff]
  %v239 = vld [vmem:[%s3 + $0x248] sm:$0xff]
  %v240 = vld [vmem:[%s3 + $0x250] sm:$0xff]
  %v241 = vld [vmem:[%s3 + $0x258] sm:$0xff]
  %v242 = vld [vmem:[%s3 + $0x260] sm:$0xff]
  %v243 = vld [vmem:[%s3 + $0x268] sm:$0xff]
  %v244 = vld [vmem:[%s3 + $0x270] sm:$0xff]
  %v245 = vld [vmem:[%s3 + $0x278] sm:$0xff]
  %v246 = vld [vmem:[%s3 + $0x280] sm:$0xff]
  %v247 = vld [vmem:[%s3 + $0x288] sm:$0xff]
  %v248 = vld [vmem:[%s3 + $0x290] sm:$0xff]
  %v249 = vld [vmem:[%s3 + $0x298] sm:$0xff]
  %v250 = vld [vmem:[%s3 + $0x2a0] sm:$0xff]
  %v251 = vld [vmem:[%s3 + $0x2a8] sm:$0xff]
  %v252 = vld [vmem:[%s3 + $0x2b0] sm:$0xff]
  %v253 = vld [vmem:[%s3 + $0x2b8] sm:$0xff]
  %v254 = vld [vmem:[%s3 + $0x2c0] sm:$0xff]
  %v255 = vld [vmem:[%s3 + $0x2c8] sm:$0xff]
  %v256 = vld [vmem:[%s3 + $0x2d0] sm:$0xff]
  %v257 = vld [vmem:[%s3 + $0x2d8] sm:$0xff]
  %v258 = vld [vmem:[%s3 + $0x2e0] sm:$0xff]
  %v259 = vld [vmem:[%s3 + $0x2e8] sm:$0xff]
  %v260 = vld [vmem:[%s3 + $0x2f0] sm:$0xff]
  %v261 = vld [vmem:[%s3 + $0x2f8] sm:$0xff]
  %v262 = vld [vmem:[%s3 + $0x300] sm:$0xff]
  %v263 = vld [vmem:[%s3 + $0x308] sm:$0xff]
  %v264 = vld [vmem:[%s3 + $0x310] sm:$0xff]
  %v265 = vld [vmem:[%s3 + $0x318] sm:$0xff]
  %v266 = vld [vmem:[%s3 + $0x320] sm:$0xff]
  %v267 = vld [vmem:[%s3 + $0x328] sm:$0xff]
  %v268 = vld [vmem:[%s3 + $0x330] sm:$0xff]
  %v269 = vld [vmem:[%s3 + $0x338] sm:$0xff]
  %v270 = vld [vmem:[%s3 + $0x340] sm:$0xff]
  %v271 = vld [vmem:[%s3 + $0x348] sm:$0xff]
  %v272 = vld [vmem:[%s3 + $0x350] sm:$0xff]
  %v273 = vld [vmem:[%s3 + $0x358] sm:$0xff]
  %v274 = vld [vmem:[%s3 + $0x360] sm:$0xff]
  %v275 = vld [vmem:[%s3 + $0x368] sm:$0xff]
  %v276 = vld [vmem:[%s3 + $0x370] sm:$0xff]
  %v277 = vld [vmem:[%s3 + $0x378] sm:$0xff]
  %v278 = vld [vmem:[%s3 + $0x380] sm:$0xff]
  %v279 = vld [vmem:[%s3 + $0x388] sm:$0xff]
  %v280 = vld [vmem:[%s3 + $0x390] sm:$0xff]
  %v281 = vld [vmem:[%s3 + $0x398] sm:$0xff]
  %v282 = vld [vmem:[%s3 + $0x3a0] sm:$0xff]
  %v283 = vld [vmem:[%s3 + $0x3a8] sm:$0xff]
  %v284 = vld [vmem:[%s3 + $0x3b0] sm:$0xff]
  %v285 = vld [vmem:[%s3 + $0x3b8] sm:$0xff]
  %v286 = vld [vmem:[%s3 + $0x3c0] sm:$0xff]
  %v287 = vld [vmem:[%s3 + $0x3c8] sm:$0xff]
  %v288 = vld [vmem:[%s3 + $0x3d0] sm:$0xff]
  %v289 = vld [vmem:[%s3 + $0x3d8] sm:$0xff]
  %v290 = vld [vmem:[%s3 + $0x3e0] sm:$0x33]
  %v291 = vld [vmem:[%s3 + $0x3e8] sm:$0x33]
  %v292 = vld [vmem:[%s4] sm:$0xf]
  %v294 = vperm.slane %v292, 0
  %v295 = vperm.slane %v292, 1
  %v296 = vperm.slane %v292, 2
  %v297 = vperm.slane %v292, 3
  %v428 = vunpack.c.l.b16 %v166
  %v429 = vunpack.c.h.b16 %v166
  %v430 = vunpack.c.l.b16 %v167
  %v431 = vunpack.c.h.b16 %v167
  %v432 = vunpack.c.l.b16 %v168
  %v433 = vunpack.c.h.b16 %v168
  %v434 = vunpack.c.l.b16 %v169
  %v435 = vunpack.c.h.b16 %v169
  %v436 = vunpack.c.l.b16 %v170
  %v437 = vunpack.c.h.b16 %v170
  %v438 = vunpack.c.l.b16 %v171
  %v439 = vunpack.c.h.b16 %v171
  %v440 = vunpack.c.l.b16 %v172
  %v441 = vunpack.c.h.b16 %v172
  %v442 = vunpack.c.l.b16 %v173
  %v443 = vunpack.c.h.b16 %v173
  %v444 = vunpack.c.l.b16 %v174
  %v445 = vunpack.c.h.b16 %v174
  %v446 = vunpack.c.l.b16 %v175
  %v447 = vunpack.c.h.b16 %v175
  %v448 = vunpack.c.l.b16 %v176
  %v449 = vunpack.c.h.b16 %v176
  %v450 = vunpack.c.l.b16 %v177
  %v451 = vunpack.c.h.b16 %v177
  %v452 = vunpack.c.l.b16 %v178
  %v453 = vunpack.c.h.b16 %v178
  %v454 = vunpack.c.l.b16 %v179
  %v455 = vunpack.c.h.b16 %v179
  %v456 = vunpack.c.l.b16 %v180
  %v457 = vunpack.c.h.b16 %v180
  %v458 = vunpack.c.l.b16 %v181
  %v459 = vunpack.c.h.b16 %v181
  %v460 = vunpack.c.l.b16 %v182
  %v461 = vunpack.c.h.b16 %v182
  %v462 = vunpack.c.l.b16 %v183
  %v463 = vunpack.c.h.b16 %v183
  %v464 = vunpack.c.l.b16 %v184
  %v465 = vunpack.c.h.b16 %v184
  %v466 = vunpack.c.l.b16 %v185
  %v467 = vunpack.c.h.b16 %v185
  %v468 = vunpack.c.l.b16 %v186
  %v469 = vunpack.c.h.b16 %v186
  %v470 = vunpack.c.l.b16 %v187
  %v471 = vunpack.c.h.b16 %v187
  %v472 = vunpack.c.l.b16 %v188
  %v473 = vunpack.c.h.b16 %v188
  %v474 = vunpack.c.l.b16 %v189
  %v475 = vunpack.c.h.b16 %v189
  %v476 = vunpack.c.l.b16 %v190
  %v477 = vunpack.c.h.b16 %v190
  %v478 = vunpack.c.l.b16 %v191
  %v479 = vunpack.c.h.b16 %v191
  %v480 = vunpack.c.l.b16 %v192
  %v481 = vunpack.c.h.b16 %v192
  %v482 = vunpack.c.l.b16 %v193
  %v483 = vunpack.c.h.b16 %v193
  %v484 = vunpack.c.l.b16 %v194
  %v485 = vunpack.c.h.b16 %v194
  %v486 = vunpack.c.l.b16 %v195
  %v487 = vunpack.c.h.b16 %v195
  %v488 = vunpack.c.l.b16 %v196
  %v489 = vunpack.c.h.b16 %v196
  %v490 = vunpack.c.l.b16 %v197
  %v491 = vunpack.c.h.b16 %v197
  %v492 = vunpack.c.l.b16 %v198
  %v493 = vunpack.c.h.b16 %v198
  %v494 = vunpack.c.l.b16 %v199
  %v495 = vunpack.c.h.b16 %v199
  %v496 = vunpack.c.l.b16 %v200
  %v497 = vunpack.c.h.b16 %v200
  %v498 = vunpack.c.l.b16 %v201
  %v499 = vunpack.c.h.b16 %v201
  %v500 = vunpack.c.l.b16 %v202
  %v501 = vunpack.c.h.b16 %v202
  %v502 = vunpack.c.l.b16 %v203
  %v503 = vunpack.c.h.b16 %v203
  %v504 = vunpack.c.l.b16 %v204
  %v505 = vunpack.c.h.b16 %v204
  %v506 = vunpack.c.l.b16 %v205
  %v507 = vunpack.c.h.b16 %v205
  %v508 = vunpack.c.l.b16 %v206
  %v509 = vunpack.c.h.b16 %v206
  %v510 = vunpack.c.l.b16 %v207
  %v511 = vunpack.c.h.b16 %v207
  %v512 = vunpack.c.l.b16 %v208
  %v513 = vunpack.c.h.b16 %v208
  %v514 = vunpack.c.l.b16 %v209
  %v515 = vunpack.c.h.b16 %v209
  %v516 = vunpack.c.l.b16 %v210
  %v517 = vunpack.c.h.b16 %v210
  %v518 = vunpack.c.l.b16 %v211
  %v519 = vunpack.c.h.b16 %v211
  %v520 = vunpack.c.l.b16 %v212
  %v521 = vunpack.c.h.b16 %v212
  %v522 = vunpack.c.l.b16 %v213
  %v523 = vunpack.c.h.b16 %v213
  %v524 = vunpack.c.l.b16 %v214
  %v525 = vunpack.c.h.b16 %v214
  %v526 = vunpack.c.l.b16 %v215
  %v527 = vunpack.c.h.b16 %v215
  %v528 = vunpack.c.l.b16 %v216
  %v529 = vunpack.c.h.b16 %v216
  %v530 = vunpack.c.l.b16 %v217
  %v531 = vunpack.c.h.b16 %v217
  %v532 = vunpack.c.l.b16 %v218
  %v533 = vunpack.c.h.b16 %v218
  %v534 = vunpack.c.l.b16 %v219
  %v535 = vunpack.c.h.b16 %v219
  %v536 = vunpack.c.l.b16 %v220
  %v537 = vunpack.c.h.b16 %v220
  %v538 = vunpack.c.l.b16 %v221
  %v539 = vunpack.c.h.b16 %v221
  %v540 = vunpack.c.l.b16 %v222
  %v541 = vunpack.c.h.b16 %v222
  %v542 = vunpack.c.l.b16 %v223
  %v543 = vunpack.c.h.b16 %v223
  %v544 = vunpack.c.l.b16 %v224
  %v545 = vunpack.c.h.b16 %v224
  %v546 = vunpack.c.l.b16 %v225
  %v547 = vunpack.c.h.b16 %v225
  %v548 = vunpack.c.l.b16 %v226
  %v549 = vunpack.c.h.b16 %v226
  %v550 = vunpack.c.l.b16 %v227
  %v551 = vunpack.c.h.b16 %v227
  %v552 = vunpack.c.l.b16 %v228
  %v553 = vunpack.c.h.b16 %v228
  %v554 = vunpack.c.l.b16 %v229
  %v555 = vunpack.c.h.b16 %v229
  %v556 = vunpack.c.l.b16 %v230
  %v557 = vunpack.c.h.b16 %v230
  %v558 = vunpack.c.l.b16 %v231
  %v559 = vunpack.c.h.b16 %v231
  %v560 = vunpack.c.l.b16 %v232
  %v561 = vunpack.c.h.b16 %v232
  %v562 = vunpack.c.l.b16 %v233
  %v563 = vunpack.c.h.b16 %v233
  %v564 = vunpack.c.l.b16 %v234
  %v565 = vunpack.c.h.b16 %v234
  %v566 = vunpack.c.l.b16 %v235
  %v567 = vunpack.c.h.b16 %v235
  %v568 = vunpack.c.l.b16 %v236
  %v569 = vunpack.c.h.b16 %v236
  %v570 = vunpack.c.l.b16 %v237
  %v571 = vunpack.c.h.b16 %v237
  %v572 = vunpack.c.l.b16 %v238
  %v573 = vunpack.c.h.b16 %v238
  %v574 = vunpack.c.l.b16 %v239
  %v575 = vunpack.c.h.b16 %v239
  %v576 = vunpack.c.l.b16 %v240
  %v577 = vunpack.c.h.b16 %v240
  %v578 = vunpack.c.l.b16 %v241
  %v579 = vunpack.c.h.b16 %v241
  %v580 = vunpack.c.l.b16 %v242
  %v581 = vunpack.c.h.b16 %v242
  %v582 = vunpack.c.l.b16 %v243
  %v583 = vunpack.c.h.b16 %v243
  %v584 = vunpack.c.l.b16 %v244
  %v585 = vunpack.c.h.b16 %v244
  %v586 = vunpack.c.l.b16 %v245
  %v587 = vunpack.c.h.b16 %v245
  %v588 = vunpack.c.l.b16 %v246
  %v589 = vunpack.c.h.b16 %v246
  %v590 = vunpack.c.l.b16 %v247
  %v591 = vunpack.c.h.b16 %v247
  %v592 = vunpack.c.l.b16 %v248
  %v593 = vunpack.c.h.b16 %v248
  %v594 = vunpack.c.l.b16 %v249
  %v595 = vunpack.c.h.b16 %v249
  %v596 = vunpack.c.l.b16 %v250
  %v597 = vunpack.c.h.b16 %v250
  %v598 = vunpack.c.l.b16 %v251
  %v599 = vunpack.c.h.b16 %v251
  %v600 = vunpack.c.l.b16 %v252
  %v601 = vunpack.c.h.b16 %v252
  %v602 = vunpack.c.l.b16 %v253
  %v603 = vunpack.c.h.b16 %v253
  %v604 = vunpack.c.l.b16 %v254
  %v605 = vunpack.c.h.b16 %v254
  %v606 = vunpack.c.l.b16 %v255
  %v607 = vunpack.c.h.b16 %v255
  %v608 = vunpack.c.l.b16 %v256
  %v609 = vunpack.c.h.b16 %v256
  %v610 = vunpack.c.l.b16 %v257
  %v611 = vunpack.c.h.b16 %v257
  %v612 = vunpack.c.l.b16 %v258
  %v613 = vunpack.c.h.b16 %v258
  %v614 = vunpack.c.l.b16 %v259
  %v615 = vunpack.c.h.b16 %v259
  %v616 = vunpack.c.l.b16 %v260
  %v617 = vunpack.c.h.b16 %v260
  %v618 = vunpack.c.l.b16 %v261
  %v619 = vunpack.c.h.b16 %v261
  %v620 = vunpack.c.l.b16 %v262
  %v621 = vunpack.c.h.b16 %v262
  %v622 = vunpack.c.l.b16 %v263
  %v623 = vunpack.c.h.b16 %v263
  %v624 = vunpack.c.l.b16 %v264
  %v625 = vunpack.c.h.b16 %v264
  %v626 = vunpack.c.l.b16 %v265
  %v627 = vunpack.c.h.b16 %v265
  %v628 = vunpack.c.l.b16 %v266
  %v629 = vunpack.c.h.b16 %v266
  %v630 = vunpack.c.l.b16 %v267
  %v631 = vunpack.c.h.b16 %v267
  %v632 = vunpack.c.l.b16 %v268
  %v633 = vunpack.c.h.b16 %v268
  %v634 = vunpack.c.l.b16 %v269
  %v635 = vunpack.c.h.b16 %v269
  %v636 = vunpack.c.l.b16 %v270
  %v637 = vunpack.c.h.b16 %v270
  %v638 = vunpack.c.l.b16 %v271
  %v639 = vunpack.c.h.b16 %v271
  %v640 = vunpack.c.l.b16 %v272
  %v641 = vunpack.c.h.b16 %v272
  %v642 = vunpack.c.l.b16 %v273
  %v643 = vunpack.c.h.b16 %v273
  %v644 = vunpack.c.l.b16 %v274
  %v645 = vunpack.c.h.b16 %v274
  %v646 = vunpack.c.l.b16 %v275
  %v647 = vunpack.c.h.b16 %v275
  %v648 = vunpack.c.l.b16 %v276
  %v649 = vunpack.c.h.b16 %v276
  %v650 = vunpack.c.l.b16 %v277
  %v651 = vunpack.c.h.b16 %v277
  %v652 = vunpack.c.l.b16 %v278
  %v653 = vunpack.c.h.b16 %v278
  %v654 = vunpack.c.l.b16 %v279
  %v655 = vunpack.c.h.b16 %v279
  %v656 = vunpack.c.l.b16 %v280
  %v657 = vunpack.c.h.b16 %v280
  %v658 = vunpack.c.l.b16 %v281
  %v659 = vunpack.c.h.b16 %v281
  %v660 = vunpack.c.l.b16 %v282
  %v661 = vunpack.c.h.b16 %v282
  %v662 = vunpack.c.l.b16 %v283
  %v663 = vunpack.c.h.b16 %v283
  %v664 = vunpack.c.l.b16 %v284
  %v665 = vunpack.c.h.b16 %v284
  %v666 = vunpack.c.l.b16 %v285
  %v667 = vunpack.c.h.b16 %v285
  %v668 = vunpack.c.l.b16 %v286
  %v669 = vunpack.c.h.b16 %v286
  %v670 = vunpack.c.l.b16 %v287
  %v671 = vunpack.c.h.b16 %v287
  %v672 = vunpack.c.l.b16 %v288
  %v673 = vunpack.c.h.b16 %v288
  %v674 = vunpack.c.l.b16 %v289
  %v675 = vunpack.c.h.b16 %v289
  %v676 = vunpack.c.l.b16 %v290
  %v677 = vunpack.c.h.b16 %v290
  %v678 = vunpack.c.l.b16 %v291
  %v679 = vunpack.c.h.b16 %v291
  %v680 = vpack.c.b16 %v432, %v428
  %v681 = vpack.c.b16 %v433, %v429
  %v682 = vpack.c.b16 %v434, %v430
  %v683 = vpack.c.b16 %v435, %v431
  %v684 = vpack.c.b16 %v440, %v436
  %v685 = vpack.c.b16 %v441, %v437
  %v686 = vpack.c.b16 %v442, %v438
  %v687 = vpack.c.b16 %v443, %v439
  %v688 = vpack.c.b16 %v448, %v444
  %v689 = vpack.c.b16 %v449, %v445
  %v690 = vpack.c.b16 %v450, %v446
  %v691 = vpack.c.b16 %v451, %v447
  %v692 = vpack.c.b16 %v456, %v452
  %v693 = vpack.c.b16 %v457, %v453
  %v694 = vpack.c.b16 %v458, %v454
  %v695 = vpack.c.b16 %v459, %v455
  %v696 = vpack.c.b16 %v464, %v460
  %v697 = vpack.c.b16 %v465, %v461
  %v698 = vpack.c.b16 %v466, %v462
  %v699 = vpack.c.b16 %v467, %v463
  %v700 = vpack.c.b16 %v472, %v468
  %v701 = vpack.c.b16 %v473, %v469
  %v702 = vpack.c.b16 %v474, %v470
  %v703 = vpack.c.b16 %v475, %v471
  %v704 = vpack.c.b16 %v480, %v476
  %v705 = vpack.c.b16 %v481, %v477
  %v706 = vpack.c.b16 %v482, %v478
  %v707 = vpack.c.b16 %v483, %v479
  %v708 = vpack.c.b16 %v488, %v484
  %v709 = vpack.c.b16 %v489, %v485
  %v710 = vpack.c.b16 %v490, %v486
  %v711 = vpack.c.b16 %v491, %v487
  %v712 = vpack.c.b16 %v496, %v492
  %v713 = vpack.c.b16 %v497, %v493
  %v714 = vpack.c.b16 %v498, %v494
  %v715 = vpack.c.b16 %v499, %v495
  %v716 = vpack.c.b16 %v504, %v500
  %v717 = vpack.c.b16 %v505, %v501
  %v718 = vpack.c.b16 %v506, %v502
  %v719 = vpack.c.b16 %v507, %v503
  %v720 = vpack.c.b16 %v512, %v508
  %v721 = vpack.c.b16 %v513, %v509
  %v722 = vpack.c.b16 %v514, %v510
  %v723 = vpack.c.b16 %v515, %v511
  %v724 = vpack.c.b16 %v520, %v516
  %v725 = vpack.c.b16 %v521, %v517
  %v726 = vpack.c.b16 %v522, %v518
  %v727 = vpack.c.b16 %v523, %v519
  %v728 = vpack.c.b16 %v528, %v524
  %v729 = vpack.c.b16 %v529, %v525
  %v730 = vpack.c.b16 %v530, %v526
  %v731 = vpack.c.b16 %v531, %v527
  %v732 = vpack.c.b16 %v536, %v532
  %v733 = vpack.c.b16 %v537, %v533
  %v734 = vpack.c.b16 %v538, %v534
  %v735 = vpack.c.b16 %v539, %v535
  %v736 = vpack.c.b16 %v544, %v540
  %v737 = vpack.c.b16 %v545, %v541
  %v738 = vpack.c.b16 %v546, %v542
  %v739 = vpack.c.b16 %v547, %v543
  %v740 = vpack.c.b16 %v552, %v548
  %v741 = vpack.c.b16 %v553, %v549
  %v742 = vpack.c.b16 %v554, %v550
  %v743 = vpack.c.b16 %v555, %v551
  %v744 = vpack.c.b16 %v560, %v556
  %v745 = vpack.c.b16 %v561, %v557
  %v746 = vpack.c.b16 %v562, %v558
  %v747 = vpack.c.b16 %v563, %v559
  %v748 = vpack.c.b16 %v568, %v564
  %v749 = vpack.c.b16 %v569, %v565
  %v750 = vpack.c.b16 %v570, %v566
  %v751 = vpack.c.b16 %v571, %v567
  %v752 = vpack.c.b16 %v576, %v572
  %v753 = vpack.c.b16 %v577, %v573
  %v754 = vpack.c.b16 %v578, %v574
  %v755 = vpack.c.b16 %v579, %v575
  %v756 = vpack.c.b16 %v584, %v580
  %v757 = vpack.c.b16 %v585, %v581
  %v758 = vpack.c.b16 %v586, %v582
  %v759 = vpack.c.b16 %v587, %v583
  %v760 = vpack.c.b16 %v592, %v588
  %v761 = vpack.c.b16 %v593, %v589
  %v762 = vpack.c.b16 %v594, %v590
  %v763 = vpack.c.b16 %v595, %v591
  %v764 = vpack.c.b16 %v600, %v596
  %v765 = vpack.c.b16 %v601, %v597
  %v766 = vpack.c.b16 %v602, %v598
  %v767 = vpack.c.b16 %v603, %v599
  %v768 = vpack.c.b16 %v608, %v604
  %v769 = vpack.c.b16 %v609, %v605
  %v770 = vpack.c.b16 %v610, %v606
  %v771 = vpack.c.b16 %v611, %v607
  %v772 = vpack.c.b16 %v616, %v612
  %v773 = vpack.c.b16 %v617, %v613
  %v774 = vpack.c.b16 %v618, %v614
  %v775 = vpack.c.b16 %v619, %v615
  %v776 = vpack.c.b16 %v624, %v620
  %v777 = vpack.c.b16 %v625, %v621
  %v778 = vpack.c.b16 %v626, %v622
  %v779 = vpack.c.b16 %v627, %v623
  %v780 = vpack.c.b16 %v632, %v628
  %v781 = vpack.c.b16 %v633, %v629
  %v782 = vpack.c.b16 %v634, %v630
  %v783 = vpack.c.b16 %v635, %v631
  %v784 = vpack.c.b16 %v640, %v636
  %v785 = vpack.c.b16 %v641, %v637
  %v786 = vpack.c.b16 %v642, %v638
  %v787 = vpack.c.b16 %v643, %v639
  %v788 = vpack.c.b16 %v648, %v644
  %v789 = vpack.c.b16 %v649, %v645
  %v790 = vpack.c.b16 %v650, %v646
  %v791 = vpack.c.b16 %v651, %v647
  %v792 = vpack.c.b16 %v656, %v652
  %v793 = vpack.c.b16 %v657, %v653
  %v794 = vpack.c.b16 %v658, %v654
  %v795 = vpack.c.b16 %v659, %v655
  %v796 = vpack.c.b16 %v664, %v660
  %v797 = vpack.c.b16 %v665, %v661
  %v798 = vpack.c.b16 %v666, %v662
  %v799 = vpack.c.b16 %v667, %v663
  %v800 = vpack.c.b16 %v672, %v668
  %v801 = vpack.c.b16 %v673, %v669
  %v802 = vpack.c.b16 %v674, %v670
  %v803 = vpack.c.b16 %v675, %v671
  %v804 = vpack.c.b16 %v676, %v676
  %v805 = vpack.c.b16 %v677, %v677
  %v806 = vpack.c.b16 %v678, %v678
  %v807 = vpack.c.b16 %v679, %v679
  %vm932 = vcmask 949248
  %v934 = vsel %vm932, %v165, 0
  %vm936 = vcmask 1041408
  %v938 = vsel %vm936, %v804, 0
  %v941 = vsel %vm936, %v805, 0
  %v944 = vsel %vm936, %v806, 0
  %v947 = vsel %vm936, %v807, 0
  %949 = vmatpush.bf16.msra.mxu0 %v708
  %950 = vmatpush.bf16.msra.mxu0 %v704
  %951 = vmatpush.bf16.msra.mxu0 %v700
  %952 = vmatpush.bf16.msra.mxu0 %v696
  %953 = vmatpush.bf16.msra.mxu0 %v692
  %954 = vmatpush.bf16.msra.mxu0 %v688
  %955 = vmatpush.bf16.msra.mxu0 %v684
  %956 = vmatpush.bf16.msra.mxu0 %v680
  %957 = vmatmul.bf16.gmra.mxu0 %v162
  %v958 = vpop.f32.mrf.mxu0
  %v959 = vadd.f32 %v294, %v958
  %v960 = vpop.f32.mrf.mxu0
  %v961 = vadd.f32 %v294, %v960
  %962 = vdwg.mxu0
  %963 = vmatpush.bf16.msra.mxu0 %v740
  %964 = vmatpush.bf16.msra.mxu0 %v736
  %965 = vmatpush.bf16.msra.mxu0 %v732
  %966 = vmatpush.bf16.msra.mxu0 %v728
  %967 = vmatpush.bf16.msra.mxu0 %v724
  %968 = vmatpush.bf16.msra.mxu0 %v720
  %969 = vmatpush.bf16.msra.mxu0 %v716
  %970 = vmatpush.bf16.msra.mxu0 %v712
  %971 = vmatmul.bf16.gmra.mxu0 %v163
  %v972 = vpop.f32.mrf.mxu0
  %v973 = vadd.f32 %v959, %v972
  %v974 = vpop.f32.mrf.mxu0
  %v975 = vadd.f32 %v961, %v974
  %976 = vdwg.mxu0
  %977 = vmatpush.bf16.msra.mxu0 %v772
  %978 = vmatpush.bf16.msra.mxu0 %v768
  %979 = vmatpush.bf16.msra.mxu0 %v764
  %980 = vmatpush.bf16.msra.mxu0 %v760
  %981 = vmatpush.bf16.msra.mxu0 %v756
  %982 = vmatpush.bf16.msra.mxu0 %v752
  %983 = vmatpush.bf16.msra.mxu0 %v748
  %984 = vmatpush.bf16.msra.mxu0 %v744
  %985 = vmatmul.bf16.gmra.mxu0 %v164
  %v986 = vpop.f32.mrf.mxu0
  %v987 = vadd.f32 %v973, %v986
  %v988 = vpop.f32.mrf.mxu0
  %v989 = vadd.f32 %v975, %v988
  %990 = vdwg.mxu0
  %991 = vmatpush.bf16.msra.mxu0 %v938
  %992 = vmatpush.bf16.msra.mxu0 %v800
  %993 = vmatpush.bf16.msra.mxu0 %v796
  %994 = vmatpush.bf16.msra.mxu0 %v792
  %995 = vmatpush.bf16.msra.mxu0 %v788
  %996 = vmatpush.bf16.msra.mxu0 %v784
  %997 = vmatpush.bf16.msra.mxu0 %v780
  %998 = vmatpush.bf16.msra.mxu0 %v776
  %999 = vmatmul.bf16.gmra.mxu0 %v934
  %v1000 = vpop.f32.mrf.mxu0
  %v1001 = vadd.f32 %v987, %v1000
  %v1002 = vpop.f32.mrf.mxu0
  %v1003 = vadd.f32 %v989, %v1002
  %1004 = vdwg.mxu0
  %1005 = vmatpush.bf16.msra.mxu0 %v709
  %1006 = vmatpush.bf16.msra.mxu0 %v705
  %1007 = vmatpush.bf16.msra.mxu0 %v701
  %1008 = vmatpush.bf16.msra.mxu0 %v697
  %1009 = vmatpush.bf16.msra.mxu0 %v693
  %1010 = vmatpush.bf16.msra.mxu0 %v689
  %1011 = vmatpush.bf16.msra.mxu0 %v685
  %1012 = vmatpush.bf16.msra.mxu0 %v681
  %1013 = vmatmul.bf16.gmra.mxu0 %v162
  %v1014 = vpop.f32.mrf.mxu0
  %v1015 = vadd.f32 %v295, %v1014
  %v1016 = vpop.f32.mrf.mxu0
  %v1017 = vadd.f32 %v295, %v1016
  %1018 = vdwg.mxu0
  %1019 = vmatpush.bf16.msra.mxu0 %v741
  %1020 = vmatpush.bf16.msra.mxu0 %v737
  %1021 = vmatpush.bf16.msra.mxu0 %v733
  %1022 = vmatpush.bf16.msra.mxu0 %v729
  %1023 = vmatpush.bf16.msra.mxu0 %v725
  %1024 = vmatpush.bf16.msra.mxu0 %v721
  %1025 = vmatpush.bf16.msra.mxu0 %v717
  %1026 = vmatpush.bf16.msra.mxu0 %v713
  %1027 = vmatmul.bf16.gmra.mxu0 %v163
  %v1028 = vpop.f32.mrf.mxu0
  %v1029 = vadd.f32 %v1015, %v1028
  %v1030 = vpop.f32.mrf.mxu0
  %v1031 = vadd.f32 %v1017, %v1030
  %1032 = vdwg.mxu0
  %1033 = vmatpush.bf16.msra.mxu0 %v773
  %1034 = vmatpush.bf16.msra.mxu0 %v769
  %1035 = vmatpush.bf16.msra.mxu0 %v765
  %1036 = vmatpush.bf16.msra.mxu0 %v761
  %1037 = vmatpush.bf16.msra.mxu0 %v757
  %1038 = vmatpush.bf16.msra.mxu0 %v753
  %1039 = vmatpush.bf16.msra.mxu0 %v749
  %1040 = vmatpush.bf16.msra.mxu0 %v745
  %1041 = vmatmul.bf16.gmra.mxu0 %v164
  %v1042 = vpop.f32.mrf.mxu0
  %v1043 = vadd.f32 %v1029, %v1042
  %v1044 = vpop.f32.mrf.mxu0
  %v1045 = vadd.f32 %v1031, %v1044
  %1046 = vdwg.mxu0
  %1047 = vmatpush.bf16.msra.mxu0 %v941
  %1048 = vmatpush.bf16.msra.mxu0 %v801
  %1049 = vmatpush.bf16.msra.mxu0 %v797
  %1050 = vmatpush.bf16.msra.mxu0 %v793
  %1051 = vmatpush.bf16.msra.mxu0 %v789
  %1052 = vmatpush.bf16.msra.mxu0 %v785
  %1053 = vmatpush.bf16.msra.mxu0 %v781
  %1054 = vmatpush.bf16.msra.mxu0 %v777
  %1055 = vmatmul.bf16.gmra.mxu0 %v934
  %v1056 = vpop.f32.mrf.mxu0
  %v1057 = vadd.f32 %v1043, %v1056
  %v1058 = vpop.f32.mrf.mxu0
  %v1059 = vadd.f32 %v1045, %v1058
  %1060 = vdwg.mxu0
  %1061 = vmatpush.bf16.msra.mxu0 %v710
  %1062 = vmatpush.bf16.msra.mxu0 %v706
  %1063 = vmatpush.bf16.msra.mxu0 %v702
  %1064 = vmatpush.bf16.msra.mxu0 %v698
  %1065 = vmatpush.bf16.msra.mxu0 %v694
  %1066 = vmatpush.bf16.msra.mxu0 %v690
  %1067 = vmatpush.bf16.msra.mxu0 %v686
  %1068 = vmatpush.bf16.msra.mxu0 %v682
  %1069 = vmatmul.bf16.gmra.mxu0 %v162
  %v1070 = vpop.f32.mrf.mxu0
  %v1071 = vadd.f32 %v296, %v1070
  %v1072 = vpop.f32.mrf.mxu0
  %v1073 = vadd.f32 %v296, %v1072
  %1074 = vdwg.mxu0
  %1075 = vmatpush.bf16.msra.mxu0 %v742
  %1076 = vmatpush.bf16.msra.mxu0 %v738
  %1077 = vmatpush.bf16.msra.mxu0 %v734
  %1078 = vmatpush.bf16.msra.mxu0 %v730
  %1079 = vmatpush.bf16.msra.mxu0 %v726
  %1080 = vmatpush.bf16.msra.mxu0 %v722
  %1081 = vmatpush.bf16.msra.mxu0 %v718
  %1082 = vmatpush.bf16.msra.mxu0 %v714
  %1083 = vmatmul.bf16.gmra.mxu0 %v163
  %v1084 = vpop.f32.mrf.mxu0
  %v1085 = vadd.f32 %v1071, %v1084
  %v1086 = vpop.f32.mrf.mxu0
  %v1087 = vadd.f32 %v1073, %v1086
  %1088 = vdwg.mxu0
  %1089 = vmatpush.bf16.msra.mxu0 %v774
  %1090 = vmatpush.bf16.msra.mxu0 %v770
  %1091 = vmatpush.bf16.msra.mxu0 %v766
  %1092 = vmatpush.bf16.msra.mxu0 %v762
  %1093 = vmatpush.bf16.msra.mxu0 %v758
  %1094 = vmatpush.bf16.msra.mxu0 %v754
  %1095 = vmatpush.bf16.msra.mxu0 %v750
  %1096 = vmatpush.bf16.msra.mxu0 %v746
  %1097 = vmatmul.bf16.gmra.mxu0 %v164
  %v1098 = vpop.f32.mrf.mxu0
  %v1099 = vadd.f32 %v1085, %v1098
  %v1100 = vpop.f32.mrf.mxu0
  %v1101 = vadd.f32 %v1087, %v1100
  %1102 = vdwg.mxu0
  %1103 = vmatpush.bf16.msra.mxu0 %v944
  %1104 = vmatpush.bf16.msra.mxu0 %v802
  %1105 = vmatpush.bf16.msra.mxu0 %v798
  %1106 = vmatpush.bf16.msra.mxu0 %v794
  %1107 = vmatpush.bf16.msra.mxu0 %v790
  %1108 = vmatpush.bf16.msra.mxu0 %v786
  %1109 = vmatpush.bf16.msra.mxu0 %v782
  %1110 = vmatpush.bf16.msra.mxu0 %v778
  %1111 = vmatmul.bf16.gmra.mxu0 %v934
  %v1112 = vpop.f32.mrf.mxu0
  %v1113 = vadd.f32 %v1099, %v1112
  %v1114 = vpop.f32.mrf.mxu0
  %v1115 = vadd.f32 %v1101, %v1114
  %1116 = vdwg.mxu0
  %1117 = vmatpush.bf16.msra.mxu0 %v711
  %1118 = vmatpush.bf16.msra.mxu0 %v707
  %1119 = vmatpush.bf16.msra.mxu0 %v703
  %1120 = vmatpush.bf16.msra.mxu0 %v699
  %1121 = vmatpush.bf16.msra.mxu0 %v695
  %1122 = vmatpush.bf16.msra.mxu0 %v691
  %1123 = vmatpush.bf16.msra.mxu0 %v687
  %1124 = vmatpush.bf16.msra.mxu0 %v683
  %1125 = vmatmul.bf16.gmra.mxu0 %v162
  %v1126 = vpop.f32.mrf.mxu0
  %v1127 = vadd.f32 %v297, %v1126
  %v1128 = vpop.f32.mrf.mxu0
  %v1129 = vadd.f32 %v297, %v1128
  %1130 = vdwg.mxu0
  %1131 = vmatpush.bf16.msra.mxu0 %v743
  %1132 = vmatpush.bf16.msra.mxu0 %v739
  %1133 = vmatpush.bf16.msra.mxu0 %v735
  %1134 = vmatpush.bf16.msra.mxu0 %v731
  %1135 = vmatpush.bf16.msra.mxu0 %v727
  %1136 = vmatpush.bf16.msra.mxu0 %v723
  %1137 = vmatpush.bf16.msra.mxu0 %v719
  %1138 = vmatpush.bf16.msra.mxu0 %v715
  %1139 = vmatmul.bf16.gmra.mxu0 %v163
  %v1140 = vpop.f32.mrf.mxu0
  %v1141 = vadd.f32 %v1127, %v1140
  %v1142 = vpop.f32.mrf.mxu0
  %v1143 = vadd.f32 %v1129, %v1142
  %1144 = vdwg.mxu0
  %1145 = vmatpush.bf16.msra.mxu0 %v775
  %1146 = vmatpush.bf16.msra.mxu0 %v771
  %1147 = vmatpush.bf16.msra.mxu0 %v767
  %1148 = vmatpush.bf16.msra.mxu0 %v763
  %1149 = vmatpush.bf16.msra.mxu0 %v759
  %1150 = vmatpush.bf16.msra.mxu0 %v755
  %1151 = vmatpush.bf16.msra.mxu0 %v751
  %1152 = vmatpush.bf16.msra.mxu0 %v747
  %1153 = vmatmul.bf16.gmra.mxu0 %v164
  %v1154 = vpop.f32.mrf.mxu0
  %v1155 = vadd.f32 %v1141, %v1154
  %v1156 = vpop.f32.mrf.mxu0
  %v1157 = vadd.f32 %v1143, %v1156
  %1158 = vdwg.mxu0
  %1159 = vmatpush.bf16.msra.mxu0 %v947
  %1160 = vmatpush.bf16.msra.mxu0 %v803
  %1161 = vmatpush.bf16.msra.mxu0 %v799
  %1162 = vmatpush.bf16.msra.mxu0 %v795
  %1163 = vmatpush.bf16.msra.mxu0 %v791
  %1164 = vmatpush.bf16.msra.mxu0 %v787
  %1165 = vmatpush.bf16.msra.mxu0 %v783
  %1166 = vmatpush.bf16.msra.mxu0 %v779
  %1167 = vmatmul.bf16.gmra.mxu0 %v934
  %v1168 = vpop.f32.mrf.mxu0
  %v1169 = vadd.f32 %v1155, %v1168
  %v1170 = vpop.f32.mrf.mxu0
  %v1171 = vadd.f32 %v1157, %v1170
  %1172 = vdwg.mxu0
  %v1173 = vtanh.pop %v1001
  %v1174 = vtanh.pop %v1057
  %v1175 = vtanh.pop %v1113
  %v1176 = vtanh.pop %v1169
  %v1177 = vtanh.pop %v1003
  %v1178 = vtanh.pop %v1059
  %v1179 = vtanh.pop %v1115
  %v1180 = vtanh.pop %v1171
  %v1181 = vpack.c.bf16 %v1177, %v1173
  %v1182 = vpack.c.bf16 %v1178, %v1174
  %v1183 = vpack.c.bf16 %v1179, %v1175
  %v1184 = vpack.c.bf16 %v1180, %v1176
  %v1185 = vld [vmem:[%s5] sm:$0xff]
  %v1186 = vld [vmem:[%s5 + $0x8] sm:$0xff]
  %v1187 = vld [vmem:[%s5 + $0x10] sm:$0xff]
  %v1188 = vld [vmem:[%s5 + $0x18] sm:$0xff]
  %v1189 = vld [vmem:[%s5 + $0x20] sm:$0xff]
  %v1190 = vld [vmem:[%s5 + $0x28] sm:$0xff]
  %v1191 = vld [vmem:[%s5 + $0x30] sm:$0xff]
  %v1192 = vld [vmem:[%s5 + $0x38] sm:$0xff]
  %v1193 = vld [vmem:[%s5 + $0x40] sm:$0xff]
  %v1194 = vld [vmem:[%s5 + $0x48] sm:$0xff]
  %v1195 = vld [vmem:[%s5 + $0x50] sm:$0xff]
  %v1196 = vld [vmem:[%s5 + $0x58] sm:$0xff]
  %v1197 = vld [vmem:[%s5 + $0x60] sm:$0xff]
  %v1198 = vld [vmem:[%s5 + $0x68] sm:$0xff]
  %v1199 = vld [vmem:[%s5 + $0x70] sm:$0xff]
  %v1200 = vld [vmem:[%s5 + $0x78] sm:$0xff]
  %v1201 = vld [vmem:[%s5 + $0x80] sm:$0xff]
  %v1202 = vld [vmem:[%s5 + $0x88] sm:$0xff]
  %v1203 = vld [vmem:[%s5 + $0x90] sm:$0xff]
  %v1204 = vld [vmem:[%s5 + $0x98] sm:$0xff]
  %v1205 = vld [vmem:[%s5 + $0xa0] sm:$0xff]
  %v1206 = vld [vmem:[%s5 + $0xa8] sm:$0xff]
  %v1207 = vld [vmem:[%s5 + $0xb0] sm:$0xff]
  %v1208 = vld [vmem:[%s5 + $0xb8] sm:$0xff]
  %v1209 = vld [vmem:[%s5 + $0xc0] sm:$0xff]
  %v1210 = vld [vmem:[%s5 + $0xc8] sm:$0xff]
  %v1211 = vld [vmem:[%s5 + $0xd0] sm:$0xff]
  %v1212 = vld [vmem:[%s5 + $0xd8] sm:$0xff]
  %v1213 = vld [vmem:[%s5 + $0xe0] sm:$0xff]
  %v1214 = vld [vmem:[%s5 + $0xe8] sm:$0xff]
  %v1215 = vld [vmem:[%s5 + $0xf0] sm:$0xff]
  %v1216 = vld [vmem:[%s5 + $0xf8] sm:$0xff]
  %v1217 = vld [vmem:[%s5 + $0x100] sm:$0xff]
  %v1218 = vld [vmem:[%s5 + $0x108] sm:$0xff]
  %v1219 = vld [vmem:[%s5 + $0x110] sm:$0xff]
  %v1220 = vld [vmem:[%s5 + $0x118] sm:$0xff]
  %v1221 = vld [vmem:[%s5 + $0x120] sm:$0xff]
  %v1222 = vld [vmem:[%s5 + $0x128] sm:$0xff]
  %v1223 = vld [vmem:[%s5 + $0x130] sm:$0xff]
  %v1224 = vld [vmem:[%s5 + $0x138] sm:$0xff]
  %v1225 = vld [vmem:[%s5 + $0x140] sm:$0xff]
  %v1226 = vld [vmem:[%s5 + $0x148] sm:$0xff]
  %v1227 = vld [vmem:[%s5 + $0x150] sm:$0xff]
  %v1228 = vld [vmem:[%s5 + $0x158] sm:$0xff]
  %v1229 = vld [vmem:[%s5 + $0x160] sm:$0xff]
  %v1230 = vld [vmem:[%s5 + $0x168] sm:$0xff]
  %v1231 = vld [vmem:[%s5 + $0x170] sm:$0xff]
  %v1232 = vld [vmem:[%s5 + $0x178] sm:$0xff]
  %v1233 = vld [vmem:[%s5 + $0x180] sm:$0xff]
  %v1234 = vld [vmem:[%s5 + $0x188] sm:$0xff]
  %v1235 = vld [vmem:[%s5 + $0x190] sm:$0xff]
  %v1236 = vld [vmem:[%s5 + $0x198] sm:$0xff]
  %v1237 = vld [vmem:[%s5 + $0x1a0] sm:$0xff]
  %v1238 = vld [vmem:[%s5 + $0x1a8] sm:$0xff]
  %v1239 = vld [vmem:[%s5 + $0x1b0] sm:$0xff]
  %v1240 = vld [vmem:[%s5 + $0x1b8] sm:$0xff]
  %v1241 = vld [vmem:[%s5 + $0x1c0] sm:$0xff]
  %v1242 = vld [vmem:[%s5 + $0x1c8] sm:$0xff]
  %v1243 = vld [vmem:[%s5 + $0x1d0] sm:$0xff]
  %v1244 = vld [vmem:[%s5 + $0x1d8] sm:$0xff]
  %v1245 = vld [vmem:[%s5 + $0x1e0] sm:$0xff]
  %v1246 = vld [vmem:[%s5 + $0x1e8] sm:$0xff]
  %v1247 = vld [vmem:[%s5 + $0x1f0] sm:$0xff]
  %v1248 = vld [vmem:[%s5 + $0x1f8] sm:$0xff]
  %v1249 = vld [vmem:[%s5 + $0x200] sm:$0xff]
  %v1250 = vld [vmem:[%s5 + $0x208] sm:$0xff]
  %v1251 = vld [vmem:[%s5 + $0x210] sm:$0xff]
  %v1252 = vld [vmem:[%s5 + $0x218] sm:$0xff]
  %v1253 = vld [vmem:[%s5 + $0x220] sm:$0xff]
  %v1254 = vld [vmem:[%s5 + $0x228] sm:$0xff]
  %v1255 = vld [vmem:[%s5 + $0x230] sm:$0xff]
  %v1256 = vld [vmem:[%s5 + $0x238] sm:$0xff]
  %v1257 = vld [vmem:[%s5 + $0x240] sm:$0xff]
  %v1258 = vld [vmem:[%s5 + $0x248] sm:$0xff]
  %v1259 = vld [vmem:[%s5 + $0x250] sm:$0xff]
  %v1260 = vld [vmem:[%s5 + $0x258] sm:$0xff]
  %v1261 = vld [vmem:[%s5 + $0x260] sm:$0xff]
  %v1262 = vld [vmem:[%s5 + $0x268] sm:$0xff]
  %v1263 = vld [vmem:[%s5 + $0x270] sm:$0xff]
  %v1264 = vld [vmem:[%s5 + $0x278] sm:$0xff]
  %v1265 = vld [vmem:[%s5 + $0x280] sm:$0xff]
  %v1266 = vld [vmem:[%s5 + $0x288] sm:$0xff]
  %v1267 = vld [vmem:[%s5 + $0x290] sm:$0xff]
  %v1268 = vld [vmem:[%s5 + $0x298] sm:$0xff]
  %v1269 = vld [vmem:[%s5 + $0x2a0] sm:$0xff]
  %v1270 = vld [vmem:[%s5 + $0x2a8] sm:$0xff]
  %v1271 = vld [vmem:[%s5 + $0x2b0] sm:$0xff]
  %v1272 = vld [vmem:[%s5 + $0x2b8] sm:$0xff]
  %v1273 = vld [vmem:[%s5 + $0x2c0] sm:$0xff]
  %v1274 = vld [vmem:[%s5 + $0x2c8] sm:$0xff]
  %v1275 = vld [vmem:[%s5 + $0x2d0] sm:$0xff]
  %v1276 = vld [vmem:[%s5 + $0x2d8] sm:$0xff]
  %v1277 = vld [vmem:[%s5 + $0x2e0] sm:$0xff]
  %v1278 = vld [vmem:[%s5 + $0x2e8] sm:$0xff]
  %v1279 = vld [vmem:[%s5 + $0x2f0] sm:$0xff]
  %v1280 = vld [vmem:[%s5 + $0x2f8] sm:$0xff]
  %v1281 = vld [vmem:[%s5 + $0x300] sm:$0xff]
  %v1282 = vld [vmem:[%s5 + $0x308] sm:$0xff]
  %v1283 = vld [vmem:[%s5 + $0x310] sm:$0xff]
  %v1284 = vld [vmem:[%s5 + $0x318] sm:$0xff]
  %v1285 = vld [vmem:[%s5 + $0x320] sm:$0xff]
  %v1286 = vld [vmem:[%s5 + $0x328] sm:$0xff]
  %v1287 = vld [vmem:[%s5 + $0x330] sm:$0xff]
  %v1288 = vld [vmem:[%s5 + $0x338] sm:$0xff]
  %v1289 = vld [vmem:[%s5 + $0x340] sm:$0xff]
  %v1290 = vld [vmem:[%s5 + $0x348] sm:$0xff]
  %v1291 = vld [vmem:[%s5 + $0x350] sm:$0xff]
  %v1292 = vld [vmem:[%s5 + $0x358] sm:$0xff]
  %v1293 = vld [vmem:[%s5 + $0x360] sm:$0xff]
  %v1294 = vld [vmem:[%s5 + $0x368] sm:$0xff]
  %v1295 = vld [vmem:[%s5 + $0x370] sm:$0xff]
  %v1296 = vld [vmem:[%s5 + $0x378] sm:$0xff]
  %v1297 = vld [vmem:[%s5 + $0x380] sm:$0xff]
  %v1298 = vld [vmem:[%s5 + $0x388] sm:$0xff]
  %v1299 = vld [vmem:[%s5 + $0x390] sm:$0xff]
  %v1300 = vld [vmem:[%s5 + $0x398] sm:$0xff]
  %v1301 = vld [vmem:[%s5 + $0x3a0] sm:$0xff]
  %v1302 = vld [vmem:[%s5 + $0x3a8] sm:$0xff]
  %v1303 = vld [vmem:[%s5 + $0x3b0] sm:$0xff]
  %v1304 = vld [vmem:[%s5 + $0x3b8] sm:$0xff]
  %v1305 = vld [vmem:[%s5 + $0x3c0] sm:$0xff]
  %v1306 = vld [vmem:[%s5 + $0x3c8] sm:$0xff]
  %v1307 = vld [vmem:[%s5 + $0x3d0] sm:$0xff]
  %v1308 = vld [vmem:[%s5 + $0x3d8] sm:$0xff]
  %v1309 = vld [vmem:[%s5 + $0x3e0] sm:$0xff]
  %v1310 = vld [vmem:[%s5 + $0x3e8] sm:$0xff]
  %v1311 = vld [vmem:[%s5 + $0x3f0] sm:$0xff]
  %v1312 = vld [vmem:[%s5 + $0x3f8] sm:$0xff]
  %v1313 = vld [vmem:[%s5 + $0x400] sm:$0xff]
  %v1314 = vld [vmem:[%s5 + $0x408] sm:$0xff]
  %v1315 = vld [vmem:[%s5 + $0x410] sm:$0xff]
  %v1316 = vld [vmem:[%s5 + $0x418] sm:$0xff]
  %v1317 = vld [vmem:[%s5 + $0x420] sm:$0xff]
  %v1318 = vld [vmem:[%s5 + $0x428] sm:$0xff]
  %v1319 = vld [vmem:[%s5 + $0x430] sm:$0xff]
  %v1320 = vld [vmem:[%s5 + $0x438] sm:$0xff]
  %v1321 = vld [vmem:[%s5 + $0x440] sm:$0xff]
  %v1322 = vld [vmem:[%s5 + $0x448] sm:$0xff]
  %v1323 = vld [vmem:[%s5 + $0x450] sm:$0xff]
  %v1324 = vld [vmem:[%s5 + $0x458] sm:$0xff]
  %v1325 = vld [vmem:[%s5 + $0x460] sm:$0xff]
  %v1326 = vld [vmem:[%s5 + $0x468] sm:$0xff]
  %v1327 = vld [vmem:[%s5 + $0x470] sm:$0xff]
  %v1328 = vld [vmem:[%s5 + $0x478] sm:$0xff]
  %v1329 = vld [vmem:[%s5 + $0x480] sm:$0xff]
  %v1330 = vld [vmem:[%s5 + $0x488] sm:$0xff]
  %v1331 = vld [vmem:[%s5 + $0x490] sm:$0xff]
  %v1332 = vld [vmem:[%s5 + $0x498] sm:$0xff]
  %v1333 = vld [vmem:[%s5 + $0x4a0] sm:$0xff]
  %v1334 = vld [vmem:[%s5 + $0x4a8] sm:$0xff]
  %v1335 = vld [vmem:[%s5 + $0x4b0] sm:$0xff]
  %v1336 = vld [vmem:[%s5 + $0x4b8] sm:$0xff]
  %v1337 = vld [vmem:[%s5 + $0x4c0] sm:$0xff]
  %v1338 = vld [vmem:[%s5 + $0x4c8] sm:$0xff]
  %v1339 = vld [vmem:[%s5 + $0x4d0] sm:$0xff]
  %v1340 = vld [vmem:[%s5 + $0x4d8] sm:$0xff]
  %v1341 = vld [vmem:[%s5 + $0x4e0] sm:$0xff]
  %v1342 = vld [vmem:[%s5 + $0x4e8] sm:$0xff]
  %v1343 = vld [vmem:[%s5 + $0x4f0] sm:$0xff]
  %v1344 = vld [vmem:[%s5 + $0x4f8] sm:$0xff]
  %v1345 = vld [vmem:[%s5 + $0x500] sm:$0xff]
  %v1346 = vld [vmem:[%s5 + $0x508] sm:$0xff]
  %v1347 = vld [vmem:[%s5 + $0x510] sm:$0xff]
  %v1348 = vld [vmem:[%s5 + $0x518] sm:$0xff]
  %v1349 = vld [vmem:[%s5 + $0x520] sm:$0xff]
  %v1350 = vld [vmem:[%s5 + $0x528] sm:$0xff]
  %v1351 = vld [vmem:[%s5 + $0x530] sm:$0xff]
  %v1352 = vld [vmem:[%s5 + $0x538] sm:$0xff]
  %v1353 = vld [vmem:[%s5 + $0x540] sm:$0xff]
  %v1354 = vld [vmem:[%s5 + $0x548] sm:$0xff]
  %v1355 = vld [vmem:[%s5 + $0x550] sm:$0xff]
  %v1356 = vld [vmem:[%s5 + $0x558] sm:$0xff]
  %v1357 = vld [vmem:[%s5 + $0x560] sm:$0xff]
  %v1358 = vld [vmem:[%s5 + $0x568] sm:$0xff]
  %v1359 = vld [vmem:[%s5 + $0x570] sm:$0xff]
  %v1360 = vld [vmem:[%s5 + $0x578] sm:$0xff]
  %v1361 = vld [vmem:[%s5 + $0x580] sm:$0xff]
  %v1362 = vld [vmem:[%s5 + $0x588] sm:$0xff]
  %v1363 = vld [vmem:[%s5 + $0x590] sm:$0xff]
  %v1364 = vld [vmem:[%s5 + $0x598] sm:$0xff]
  %v1365 = vld [vmem:[%s5 + $0x5a0] sm:$0xff]
  %v1366 = vld [vmem:[%s5 + $0x5a8] sm:$0xff]
  %v1367 = vld [vmem:[%s5 + $0x5b0] sm:$0xff]
  %v1368 = vld [vmem:[%s5 + $0x5b8] sm:$0xff]
  %v1369 = vld [vmem:[%s5 + $0x5c0] sm:$0xff]
  %v1370 = vld [vmem:[%s5 + $0x5c8] sm:$0xff]
  %v1371 = vld [vmem:[%s5 + $0x5d0] sm:$0xff]
  %v1372 = vld [vmem:[%s5 + $0x5d8] sm:$0xff]
  %v1373 = vld [vmem:[%s5 + $0x5e0] sm:$0xff]
  %v1374 = vld [vmem:[%s5 + $0x5e8] sm:$0xff]
  %v1375 = vld [vmem:[%s5 + $0x5f0] sm:$0xff]
  %v1376 = vld [vmem:[%s5 + $0x5f8] sm:$0xff]
  %v1377 = vld [vmem:[%s5 + $0x600] sm:$0xff]
  %v1378 = vld [vmem:[%s5 + $0x608] sm:$0xff]
  %v1379 = vld [vmem:[%s5 + $0x610] sm:$0xff]
  %v1380 = vld [vmem:[%s5 + $0x618] sm:$0xff]
  %v1381 = vld [vmem:[%s5 + $0x620] sm:$0xff]
  %v1382 = vld [vmem:[%s5 + $0x628] sm:$0xff]
  %v1383 = vld [vmem:[%s5 + $0x630] sm:$0xff]
  %v1384 = vld [vmem:[%s5 + $0x638] sm:$0xff]
  %v1385 = vld [vmem:[%s5 + $0x640] sm:$0xff]
  %v1386 = vld [vmem:[%s5 + $0x648] sm:$0xff]
  %v1387 = vld [vmem:[%s5 + $0x650] sm:$0xff]
  %v1388 = vld [vmem:[%s5 + $0x658] sm:$0xff]
  %v1389 = vld [vmem:[%s5 + $0x660] sm:$0xff]
  %v1390 = vld [vmem:[%s5 + $0x668] sm:$0xff]
  %v1391 = vld [vmem:[%s5 + $0x670] sm:$0xff]
  %v1392 = vld [vmem:[%s5 + $0x678] sm:$0xff]
  %v1393 = vld [vmem:[%s5 + $0x680] sm:$0xff]
  %v1394 = vld [vmem:[%s5 + $0x688] sm:$0xff]
  %v1395 = vld [vmem:[%s5 + $0x690] sm:$0xff]
  %v1396 = vld [vmem:[%s5 + $0x698] sm:$0xff]
  %v1397 = vld [vmem:[%s5 + $0x6a0] sm:$0xff]
  %v1398 = vld [vmem:[%s5 + $0x6a8] sm:$0xff]
  %v1399 = vld [vmem:[%s5 + $0x6b0] sm:$0xff]
  %v1400 = vld [vmem:[%s5 + $0x6b8] sm:$0xff]
  %v1401 = vld [vmem:[%s5 + $0x6c0] sm:$0xff]
  %v1402 = vld [vmem:[%s5 + $0x6c8] sm:$0xff]
  %v1403 = vld [vmem:[%s5 + $0x6d0] sm:$0xff]
  %v1404 = vld [vmem:[%s5 + $0x6d8] sm:$0xff]
  %v1405 = vld [vmem:[%s5 + $0x6e0] sm:$0xff]
  %v1406 = vld [vmem:[%s5 + $0x6e8] sm:$0xff]
  %v1407 = vld [vmem:[%s5 + $0x6f0] sm:$0xff]
  %v1408 = vld [vmem:[%s5 + $0x6f8] sm:$0xff]
  %v1409 = vld [vmem:[%s5 + $0x700] sm:$0xff]
  %v1410 = vld [vmem:[%s5 + $0x708] sm:$0xff]
  %v1411 = vld [vmem:[%s5 + $0x710] sm:$0xff]
  %v1412 = vld [vmem:[%s5 + $0x718] sm:$0xff]
  %v1413 = vld [vmem:[%s5 + $0x720] sm:$0xff]
  %v1414 = vld [vmem:[%s5 + $0x728] sm:$0xff]
  %v1415 = vld [vmem:[%s5 + $0x730] sm:$0xff]
  %v1416 = vld [vmem:[%s5 + $0x738] sm:$0xff]
  %v1417 = vld [vmem:[%s5 + $0x740] sm:$0xff]
  %v1418 = vld [vmem:[%s5 + $0x748] sm:$0xff]
  %v1419 = vld [vmem:[%s5 + $0x750] sm:$0xff]
  %v1420 = vld [vmem:[%s5 + $0x758] sm:$0xff]
  %v1421 = vld [vmem:[%s5 + $0x760] sm:$0xff]
  %v1422 = vld [vmem:[%s5 + $0x768] sm:$0xff]
  %v1423 = vld [vmem:[%s5 + $0x770] sm:$0xff]
  %v1424 = vld [vmem:[%s5 + $0x778] sm:$0xff]
  %v1425 = vld [vmem:[%s5 + $0x780] sm:$0xff]
  %v1426 = vld [vmem:[%s5 + $0x788] sm:$0xff]
  %v1427 = vld [vmem:[%s5 + $0x790] sm:$0xff]
  %v1428 = vld [vmem:[%s5 + $0x798] sm:$0xff]
  %v1429 = vld [vmem:[%s5 + $0x7a0] sm:$0xff]
  %v1430 = vld [vmem:[%s5 + $0x7a8] sm:$0xff]
  %v1431 = vld [vmem:[%s5 + $0x7b0] sm:$0xff]
  %v1432 = vld [vmem:[%s5 + $0x7b8] sm:$0xff]
  %v1433 = vld [vmem:[%s5 + $0x7c0] sm:$0xff]
  %v1434 = vld [vmem:[%s5 + $0x7c8] sm:$0xff]
  %v1435 = vld [vmem:[%s5 + $0x7d0] sm:$0xff]
  %v1436 = vld [vmem:[%s5 + $0x7d8] sm:$0xff]
  %v1437 = vld [vmem:[%s5 + $0x7e0] sm:$0xff]
  %v1438 = vld [vmem:[%s5 + $0x7e8] sm:$0xff]
  %v1439 = vld [vmem:[%s5 + $0x7f0] sm:$0xff]
  %v1440 = vld [vmem:[%s5 + $0x7f8] sm:$0xff]
  %v1441 = vld [vmem:[%s5 + $0x800] sm:$0xff]
  %v1442 = vld [vmem:[%s5 + $0x808] sm:$0xff]
  %v1443 = vld [vmem:[%s5 + $0x810] sm:$0xff]
  %v1444 = vld [vmem:[%s5 + $0x818] sm:$0xff]
  %v1445 = vld [vmem:[%s5 + $0x820] sm:$0xff]
  %v1446 = vld [vmem:[%s5 + $0x828] sm:$0xff]
  %v1447 = vld [vmem:[%s5 + $0x830] sm:$0xff]
  %v1448 = vld [vmem:[%s5 + $0x838] sm:$0xff]
  %v1449 = vld [vmem:[%s5 + $0x840] sm:$0xff]
  %v1450 = vld [vmem:[%s5 + $0x848] sm:$0xff]
  %v1451 = vld [vmem:[%s5 + $0x850] sm:$0xff]
  %v1452 = vld [vmem:[%s5 + $0x858] sm:$0xff]
  %v1453 = vld [vmem:[%s5 + $0x860] sm:$0xff]
  %v1454 = vld [vmem:[%s5 + $0x868] sm:$0xff]
  %v1455 = vld [vmem:[%s5 + $0x870] sm:$0xff]
  %v1456 = vld [vmem:[%s5 + $0x878] sm:$0xff]
  %v1457 = vld [vmem:[%s5 + $0x880] sm:$0xff]
  %v1458 = vld [vmem:[%s5 + $0x888] sm:$0xff]
  %v1459 = vld [vmem:[%s5 + $0x890] sm:$0xff]
  %v1460 = vld [vmem:[%s5 + $0x898] sm:$0xff]
  %v1461 = vld [vmem:[%s5 + $0x8a0] sm:$0xff]
  %v1462 = vld [vmem:[%s5 + $0x8a8] sm:$0xff]
  %v1463 = vld [vmem:[%s5 + $0x8b0] sm:$0xff]
  %v1464 = vld [vmem:[%s5 + $0x8b8] sm:$0xff]
  %v1465 = vld [vmem:[%s5 + $0x8c0] sm:$0xff]
  %v1466 = vld [vmem:[%s5 + $0x8c8] sm:$0xff]
  %v1467 = vld [vmem:[%s5 + $0x8d0] sm:$0xff]
  %v1468 = vld [vmem:[%s5 + $0x8d8] sm:$0xff]
  %v1469 = vld [vmem:[%s5 + $0x8e0] sm:$0xff]
  %v1470 = vld [vmem:[%s5 + $0x8e8] sm:$0xff]
  %v1471 = vld [vmem:[%s5 + $0x8f0] sm:$0xff]
  %v1472 = vld [vmem:[%s5 + $0x8f8] sm:$0xff]
  %v1473 = vld [vmem:[%s5 + $0x900] sm:$0xff]
  %v1474 = vld [vmem:[%s5 + $0x908] sm:$0xff]
  %v1475 = vld [vmem:[%s5 + $0x910] sm:$0xff]
  %v1476 = vld [vmem:[%s5 + $0x918] sm:$0xff]
  %v1477 = vld [vmem:[%s5 + $0x920] sm:$0xff]
  %v1478 = vld [vmem:[%s5 + $0x928] sm:$0xff]
  %v1479 = vld [vmem:[%s5 + $0x930] sm:$0xff]
  %v1480 = vld [vmem:[%s5 + $0x938] sm:$0xff]
  %v1481 = vld [vmem:[%s5 + $0x940] sm:$0xff]
  %v1482 = vld [vmem:[%s5 + $0x948] sm:$0xff]
  %v1483 = vld [vmem:[%s5 + $0x950] sm:$0xff]
  %v1484 = vld [vmem:[%s5 + $0x958] sm:$0xff]
  %v1485 = vld [vmem:[%s5 + $0x960] sm:$0xff]
  %v1486 = vld [vmem:[%s5 + $0x968] sm:$0xff]
  %v1487 = vld [vmem:[%s5 + $0x970] sm:$0xff]
  %v1488 = vld [vmem:[%s5 + $0x978] sm:$0xff]
  %v1489 = vld [vmem:[%s5 + $0x980] sm:$0xff]
  %v1490 = vld [vmem:[%s5 + $0x988] sm:$0xff]
  %v1491 = vld [vmem:[%s5 + $0x990] sm:$0xff]
  %v1492 = vld [vmem:[%s5 + $0x998] sm:$0xff]
  %v1493 = vld [vmem:[%s5 + $0x9a0] sm:$0xff]
  %v1494 = vld [vmem:[%s5 + $0x9a8] sm:$0xff]
  %v1495 = vld [vmem:[%s5 + $0x9b0] sm:$0xff]
  %v1496 = vld [vmem:[%s5 + $0x9b8] sm:$0xff]
  %v1497 = vld [vmem:[%s5 + $0x9c0] sm:$0xff]
  %v1498 = vld [vmem:[%s5 + $0x9c8] sm:$0xff]
  %v1499 = vld [vmem:[%s5 + $0x9d0] sm:$0xff]
  %v1500 = vld [vmem:[%s5 + $0x9d8] sm:$0xff]
  %v1501 = vld [vmem:[%s5 + $0x9e0] sm:$0xff]
  %v1502 = vld [vmem:[%s5 + $0x9e8] sm:$0xff]
  %v1503 = vld [vmem:[%s5 + $0x9f0] sm:$0xff]
  %v1504 = vld [vmem:[%s5 + $0x9f8] sm:$0xff]
  %v1505 = vld [vmem:[%s5 + $0xa00] sm:$0xff]
  %v1506 = vld [vmem:[%s5 + $0xa08] sm:$0xff]
  %v1507 = vld [vmem:[%s5 + $0xa10] sm:$0xff]
  %v1508 = vld [vmem:[%s5 + $0xa18] sm:$0xff]
  %v1509 = vld [vmem:[%s5 + $0xa20] sm:$0xff]
  %v1510 = vld [vmem:[%s5 + $0xa28] sm:$0xff]
  %v1511 = vld [vmem:[%s5 + $0xa30] sm:$0xff]
  %v1512 = vld [vmem:[%s5 + $0xa38] sm:$0xff]
  %v1513 = vld [vmem:[%s5 + $0xa40] sm:$0xff]
  %v1514 = vld [vmem:[%s5 + $0xa48] sm:$0xff]
  %v1515 = vld [vmem:[%s5 + $0xa50] sm:$0xff]
  %v1516 = vld [vmem:[%s5 + $0xa58] sm:$0xff]
  %v1517 = vld [vmem:[%s5 + $0xa60] sm:$0xff]
  %v1518 = vld [vmem:[%s5 + $0xa68] sm:$0xff]
  %v1519 = vld [vmem:[%s5 + $0xa70] sm:$0xff]
  %v1520 = vld [vmem:[%s5 + $0xa78] sm:$0xff]
  %v1521 = vld [vmem:[%s5 + $0xa80] sm:$0xff]
  %v1522 = vld [vmem:[%s5 + $0xa88] sm:$0xff]
  %v1523 = vld [vmem:[%s5 + $0xa90] sm:$0xff]
  %v1524 = vld [vmem:[%s5 + $0xa98] sm:$0xff]
  %v1525 = vld [vmem:[%s5 + $0xaa0] sm:$0xff]
  %v1526 = vld [vmem:[%s5 + $0xaa8] sm:$0xff]
  %v1527 = vld [vmem:[%s5 + $0xab0] sm:$0xff]
  %v1528 = vld [vmem:[%s5 + $0xab8] sm:$0xff]
  %v1529 = vld [vmem:[%s5 + $0xac0] sm:$0xff]
  %v1530 = vld [vmem:[%s5 + $0xac8] sm:$0xff]
  %v1531 = vld [vmem:[%s5 + $0xad0] sm:$0xff]
  %v1532 = vld [vmem:[%s5 + $0xad8] sm:$0xff]
  %v1533 = vld [vmem:[%s5 + $0xae0] sm:$0xff]
  %v1534 = vld [vmem:[%s5 + $0xae8] sm:$0xff]
  %v1535 = vld [vmem:[%s5 + $0xaf0] sm:$0xff]
  %v1536 = vld [vmem:[%s5 + $0xaf8] sm:$0xff]
  %v1537 = vld [vmem:[%s5 + $0xb00] sm:$0xff]
  %v1538 = vld [vmem:[%s5 + $0xb08] sm:$0xff]
  %v1539 = vld [vmem:[%s5 + $0xb10] sm:$0xff]
  %v1540 = vld [vmem:[%s5 + $0xb18] sm:$0xff]
  %v1541 = vld [vmem:[%s5 + $0xb20] sm:$0xff]
  %v1542 = vld [vmem:[%s5 + $0xb28] sm:$0xff]
  %v1543 = vld [vmem:[%s5 + $0xb30] sm:$0xff]
  %v1544 = vld [vmem:[%s5 + $0xb38] sm:$0xff]
  %v1545 = vld [vmem:[%s5 + $0xb40] sm:$0xff]
  %v1546 = vld [vmem:[%s5 + $0xb48] sm:$0xff]
  %v1547 = vld [vmem:[%s5 + $0xb50] sm:$0xff]
  %v1548 = vld [vmem:[%s5 + $0xb58] sm:$0xff]
  %v1549 = vld [vmem:[%s5 + $0xb60] sm:$0xff]
  %v1550 = vld [vmem:[%s5 + $0xb68] sm:$0xff]
  %v1551 = vld [vmem:[%s5 + $0xb70] sm:$0xff]
  %v1552 = vld [vmem:[%s5 + $0xb78] sm:$0xff]
  %v1553 = vld [vmem:[%s5 + $0xb80] sm:$0xff]
  %v1554 = vld [vmem:[%s5 + $0xb88] sm:$0xff]
  %v1555 = vld [vmem:[%s5 + $0xb90] sm:$0xff]
  %v1556 = vld [vmem:[%s5 + $0xb98] sm:$0xff]
  %v1557 = vld [vmem:[%s5 + $0xba0] sm:$0xff]
  %v1558 = vld [vmem:[%s5 + $0xba8] sm:$0xff]
  %v1559 = vld [vmem:[%s5 + $0xbb0] sm:$0xff]
  %v1560 = vld [vmem:[%s5 + $0xbb8] sm:$0xff]
  %v1561 = vld [vmem:[%s5 + $0xbc0] sm:$0xff]
  %v1562 = vld [vmem:[%s5 + $0xbc8] sm:$0xff]
  %v1563 = vld [vmem:[%s5 + $0xbd0] sm:$0xff]
  %v1564 = vld [vmem:[%s5 + $0xbd8] sm:$0xff]
  %v1565 = vld [vmem:[%s5 + $0xbe0] sm:$0xff]
  %v1566 = vld [vmem:[%s5 + $0xbe8] sm:$0xff]
  %v1567 = vld [vmem:[%s5 + $0xbf0] sm:$0xff]
  %v1568 = vld [vmem:[%s5 + $0xbf8] sm:$0xff]
  %v1569 = vld [vmem:[%s5 + $0xc00] sm:$0xff]
  %v1570 = vld [vmem:[%s5 + $0xc08] sm:$0xff]
  %v1571 = vld [vmem:[%s5 + $0xc10] sm:$0xff]
  %v1572 = vld [vmem:[%s5 + $0xc18] sm:$0xff]
  %v1573 = vld [vmem:[%s5 + $0xc20] sm:$0xff]
  %v1574 = vld [vmem:[%s5 + $0xc28] sm:$0xff]
  %v1575 = vld [vmem:[%s5 + $0xc30] sm:$0xff]
  %v1576 = vld [vmem:[%s5 + $0xc38] sm:$0xff]
  %v1577 = vld [vmem:[%s5 + $0xc40] sm:$0xff]
  %v1578 = vld [vmem:[%s5 + $0xc48] sm:$0xff]
  %v1579 = vld [vmem:[%s5 + $0xc50] sm:$0xff]
  %v1580 = vld [vmem:[%s5 + $0xc58] sm:$0xff]
  %v1581 = vld [vmem:[%s5 + $0xc60] sm:$0xff]
  %v1582 = vld [vmem:[%s5 + $0xc68] sm:$0xff]
  %v1583 = vld [vmem:[%s5 + $0xc70] sm:$0xff]
  %v1584 = vld [vmem:[%s5 + $0xc78] sm:$0xff]
  %v1585 = vld [vmem:[%s5 + $0xc80] sm:$0xff]
  %v1586 = vld [vmem:[%s5 + $0xc88] sm:$0xff]
  %v1587 = vld [vmem:[%s5 + $0xc90] sm:$0xff]
  %v1588 = vld [vmem:[%s5 + $0xc98] sm:$0xff]
  %v1589 = vld [vmem:[%s5 + $0xca0] sm:$0xff]
  %v1590 = vld [vmem:[%s5 + $0xca8] sm:$0xff]
  %v1591 = vld [vmem:[%s5 + $0xcb0] sm:$0xff]
  %v1592 = vld [vmem:[%s5 + $0xcb8] sm:$0xff]
  %v1593 = vld [vmem:[%s5 + $0xcc0] sm:$0xff]
  %v1594 = vld [vmem:[%s5 + $0xcc8] sm:$0xff]
  %v1595 = vld [vmem:[%s5 + $0xcd0] sm:$0xff]
  %v1596 = vld [vmem:[%s5 + $0xcd8] sm:$0xff]
  %v1597 = vld [vmem:[%s5 + $0xce0] sm:$0xff]
  %v1598 = vld [vmem:[%s5 + $0xce8] sm:$0xff]
  %v1599 = vld [vmem:[%s5 + $0xcf0] sm:$0xff]
  %v1600 = vld [vmem:[%s5 + $0xcf8] sm:$0xff]
  %v1601 = vld [vmem:[%s5 + $0xd00] sm:$0xff]
  %v1602 = vld [vmem:[%s5 + $0xd08] sm:$0xff]
  %v1603 = vld [vmem:[%s5 + $0xd10] sm:$0xff]
  %v1604 = vld [vmem:[%s5 + $0xd18] sm:$0xff]
  %v1605 = vld [vmem:[%s5 + $0xd20] sm:$0xff]
  %v1606 = vld [vmem:[%s5 + $0xd28] sm:$0xff]
  %v1607 = vld [vmem:[%s5 + $0xd30] sm:$0xff]
  %v1608 = vld [vmem:[%s5 + $0xd38] sm:$0xff]
  %v1609 = vld [vmem:[%s5 + $0xd40] sm:$0xff]
  %v1610 = vld [vmem:[%s5 + $0xd48] sm:$0xff]
  %v1611 = vld [vmem:[%s5 + $0xd50] sm:$0xff]
  %v1612 = vld [vmem:[%s5 + $0xd58] sm:$0xff]
  %v1613 = vld [vmem:[%s5 + $0xd60] sm:$0xff]
  %v1614 = vld [vmem:[%s5 + $0xd68] sm:$0xff]
  %v1615 = vld [vmem:[%s5 + $0xd70] sm:$0xff]
  %v1616 = vld [vmem:[%s5 + $0xd78] sm:$0xff]
  %v1617 = vld [vmem:[%s5 + $0xd80] sm:$0xff]
  %v1618 = vld [vmem:[%s5 + $0xd88] sm:$0xff]
  %v1619 = vld [vmem:[%s5 + $0xd90] sm:$0xff]
  %v1620 = vld [vmem:[%s5 + $0xd98] sm:$0xff]
  %v1621 = vld [vmem:[%s5 + $0xda0] sm:$0xff]
  %v1622 = vld [vmem:[%s5 + $0xda8] sm:$0xff]
  %v1623 = vld [vmem:[%s5 + $0xdb0] sm:$0xff]
  %v1624 = vld [vmem:[%s5 + $0xdb8] sm:$0xff]
  %v1625 = vld [vmem:[%s5 + $0xdc0] sm:$0xff]
  %v1626 = vld [vmem:[%s5 + $0xdc8] sm:$0xff]
  %v1627 = vld [vmem:[%s5 + $0xdd0] sm:$0xff]
  %v1628 = vld [vmem:[%s5 + $0xdd8] sm:$0xff]
  %v1629 = vld [vmem:[%s5 + $0xde0] sm:$0xff]
  %v1630 = vld [vmem:[%s5 + $0xde8] sm:$0xff]
  %v1631 = vld [vmem:[%s5 + $0xdf0] sm:$0xff]
  %v1632 = vld [vmem:[%s5 + $0xdf8] sm:$0xff]
  %v1633 = vld [vmem:[%s5 + $0xe00] sm:$0xff]
  %v1634 = vld [vmem:[%s5 + $0xe08] sm:$0xff]
  %v1635 = vld [vmem:[%s5 + $0xe10] sm:$0xff]
  %v1636 = vld [vmem:[%s5 + $0xe18] sm:$0xff]
  %v1637 = vld [vmem:[%s5 + $0xe20] sm:$0xff]
  %v1638 = vld [vmem:[%s5 + $0xe28] sm:$0xff]
  %v1639 = vld [vmem:[%s5 + $0xe30] sm:$0xff]
  %v1640 = vld [vmem:[%s5 + $0xe38] sm:$0xff]
  %v1641 = vld [vmem:[%s5 + $0xe40] sm:$0xff]
  %v1642 = vld [vmem:[%s5 + $0xe48] sm:$0xff]
  %v1643 = vld [vmem:[%s5 + $0xe50] sm:$0xff]
  %v1644 = vld [vmem:[%s5 + $0xe58] sm:$0xff]
  %v1645 = vld [vmem:[%s5 + $0xe60] sm:$0xff]
  %v1646 = vld [vmem:[%s5 + $0xe68] sm:$0xff]
  %v1647 = vld [vmem:[%s5 + $0xe70] sm:$0xff]
  %v1648 = vld [vmem:[%s5 + $0xe78] sm:$0xff]
  %v1649 = vld [vmem:[%s5 + $0xe80] sm:$0xff]
  %v1650 = vld [vmem:[%s5 + $0xe88] sm:$0xff]
  %v1651 = vld [vmem:[%s5 + $0xe90] sm:$0xff]
  %v1652 = vld [vmem:[%s5 + $0xe98] sm:$0xff]
  %v1653 = vld [vmem:[%s5 + $0xea0] sm:$0xff]
  %v1654 = vld [vmem:[%s5 + $0xea8] sm:$0xff]
  %v1655 = vld [vmem:[%s5 + $0xeb0] sm:$0xff]
  %v1656 = vld [vmem:[%s5 + $0xeb8] sm:$0xff]
  %v1657 = vld [vmem:[%s5 + $0xec0] sm:$0xff]
  %v1658 = vld [vmem:[%s5 + $0xec8] sm:$0xff]
  %v1659 = vld [vmem:[%s5 + $0xed0] sm:$0xff]
  %v1660 = vld [vmem:[%s5 + $0xed8] sm:$0xff]
  %v1661 = vld [vmem:[%s5 + $0xee0] sm:$0xff]
  %v1662 = vld [vmem:[%s5 + $0xee8] sm:$0xff]
  %v1663 = vld [vmem:[%s5 + $0xef0] sm:$0xff]
  %v1664 = vld [vmem:[%s5 + $0xef8] sm:$0xff]
  %v1665 = vld [vmem:[%s5 + $0xf00] sm:$0xff]
  %v1666 = vld [vmem:[%s5 + $0xf08] sm:$0xff]
  %v1667 = vld [vmem:[%s5 + $0xf10] sm:$0xff]
  %v1668 = vld [vmem:[%s5 + $0xf18] sm:$0xff]
  %v1669 = vld [vmem:[%s5 + $0xf20] sm:$0xff]
  %v1670 = vld [vmem:[%s5 + $0xf28] sm:$0xff]
  %v1671 = vld [vmem:[%s5 + $0xf30] sm:$0xff]
  %v1672 = vld [vmem:[%s5 + $0xf38] sm:$0xff]
  %v1673 = vld [vmem:[%s5 + $0xf40] sm:$0xff]
  %v1674 = vld [vmem:[%s5 + $0xf48] sm:$0xff]
  %v1675 = vld [vmem:[%s5 + $0xf50] sm:$0xff]
  %v1676 = vld [vmem:[%s5 + $0xf58] sm:$0xff]
  %v1677 = vld [vmem:[%s5 + $0xf60] sm:$0xff]
  %v1678 = vld [vmem:[%s5 + $0xf68] sm:$0xff]
  %v1679 = vld [vmem:[%s5 + $0xf70] sm:$0xff]
  %v1680 = vld [vmem:[%s5 + $0xf78] sm:$0xff]
  %v1681 = vld [vmem:[%s5 + $0xf80] sm:$0x33]
  %v1682 = vld [vmem:[%s5 + $0xf88] sm:$0x33]
  %v1683 = vld [vmem:[%s5 + $0xf90] sm:$0x33]
  %v1684 = vld [vmem:[%s5 + $0xf98] sm:$0x33]
  %v1685 = vld [vmem:[%s5 + $0xfa0] sm:$0x33]
  %v1686 = vld [vmem:[%s5 + $0xfa8] sm:$0x33]
  %v1687 = vld [vmem:[%s5 + $0xfb0] sm:$0x33]
  %v1688 = vld [vmem:[%s5 + $0xfb8] sm:$0x33]
  %v1689 = vld [vmem:[%s6] sm:$0xff]
  %v1690 = vld [vmem:[%s6 + $0x8] sm:$0xff]
  %v1693 = vperm.slane %v1689, 0
  %v1694 = vperm.slane %v1689, 1
  %v1695 = vperm.slane %v1689, 2
  %v1696 = vperm.slane %v1689, 3
  %v1697 = vperm.slane %v1689, 4
  %v1698 = vperm.slane %v1689, 5
  %v1699 = vperm.slane %v1689, 6
  %v1700 = vperm.slane %v1689, 7
  %v1701 = vperm.slane %v1690, 0
  %v1702 = vperm.slane %v1690, 1
  %v1703 = vperm.slane %v1690, 2
  %v1704 = vperm.slane %v1690, 3
  %v1705 = vperm.slane %v1690, 4
  %v1706 = vperm.slane %v1690, 5
  %v1707 = vperm.slane %v1690, 6
  %v1708 = vperm.slane %v1690, 7
  %v2229 = vunpack.c.l.b16 %v1185
  %v2230 = vunpack.c.h.b16 %v1185
  %v2231 = vunpack.c.l.b16 %v1186
  %v2232 = vunpack.c.h.b16 %v1186
  %v2233 = vunpack.c.l.b16 %v1187
  %v2234 = vunpack.c.h.b16 %v1187
  %v2235 = vunpack.c.l.b16 %v1188
  %v2236 = vunpack.c.h.b16 %v1188
  %v2237 = vunpack.c.l.b16 %v1189
  %v2238 = vunpack.c.h.b16 %v1189
  %v2239 = vunpack.c.l.b16 %v1190
  %v2240 = vunpack.c.h.b16 %v1190
  %v2241 = vunpack.c.l.b16 %v1191
  %v2242 = vunpack.c.h.b16 %v1191
  %v2243 = vunpack.c.l.b16 %v1192
  %v2244 = vunpack.c.h.b16 %v1192
  %v2245 = vunpack.c.l.b16 %v1193
  %v2246 = vunpack.c.h.b16 %v1193
  %v2247 = vunpack.c.l.b16 %v1194
  %v2248 = vunpack.c.h.b16 %v1194
  %v2249 = vunpack.c.l.b16 %v1195
  %v2250 = vunpack.c.h.b16 %v1195
  %v2251 = vunpack.c.l.b16 %v1196
  %v2252 = vunpack.c.h.b16 %v1196
  %v2253 = vunpack.c.l.b16 %v1197
  %v2254 = vunpack.c.h.b16 %v1197
  %v2255 = vunpack.c.l.b16 %v1198
  %v2256 = vunpack.c.h.b16 %v1198
  %v2257 = vunpack.c.l.b16 %v1199
  %v2258 = vunpack.c.h.b16 %v1199
  %v2259 = vunpack.c.l.b16 %v1200
  %v2260 = vunpack.c.h.b16 %v1200
  %v2261 = vunpack.c.l.b16 %v1201
  %v2262 = vunpack.c.h.b16 %v1201
  %v2263 = vunpack.c.l.b16 %v1202
  %v2264 = vunpack.c.h.b16 %v1202
  %v2265 = vunpack.c.l.b16 %v1203
  %v2266 = vunpack.c.h.b16 %v1203
  %v2267 = vunpack.c.l.b16 %v1204
  %v2268 = vunpack.c.h.b16 %v1204
  %v2269 = vunpack.c.l.b16 %v1205
  %v2270 = vunpack.c.h.b16 %v1205
  %v2271 = vunpack.c.l.b16 %v1206
  %v2272 = vunpack.c.h.b16 %v1206
  %v2273 = vunpack.c.l.b16 %v1207
  %v2274 = vunpack.c.h.b16 %v1207
  %v2275 = vunpack.c.l.b16 %v1208
  %v2276 = vunpack.c.h.b16 %v1208
  %v2277 = vunpack.c.l.b16 %v1209
  %v2278 = vunpack.c.h.b16 %v1209
  %v2279 = vunpack.c.l.b16 %v1210
  %v2280 = vunpack.c.h.b16 %v1210
  %v2281 = vunpack.c.l.b16 %v1211
  %v2282 = vunpack.c.h.b16 %v1211
  %v2283 = vunpack.c.l.b16 %v1212
  %v2284 = vunpack.c.h.b16 %v1212
  %v2285 = vunpack.c.l.b16 %v1213
  %v2286 = vunpack.c.h.b16 %v1213
  %v2287 = vunpack.c.l.b16 %v1214
  %v2288 = vunpack.c.h.b16 %v1214
  %v2289 = vunpack.c.l.b16 %v1215
  %v2290 = vunpack.c.h.b16 %v1215
  %v2291 = vunpack.c.l.b16 %v1216
  %v2292 = vunpack.c.h.b16 %v1216
  %v2293 = vunpack.c.l.b16 %v1217
  %v2294 = vunpack.c.h.b16 %v1217
  %v2295 = vunpack.c.l.b16 %v1218
  %v2296 = vunpack.c.h.b16 %v1218
  %v2297 = vunpack.c.l.b16 %v1219
  %v2298 = vunpack.c.h.b16 %v1219
  %v2299 = vunpack.c.l.b16 %v1220
  %v2300 = vunpack.c.h.b16 %v1220
  %v2301 = vunpack.c.l.b16 %v1221
  %v2302 = vunpack.c.h.b16 %v1221
  %v2303 = vunpack.c.l.b16 %v1222
  %v2304 = vunpack.c.h.b16 %v1222
  %v2305 = vunpack.c.l.b16 %v1223
  %v2306 = vunpack.c.h.b16 %v1223
  %v2307 = vunpack.c.l.b16 %v1224
  %v2308 = vunpack.c.h.b16 %v1224
  %v2309 = vunpack.c.l.b16 %v1225
  %v2310 = vunpack.c.h.b16 %v1225
  %v2311 = vunpack.c.l.b16 %v1226
  %v2312 = vunpack.c.h.b16 %v1226
  %v2313 = vunpack.c.l.b16 %v1227
  %v2314 = vunpack.c.h.b16 %v1227
  %v2315 = vunpack.c.l.b16 %v1228
  %v2316 = vunpack.c.h.b16 %v1228
  %v2317 = vunpack.c.l.b16 %v1229
  %v2318 = vunpack.c.h.b16 %v1229
  %v2319 = vunpack.c.l.b16 %v1230
  %v2320 = vunpack.c.h.b16 %v1230
  %v2321 = vunpack.c.l.b16 %v1231
  %v2322 = vunpack.c.h.b16 %v1231
  %v2323 = vunpack.c.l.b16 %v1232
  %v2324 = vunpack.c.h.b16 %v1232
  %v2325 = vunpack.c.l.b16 %v1233
  %v2326 = vunpack.c.h.b16 %v1233
  %v2327 = vunpack.c.l.b16 %v1234
  %v2328 = vunpack.c.h.b16 %v1234
  %v2329 = vunpack.c.l.b16 %v1235
  %v2330 = vunpack.c.h.b16 %v1235
  %v2331 = vunpack.c.l.b16 %v1236
  %v2332 = vunpack.c.h.b16 %v1236
  %v2333 = vunpack.c.l.b16 %v1237
  %v2334 = vunpack.c.h.b16 %v1237
  %v2335 = vunpack.c.l.b16 %v1238
  %v2336 = vunpack.c.h.b16 %v1238
  %v2337 = vunpack.c.l.b16 %v1239
  %v2338 = vunpack.c.h.b16 %v1239
  %v2339 = vunpack.c.l.b16 %v1240
  %v2340 = vunpack.c.h.b16 %v1240
  %v2341 = vunpack.c.l.b16 %v1241
  %v2342 = vunpack.c.h.b16 %v1241
  %v2343 = vunpack.c.l.b16 %v1242
  %v2344 = vunpack.c.h.b16 %v1242
  %v2345 = vunpack.c.l.b16 %v1243
  %v2346 = vunpack.c.h.b16 %v1243
  %v2347 = vunpack.c.l.b16 %v1244
  %v2348 = vunpack.c.h.b16 %v1244
  %v2349 = vunpack.c.l.b16 %v1245
  %v2350 = vunpack.c.h.b16 %v1245
  %v2351 = vunpack.c.l.b16 %v1246
  %v2352 = vunpack.c.h.b16 %v1246
  %v2353 = vunpack.c.l.b16 %v1247
  %v2354 = vunpack.c.h.b16 %v1247
  %v2355 = vunpack.c.l.b16 %v1248
  %v2356 = vunpack.c.h.b16 %v1248
  %v2357 = vunpack.c.l.b16 %v1249
  %v2358 = vunpack.c.h.b16 %v1249
  %v2359 = vunpack.c.l.b16 %v1250
  %v2360 = vunpack.c.h.b16 %v1250
  %v2361 = vunpack.c.l.b16 %v1251
  %v2362 = vunpack.c.h.b16 %v1251
  %v2363 = vunpack.c.l.b16 %v1252
  %v2364 = vunpack.c.h.b16 %v1252
  %v2365 = vunpack.c.l.b16 %v1253
  %v2366 = vunpack.c.h.b16 %v1253
  %v2367 = vunpack.c.l.b16 %v1254
  %v2368 = vunpack.c.h.b16 %v1254
  %v2369 = vunpack.c.l.b16 %v1255
  %v2370 = vunpack.c.h.b16 %v1255
  %v2371 = vunpack.c.l.b16 %v1256
  %v2372 = vunpack.c.h.b16 %v1256
  %v2373 = vunpack.c.l.b16 %v1257
  %v2374 = vunpack.c.h.b16 %v1257
  %v2375 = vunpack.c.l.b16 %v1258
  %v2376 = vunpack.c.h.b16 %v1258
  %v2377 = vunpack.c.l.b16 %v1259
  %v2378 = vunpack.c.h.b16 %v1259
  %v2379 = vunpack.c.l.b16 %v1260
  %v2380 = vunpack.c.h.b16 %v1260
  %v2381 = vunpack.c.l.b16 %v1261
  %v2382 = vunpack.c.h.b16 %v1261
  %v2383 = vunpack.c.l.b16 %v1262
  %v2384 = vunpack.c.h.b16 %v1262
  %v2385 = vunpack.c.l.b16 %v1263
  %v2386 = vunpack.c.h.b16 %v1263
  %v2387 = vunpack.c.l.b16 %v1264
  %v2388 = vunpack.c.h.b16 %v1264
  %v2389 = vunpack.c.l.b16 %v1265
  %v2390 = vunpack.c.h.b16 %v1265
  %v2391 = vunpack.c.l.b16 %v1266
  %v2392 = vunpack.c.h.b16 %v1266
  %v2393 = vunpack.c.l.b16 %v1267
  %v2394 = vunpack.c.h.b16 %v1267
  %v2395 = vunpack.c.l.b16 %v1268
  %v2396 = vunpack.c.h.b16 %v1268
  %v2397 = vunpack.c.l.b16 %v1269
  %v2398 = vunpack.c.h.b16 %v1269
  %v2399 = vunpack.c.l.b16 %v1270
  %v2400 = vunpack.c.h.b16 %v1270
  %v2401 = vunpack.c.l.b16 %v1271
  %v2402 = vunpack.c.h.b16 %v1271
  %v2403 = vunpack.c.l.b16 %v1272
  %v2404 = vunpack.c.h.b16 %v1272
  %v2405 = vunpack.c.l.b16 %v1273
  %v2406 = vunpack.c.h.b16 %v1273
  %v2407 = vunpack.c.l.b16 %v1274
  %v2408 = vunpack.c.h.b16 %v1274
  %v2409 = vunpack.c.l.b16 %v1275
  %v2410 = vunpack.c.h.b16 %v1275
  %v2411 = vunpack.c.l.b16 %v1276
  %v2412 = vunpack.c.h.b16 %v1276
  %v2413 = vunpack.c.l.b16 %v1277
  %v2414 = vunpack.c.h.b16 %v1277
  %v2415 = vunpack.c.l.b16 %v1278
  %v2416 = vunpack.c.h.b16 %v1278
  %v2417 = vunpack.c.l.b16 %v1279
  %v2418 = vunpack.c.h.b16 %v1279
  %v2419 = vunpack.c.l.b16 %v1280
  %v2420 = vunpack.c.h.b16 %v1280
  %v2421 = vunpack.c.l.b16 %v1281
  %v2422 = vunpack.c.h.b16 %v1281
  %v2423 = vunpack.c.l.b16 %v1282
  %v2424 = vunpack.c.h.b16 %v1282
  %v2425 = vunpack.c.l.b16 %v1283
  %v2426 = vunpack.c.h.b16 %v1283
  %v2427 = vunpack.c.l.b16 %v1284
  %v2428 = vunpack.c.h.b16 %v1284
  %v2429 = vunpack.c.l.b16 %v1285
  %v2430 = vunpack.c.h.b16 %v1285
  %v2431 = vunpack.c.l.b16 %v1286
  %v2432 = vunpack.c.h.b16 %v1286
  %v2433 = vunpack.c.l.b16 %v1287
  %v2434 = vunpack.c.h.b16 %v1287
  %v2435 = vunpack.c.l.b16 %v1288
  %v2436 = vunpack.c.h.b16 %v1288
  %v2437 = vunpack.c.l.b16 %v1289
  %v2438 = vunpack.c.h.b16 %v1289
  %v2439 = vunpack.c.l.b16 %v1290
  %v2440 = vunpack.c.h.b16 %v1290
  %v2441 = vunpack.c.l.b16 %v1291
  %v2442 = vunpack.c.h.b16 %v1291
  %v2443 = vunpack.c.l.b16 %v1292
  %v2444 = vunpack.c.h.b16 %v1292
  %v2445 = vunpack.c.l.b16 %v1293
  %v2446 = vunpack.c.h.b16 %v1293
  %v2447 = vunpack.c.l.b16 %v1294
  %v2448 = vunpack.c.h.b16 %v1294
  %v2449 = vunpack.c.l.b16 %v1295
  %v2450 = vunpack.c.h.b16 %v1295
  %v2451 = vunpack.c.l.b16 %v1296
  %v2452 = vunpack.c.h.b16 %v1296
  %v2453 = vunpack.c.l.b16 %v1297
  %v2454 = vunpack.c.h.b16 %v1297
  %v2455 = vunpack.c.l.b16 %v1298
  %v2456 = vunpack.c.h.b16 %v1298
  %v2457 = vunpack.c.l.b16 %v1299
  %v2458 = vunpack.c.h.b16 %v1299
  %v2459 = vunpack.c.l.b16 %v1300
  %v2460 = vunpack.c.h.b16 %v1300
  %v2461 = vunpack.c.l.b16 %v1301
  %v2462 = vunpack.c.h.b16 %v1301
  %v2463 = vunpack.c.l.b16 %v1302
  %v2464 = vunpack.c.h.b16 %v1302
  %v2465 = vunpack.c.l.b16 %v1303
  %v2466 = vunpack.c.h.b16 %v1303
  %v2467 = vunpack.c.l.b16 %v1304
  %v2468 = vunpack.c.h.b16 %v1304
  %v2469 = vunpack.c.l.b16 %v1305
  %v2470 = vunpack.c.h.b16 %v1305
  %v2471 = vunpack.c.l.b16 %v1306
  %v2472 = vunpack.c.h.b16 %v1306
  %v2473 = vunpack.c.l.b16 %v1307
  %v2474 = vunpack.c.h.b16 %v1307
  %v2475 = vunpack.c.l.b16 %v1308
  %v2476 = vunpack.c.h.b16 %v1308
  %v2477 = vunpack.c.l.b16 %v1309
  %v2478 = vunpack.c.h.b16 %v1309
  %v2479 = vunpack.c.l.b16 %v1310
  %v2480 = vunpack.c.h.b16 %v1310
  %v2481 = vunpack.c.l.b16 %v1311
  %v2482 = vunpack.c.h.b16 %v1311
  %v2483 = vunpack.c.l.b16 %v1312
  %v2484 = vunpack.c.h.b16 %v1312
  %v2485 = vunpack.c.l.b16 %v1313
  %v2486 = vunpack.c.h.b16 %v1313
  %v2487 = vunpack.c.l.b16 %v1314
  %v2488 = vunpack.c.h.b16 %v1314
  %v2489 = vunpack.c.l.b16 %v1315
  %v2490 = vunpack.c.h.b16 %v1315
  %v2491 = vunpack.c.l.b16 %v1316
  %v2492 = vunpack.c.h.b16 %v1316
  %v2493 = vunpack.c.l.b16 %v1317
  %v2494 = vunpack.c.h.b16 %v1317
  %v2495 = vunpack.c.l.b16 %v1318
  %v2496 = vunpack.c.h.b16 %v1318
  %v2497 = vunpack.c.l.b16 %v1319
  %v2498 = vunpack.c.h.b16 %v1319
  %v2499 = vunpack.c.l.b16 %v1320
  %v2500 = vunpack.c.h.b16 %v1320
  %v2501 = vunpack.c.l.b16 %v1321
  %v2502 = vunpack.c.h.b16 %v1321
  %v2503 = vunpack.c.l.b16 %v1322
  %v2504 = vunpack.c.h.b16 %v1322
  %v2505 = vunpack.c.l.b16 %v1323
  %v2506 = vunpack.c.h.b16 %v1323
  %v2507 = vunpack.c.l.b16 %v1324
  %v2508 = vunpack.c.h.b16 %v1324
  %v2509 = vunpack.c.l.b16 %v1325
  %v2510 = vunpack.c.h.b16 %v1325
  %v2511 = vunpack.c.l.b16 %v1326
  %v2512 = vunpack.c.h.b16 %v1326
  %v2513 = vunpack.c.l.b16 %v1327
  %v2514 = vunpack.c.h.b16 %v1327
  %v2515 = vunpack.c.l.b16 %v1328
  %v2516 = vunpack.c.h.b16 %v1328
  %v2517 = vunpack.c.l.b16 %v1329
  %v2518 = vunpack.c.h.b16 %v1329
  %v2519 = vunpack.c.l.b16 %v1330
  %v2520 = vunpack.c.h.b16 %v1330
  %v2521 = vunpack.c.l.b16 %v1331
  %v2522 = vunpack.c.h.b16 %v1331
  %v2523 = vunpack.c.l.b16 %v1332
  %v2524 = vunpack.c.h.b16 %v1332
  %v2525 = vunpack.c.l.b16 %v1333
  %v2526 = vunpack.c.h.b16 %v1333
  %v2527 = vunpack.c.l.b16 %v1334
  %v2528 = vunpack.c.h.b16 %v1334
  %v2529 = vunpack.c.l.b16 %v1335
  %v2530 = vunpack.c.h.b16 %v1335
  %v2531 = vunpack.c.l.b16 %v1336
  %v2532 = vunpack.c.h.b16 %v1336
  %v2533 = vunpack.c.l.b16 %v1337
  %v2534 = vunpack.c.h.b16 %v1337
  %v2535 = vunpack.c.l.b16 %v1338
  %v2536 = vunpack.c.h.b16 %v1338
  %v2537 = vunpack.c.l.b16 %v1339
  %v2538 = vunpack.c.h.b16 %v1339
  %v2539 = vunpack.c.l.b16 %v1340
  %v2540 = vunpack.c.h.b16 %v1340
  %v2541 = vunpack.c.l.b16 %v1341
  %v2542 = vunpack.c.h.b16 %v1341
  %v2543 = vunpack.c.l.b16 %v1342
  %v2544 = vunpack.c.h.b16 %v1342
  %v2545 = vunpack.c.l.b16 %v1343
  %v2546 = vunpack.c.h.b16 %v1343
  %v2547 = vunpack.c.l.b16 %v1344
  %v2548 = vunpack.c.h.b16 %v1344
  %v2549 = vunpack.c.l.b16 %v1345
  %v2550 = vunpack.c.h.b16 %v1345
  %v2551 = vunpack.c.l.b16 %v1346
  %v2552 = vunpack.c.h.b16 %v1346
  %v2553 = vunpack.c.l.b16 %v1347
  %v2554 = vunpack.c.h.b16 %v1347
  %v2555 = vunpack.c.l.b16 %v1348
  %v2556 = vunpack.c.h.b16 %v1348
  %v2557 = vunpack.c.l.b16 %v1349
  %v2558 = vunpack.c.h.b16 %v1349
  %v2559 = vunpack.c.l.b16 %v1350
  %v2560 = vunpack.c.h.b16 %v1350
  %v2561 = vunpack.c.l.b16 %v1351
  %v2562 = vunpack.c.h.b16 %v1351
  %v2563 = vunpack.c.l.b16 %v1352
  %v2564 = vunpack.c.h.b16 %v1352
  %v2565 = vunpack.c.l.b16 %v1353
  %v2566 = vunpack.c.h.b16 %v1353
  %v2567 = vunpack.c.l.b16 %v1354
  %v2568 = vunpack.c.h.b16 %v1354
  %v2569 = vunpack.c.l.b16 %v1355
  %v2570 = vunpack.c.h.b16 %v1355
  %v2571 = vunpack.c.l.b16 %v1356
  %v2572 = vunpack.c.h.b16 %v1356
  %v2573 = vunpack.c.l.b16 %v1357
  %v2574 = vunpack.c.h.b16 %v1357
  %v2575 = vunpack.c.l.b16 %v1358
  %v2576 = vunpack.c.h.b16 %v1358
  %v2577 = vunpack.c.l.b16 %v1359
  %v2578 = vunpack.c.h.b16 %v1359
  %v2579 = vunpack.c.l.b16 %v1360
  %v2580 = vunpack.c.h.b16 %v1360
  %v2581 = vunpack.c.l.b16 %v1361
  %v2582 = vunpack.c.h.b16 %v1361
  %v2583 = vunpack.c.l.b16 %v1362
  %v2584 = vunpack.c.h.b16 %v1362
  %v2585 = vunpack.c.l.b16 %v1363
  %v2586 = vunpack.c.h.b16 %v1363
  %v2587 = vunpack.c.l.b16 %v1364
  %v2588 = vunpack.c.h.b16 %v1364
  %v2589 = vunpack.c.l.b16 %v1365
  %v2590 = vunpack.c.h.b16 %v1365
  %v2591 = vunpack.c.l.b16 %v1366
  %v2592 = vunpack.c.h.b16 %v1366
  %v2593 = vunpack.c.l.b16 %v1367
  %v2594 = vunpack.c.h.b16 %v1367
  %v2595 = vunpack.c.l.b16 %v1368
  %v2596 = vunpack.c.h.b16 %v1368
  %v2597 = vunpack.c.l.b16 %v1369
  %v2598 = vunpack.c.h.b16 %v1369
  %v2599 = vunpack.c.l.b16 %v1370
  %v2600 = vunpack.c.h.b16 %v1370
  %v2601 = vunpack.c.l.b16 %v1371
  %v2602 = vunpack.c.h.b16 %v1371
  %v2603 = vunpack.c.l.b16 %v1372
  %v2604 = vunpack.c.h.b16 %v1372
  %v2605 = vunpack.c.l.b16 %v1373
  %v2606 = vunpack.c.h.b16 %v1373
  %v2607 = vunpack.c.l.b16 %v1374
  %v2608 = vunpack.c.h.b16 %v1374
  %v2609 = vunpack.c.l.b16 %v1375
  %v2610 = vunpack.c.h.b16 %v1375
  %v2611 = vunpack.c.l.b16 %v1376
  %v2612 = vunpack.c.h.b16 %v1376
  %v2613 = vunpack.c.l.b16 %v1377
  %v2614 = vunpack.c.h.b16 %v1377
  %v2615 = vunpack.c.l.b16 %v1378
  %v2616 = vunpack.c.h.b16 %v1378
  %v2617 = vunpack.c.l.b16 %v1379
  %v2618 = vunpack.c.h.b16 %v1379
  %v2619 = vunpack.c.l.b16 %v1380
  %v2620 = vunpack.c.h.b16 %v1380
  %v2621 = vunpack.c.l.b16 %v1381
  %v2622 = vunpack.c.h.b16 %v1381
  %v2623 = vunpack.c.l.b16 %v1382
  %v2624 = vunpack.c.h.b16 %v1382
  %v2625 = vunpack.c.l.b16 %v1383
  %v2626 = vunpack.c.h.b16 %v1383
  %v2627 = vunpack.c.l.b16 %v1384
  %v2628 = vunpack.c.h.b16 %v1384
  %v2629 = vunpack.c.l.b16 %v1385
  %v2630 = vunpack.c.h.b16 %v1385
  %v2631 = vunpack.c.l.b16 %v1386
  %v2632 = vunpack.c.h.b16 %v1386
  %v2633 = vunpack.c.l.b16 %v1387
  %v2634 = vunpack.c.h.b16 %v1387
  %v2635 = vunpack.c.l.b16 %v1388
  %v2636 = vunpack.c.h.b16 %v1388
  %v2637 = vunpack.c.l.b16 %v1389
  %v2638 = vunpack.c.h.b16 %v1389
  %v2639 = vunpack.c.l.b16 %v1390
  %v2640 = vunpack.c.h.b16 %v1390
  %v2641 = vunpack.c.l.b16 %v1391
  %v2642 = vunpack.c.h.b16 %v1391
  %v2643 = vunpack.c.l.b16 %v1392
  %v2644 = vunpack.c.h.b16 %v1392
  %v2645 = vunpack.c.l.b16 %v1393
  %v2646 = vunpack.c.h.b16 %v1393
  %v2647 = vunpack.c.l.b16 %v1394
  %v2648 = vunpack.c.h.b16 %v1394
  %v2649 = vunpack.c.l.b16 %v1395
  %v2650 = vunpack.c.h.b16 %v1395
  %v2651 = vunpack.c.l.b16 %v1396
  %v2652 = vunpack.c.h.b16 %v1396
  %v2653 = vunpack.c.l.b16 %v1397
  %v2654 = vunpack.c.h.b16 %v1397
  %v2655 = vunpack.c.l.b16 %v1398
  %v2656 = vunpack.c.h.b16 %v1398
  %v2657 = vunpack.c.l.b16 %v1399
  %v2658 = vunpack.c.h.b16 %v1399
  %v2659 = vunpack.c.l.b16 %v1400
  %v2660 = vunpack.c.h.b16 %v1400
  %v2661 = vunpack.c.l.b16 %v1401
  %v2662 = vunpack.c.h.b16 %v1401
  %v2663 = vunpack.c.l.b16 %v1402
  %v2664 = vunpack.c.h.b16 %v1402
  %v2665 = vunpack.c.l.b16 %v1403
  %v2666 = vunpack.c.h.b16 %v1403
  %v2667 = vunpack.c.l.b16 %v1404
  %v2668 = vunpack.c.h.b16 %v1404
  %v2669 = vunpack.c.l.b16 %v1405
  %v2670 = vunpack.c.h.b16 %v1405
  %v2671 = vunpack.c.l.b16 %v1406
  %v2672 = vunpack.c.h.b16 %v1406
  %v2673 = vunpack.c.l.b16 %v1407
  %v2674 = vunpack.c.h.b16 %v1407
  %v2675 = vunpack.c.l.b16 %v1408
  %v2676 = vunpack.c.h.b16 %v1408
  %v2677 = vunpack.c.l.b16 %v1409
  %v2678 = vunpack.c.h.b16 %v1409
  %v2679 = vunpack.c.l.b16 %v1410
  %v2680 = vunpack.c.h.b16 %v1410
  %v2681 = vunpack.c.l.b16 %v1411
  %v2682 = vunpack.c.h.b16 %v1411
  %v2683 = vunpack.c.l.b16 %v1412
  %v2684 = vunpack.c.h.b16 %v1412
  %v2685 = vunpack.c.l.b16 %v1413
  %v2686 = vunpack.c.h.b16 %v1413
  %v2687 = vunpack.c.l.b16 %v1414
  %v2688 = vunpack.c.h.b16 %v1414
  %v2689 = vunpack.c.l.b16 %v1415
  %v2690 = vunpack.c.h.b16 %v1415
  %v2691 = vunpack.c.l.b16 %v1416
  %v2692 = vunpack.c.h.b16 %v1416
  %v2693 = vunpack.c.l.b16 %v1417
  %v2694 = vunpack.c.h.b16 %v1417
  %v2695 = vunpack.c.l.b16 %v1418
  %v2696 = vunpack.c.h.b16 %v1418
  %v2697 = vunpack.c.l.b16 %v1419
  %v2698 = vunpack.c.h.b16 %v1419
  %v2699 = vunpack.c.l.b16 %v1420
  %v2700 = vunpack.c.h.b16 %v1420
  %v2701 = vunpack.c.l.b16 %v1421
  %v2702 = vunpack.c.h.b16 %v1421
  %v2703 = vunpack.c.l.b16 %v1422
  %v2704 = vunpack.c.h.b16 %v1422
  %v2705 = vunpack.c.l.b16 %v1423
  %v2706 = vunpack.c.h.b16 %v1423
  %v2707 = vunpack.c.l.b16 %v1424
  %v2708 = vunpack.c.h.b16 %v1424
  %v2709 = vunpack.c.l.b16 %v1425
  %v2710 = vunpack.c.h.b16 %v1425
  %v2711 = vunpack.c.l.b16 %v1426
  %v2712 = vunpack.c.h.b16 %v1426
  %v2713 = vunpack.c.l.b16 %v1427
  %v2714 = vunpack.c.h.b16 %v1427
  %v2715 = vunpack.c.l.b16 %v1428
  %v2716 = vunpack.c.h.b16 %v1428
  %v2717 = vunpack.c.l.b16 %v1429
  %v2718 = vunpack.c.h.b16 %v1429
  %v2719 = vunpack.c.l.b16 %v1430
  %v2720 = vunpack.c.h.b16 %v1430
  %v2721 = vunpack.c.l.b16 %v1431
  %v2722 = vunpack.c.h.b16 %v1431
  %v2723 = vunpack.c.l.b16 %v1432
  %v2724 = vunpack.c.h.b16 %v1432
  %v2725 = vunpack.c.l.b16 %v1433
  %v2726 = vunpack.c.h.b16 %v1433
  %v2727 = vunpack.c.l.b16 %v1434
  %v2728 = vunpack.c.h.b16 %v1434
  %v2729 = vunpack.c.l.b16 %v1435
  %v2730 = vunpack.c.h.b16 %v1435
  %v2731 = vunpack.c.l.b16 %v1436
  %v2732 = vunpack.c.h.b16 %v1436
  %v2733 = vunpack.c.l.b16 %v1437
  %v2734 = vunpack.c.h.b16 %v1437
  %v2735 = vunpack.c.l.b16 %v1438
  %v2736 = vunpack.c.h.b16 %v1438
  %v2737 = vunpack.c.l.b16 %v1439
  %v2738 = vunpack.c.h.b16 %v1439
  %v2739 = vunpack.c.l.b16 %v1440
  %v2740 = vunpack.c.h.b16 %v1440
  %v2741 = vunpack.c.l.b16 %v1441
  %v2742 = vunpack.c.h.b16 %v1441
  %v2743 = vunpack.c.l.b16 %v1442
  %v2744 = vunpack.c.h.b16 %v1442
  %v2745 = vunpack.c.l.b16 %v1443
  %v2746 = vunpack.c.h.b16 %v1443
  %v2747 = vunpack.c.l.b16 %v1444
  %v2748 = vunpack.c.h.b16 %v1444
  %v2749 = vunpack.c.l.b16 %v1445
  %v2750 = vunpack.c.h.b16 %v1445
  %v2751 = vunpack.c.l.b16 %v1446
  %v2752 = vunpack.c.h.b16 %v1446
  %v2753 = vunpack.c.l.b16 %v1447
  %v2754 = vunpack.c.h.b16 %v1447
  %v2755 = vunpack.c.l.b16 %v1448
  %v2756 = vunpack.c.h.b16 %v1448
  %v2757 = vunpack.c.l.b16 %v1449
  %v2758 = vunpack.c.h.b16 %v1449
  %v2759 = vunpack.c.l.b16 %v1450
  %v2760 = vunpack.c.h.b16 %v1450
  %v2761 = vunpack.c.l.b16 %v1451
  %v2762 = vunpack.c.h.b16 %v1451
  %v2763 = vunpack.c.l.b16 %v1452
  %v2764 = vunpack.c.h.b16 %v1452
  %v2765 = vunpack.c.l.b16 %v1453
  %v2766 = vunpack.c.h.b16 %v1453
  %v2767 = vunpack.c.l.b16 %v1454
  %v2768 = vunpack.c.h.b16 %v1454
  %v2769 = vunpack.c.l.b16 %v1455
  %v2770 = vunpack.c.h.b16 %v1455
  %v2771 = vunpack.c.l.b16 %v1456
  %v2772 = vunpack.c.h.b16 %v1456
  %v2773 = vunpack.c.l.b16 %v1457
  %v2774 = vunpack.c.h.b16 %v1457
  %v2775 = vunpack.c.l.b16 %v1458
  %v2776 = vunpack.c.h.b16 %v1458
  %v2777 = vunpack.c.l.b16 %v1459
  %v2778 = vunpack.c.h.b16 %v1459
  %v2779 = vunpack.c.l.b16 %v1460
  %v2780 = vunpack.c.h.b16 %v1460
  %v2781 = vunpack.c.l.b16 %v1461
  %v2782 = vunpack.c.h.b16 %v1461
  %v2783 = vunpack.c.l.b16 %v1462
  %v2784 = vunpack.c.h.b16 %v1462
  %v2785 = vunpack.c.l.b16 %v1463
  %v2786 = vunpack.c.h.b16 %v1463
  %v2787 = vunpack.c.l.b16 %v1464
  %v2788 = vunpack.c.h.b16 %v1464
  %v2789 = vunpack.c.l.b16 %v1465
  %v2790 = vunpack.c.h.b16 %v1465
  %v2791 = vunpack.c.l.b16 %v1466
  %v2792 = vunpack.c.h.b16 %v1466
  %v2793 = vunpack.c.l.b16 %v1467
  %v2794 = vunpack.c.h.b16 %v1467
  %v2795 = vunpack.c.l.b16 %v1468
  %v2796 = vunpack.c.h.b16 %v1468
  %v2797 = vunpack.c.l.b16 %v1469
  %v2798 = vunpack.c.h.b16 %v1469
  %v2799 = vunpack.c.l.b16 %v1470
  %v2800 = vunpack.c.h.b16 %v1470
  %v2801 = vunpack.c.l.b16 %v1471
  %v2802 = vunpack.c.h.b16 %v1471
  %v2803 = vunpack.c.l.b16 %v1472
  %v2804 = vunpack.c.h.b16 %v1472
  %v2805 = vunpack.c.l.b16 %v1473
  %v2806 = vunpack.c.h.b16 %v1473
  %v2807 = vunpack.c.l.b16 %v1474
  %v2808 = vunpack.c.h.b16 %v1474
  %v2809 = vunpack.c.l.b16 %v1475
  %v2810 = vunpack.c.h.b16 %v1475
  %v2811 = vunpack.c.l.b16 %v1476
  %v2812 = vunpack.c.h.b16 %v1476
  %v2813 = vunpack.c.l.b16 %v1477
  %v2814 = vunpack.c.h.b16 %v1477
  %v2815 = vunpack.c.l.b16 %v1478
  %v2816 = vunpack.c.h.b16 %v1478
  %v2817 = vunpack.c.l.b16 %v1479
  %v2818 = vunpack.c.h.b16 %v1479
  %v2819 = vunpack.c.l.b16 %v1480
  %v2820 = vunpack.c.h.b16 %v1480
  %v2821 = vunpack.c.l.b16 %v1481
  %v2822 = vunpack.c.h.b16 %v1481
  %v2823 = vunpack.c.l.b16 %v1482
  %v2824 = vunpack.c.h.b16 %v1482
  %v2825 = vunpack.c.l.b16 %v1483
  %v2826 = vunpack.c.h.b16 %v1483
  %v2827 = vunpack.c.l.b16 %v1484
  %v2828 = vunpack.c.h.b16 %v1484
  %v2829 = vunpack.c.l.b16 %v1485
  %v2830 = vunpack.c.h.b16 %v1485
  %v2831 = vunpack.c.l.b16 %v1486
  %v2832 = vunpack.c.h.b16 %v1486
  %v2833 = vunpack.c.l.b16 %v1487
  %v2834 = vunpack.c.h.b16 %v1487
  %v2835 = vunpack.c.l.b16 %v1488
  %v2836 = vunpack.c.h.b16 %v1488
  %v2837 = vunpack.c.l.b16 %v1489
  %v2838 = vunpack.c.h.b16 %v1489
  %v2839 = vunpack.c.l.b16 %v1490
  %v2840 = vunpack.c.h.b16 %v1490
  %v2841 = vunpack.c.l.b16 %v1491
  %v2842 = vunpack.c.h.b16 %v1491
  %v2843 = vunpack.c.l.b16 %v1492
  %v2844 = vunpack.c.h.b16 %v1492
  %v2845 = vunpack.c.l.b16 %v1493
  %v2846 = vunpack.c.h.b16 %v1493
  %v2847 = vunpack.c.l.b16 %v1494
  %v2848 = vunpack.c.h.b16 %v1494
  %v2849 = vunpack.c.l.b16 %v1495
  %v2850 = vunpack.c.h.b16 %v1495
  %v2851 = vunpack.c.l.b16 %v1496
  %v2852 = vunpack.c.h.b16 %v1496
  %v2853 = vunpack.c.l.b16 %v1497
  %v2854 = vunpack.c.h.b16 %v1497
  %v2855 = vunpack.c.l.b16 %v1498
  %v2856 = vunpack.c.h.b16 %v1498
  %v2857 = vunpack.c.l.b16 %v1499
  %v2858 = vunpack.c.h.b16 %v1499
  %v2859 = vunpack.c.l.b16 %v1500
  %v2860 = vunpack.c.h.b16 %v1500
  %v2861 = vunpack.c.l.b16 %v1501
  %v2862 = vunpack.c.h.b16 %v1501
  %v2863 = vunpack.c.l.b16 %v1502
  %v2864 = vunpack.c.h.b16 %v1502
  %v2865 = vunpack.c.l.b16 %v1503
  %v2866 = vunpack.c.h.b16 %v1503
  %v2867 = vunpack.c.l.b16 %v1504
  %v2868 = vunpack.c.h.b16 %v1504
  %v2869 = vunpack.c.l.b16 %v1505
  %v2870 = vunpack.c.h.b16 %v1505
  %v2871 = vunpack.c.l.b16 %v1506
  %v2872 = vunpack.c.h.b16 %v1506
  %v2873 = vunpack.c.l.b16 %v1507
  %v2874 = vunpack.c.h.b16 %v1507
  %v2875 = vunpack.c.l.b16 %v1508
  %v2876 = vunpack.c.h.b16 %v1508
  %v2877 = vunpack.c.l.b16 %v1509
  %v2878 = vunpack.c.h.b16 %v1509
  %v2879 = vunpack.c.l.b16 %v1510
  %v2880 = vunpack.c.h.b16 %v1510
  %v2881 = vunpack.c.l.b16 %v1511
  %v2882 = vunpack.c.h.b16 %v1511
  %v2883 = vunpack.c.l.b16 %v1512
  %v2884 = vunpack.c.h.b16 %v1512
  %v2885 = vunpack.c.l.b16 %v1513
  %v2886 = vunpack.c.h.b16 %v1513
  %v2887 = vunpack.c.l.b16 %v1514
  %v2888 = vunpack.c.h.b16 %v1514
  %v2889 = vunpack.c.l.b16 %v1515
  %v2890 = vunpack.c.h.b16 %v1515
  %v2891 = vunpack.c.l.b16 %v1516
  %v2892 = vunpack.c.h.b16 %v1516
  %v2893 = vunpack.c.l.b16 %v1517
  %v2894 = vunpack.c.h.b16 %v1517
  %v2895 = vunpack.c.l.b16 %v1518
  %v2896 = vunpack.c.h.b16 %v1518
  %v2897 = vunpack.c.l.b16 %v1519
  %v2898 = vunpack.c.h.b16 %v1519
  %v2899 = vunpack.c.l.b16 %v1520
  %v2900 = vunpack.c.h.b16 %v1520
  %v2901 = vunpack.c.l.b16 %v1521
  %v2902 = vunpack.c.h.b16 %v1521
  %v2903 = vunpack.c.l.b16 %v1522
  %v2904 = vunpack.c.h.b16 %v1522
  %v2905 = vunpack.c.l.b16 %v1523
  %v2906 = vunpack.c.h.b16 %v1523
  %v2907 = vunpack.c.l.b16 %v1524
  %v2908 = vunpack.c.h.b16 %v1524
  %v2909 = vunpack.c.l.b16 %v1525
  %v2910 = vunpack.c.h.b16 %v1525
  %v2911 = vunpack.c.l.b16 %v1526
  %v2912 = vunpack.c.h.b16 %v1526
  %v2913 = vunpack.c.l.b16 %v1527
  %v2914 = vunpack.c.h.b16 %v1527
  %v2915 = vunpack.c.l.b16 %v1528
  %v2916 = vunpack.c.h.b16 %v1528
  %v2917 = vunpack.c.l.b16 %v1529
  %v2918 = vunpack.c.h.b16 %v1529
  %v2919 = vunpack.c.l.b16 %v1530
  %v2920 = vunpack.c.h.b16 %v1530
  %v2921 = vunpack.c.l.b16 %v1531
  %v2922 = vunpack.c.h.b16 %v1531
  %v2923 = vunpack.c.l.b16 %v1532
  %v2924 = vunpack.c.h.b16 %v1532
  %v2925 = vunpack.c.l.b16 %v1533
  %v2926 = vunpack.c.h.b16 %v1533
  %v2927 = vunpack.c.l.b16 %v1534
  %v2928 = vunpack.c.h.b16 %v1534
  %v2929 = vunpack.c.l.b16 %v1535
  %v2930 = vunpack.c.h.b16 %v1535
  %v2931 = vunpack.c.l.b16 %v1536
  %v2932 = vunpack.c.h.b16 %v1536
  %v2933 = vunpack.c.l.b16 %v1537
  %v2934 = vunpack.c.h.b16 %v1537
  %v2935 = vunpack.c.l.b16 %v1538
  %v2936 = vunpack.c.h.b16 %v1538
  %v2937 = vunpack.c.l.b16 %v1539
  %v2938 = vunpack.c.h.b16 %v1539
  %v2939 = vunpack.c.l.b16 %v1540
  %v2940 = vunpack.c.h.b16 %v1540
  %v2941 = vunpack.c.l.b16 %v1541
  %v2942 = vunpack.c.h.b16 %v1541
  %v2943 = vunpack.c.l.b16 %v1542
  %v2944 = vunpack.c.h.b16 %v1542
  %v2945 = vunpack.c.l.b16 %v1543
  %v2946 = vunpack.c.h.b16 %v1543
  %v2947 = vunpack.c.l.b16 %v1544
  %v2948 = vunpack.c.h.b16 %v1544
  %v2949 = vunpack.c.l.b16 %v1545
  %v2950 = vunpack.c.h.b16 %v1545
  %v2951 = vunpack.c.l.b16 %v1546
  %v2952 = vunpack.c.h.b16 %v1546
  %v2953 = vunpack.c.l.b16 %v1547
  %v2954 = vunpack.c.h.b16 %v1547
  %v2955 = vunpack.c.l.b16 %v1548
  %v2956 = vunpack.c.h.b16 %v1548
  %v2957 = vunpack.c.l.b16 %v1549
  %v2958 = vunpack.c.h.b16 %v1549
  %v2959 = vunpack.c.l.b16 %v1550
  %v2960 = vunpack.c.h.b16 %v1550
  %v2961 = vunpack.c.l.b16 %v1551
  %v2962 = vunpack.c.h.b16 %v1551
  %v2963 = vunpack.c.l.b16 %v1552
  %v2964 = vunpack.c.h.b16 %v1552
  %v2965 = vunpack.c.l.b16 %v1553
  %v2966 = vunpack.c.h.b16 %v1553
  %v2967 = vunpack.c.l.b16 %v1554
  %v2968 = vunpack.c.h.b16 %v1554
  %v2969 = vunpack.c.l.b16 %v1555
  %v2970 = vunpack.c.h.b16 %v1555
  %v2971 = vunpack.c.l.b16 %v1556
  %v2972 = vunpack.c.h.b16 %v1556
  %v2973 = vunpack.c.l.b16 %v1557
  %v2974 = vunpack.c.h.b16 %v1557
  %v2975 = vunpack.c.l.b16 %v1558
  %v2976 = vunpack.c.h.b16 %v1558
  %v2977 = vunpack.c.l.b16 %v1559
  %v2978 = vunpack.c.h.b16 %v1559
  %v2979 = vunpack.c.l.b16 %v1560
  %v2980 = vunpack.c.h.b16 %v1560
  %v2981 = vunpack.c.l.b16 %v1561
  %v2982 = vunpack.c.h.b16 %v1561
  %v2983 = vunpack.c.l.b16 %v1562
  %v2984 = vunpack.c.h.b16 %v1562
  %v2985 = vunpack.c.l.b16 %v1563
  %v2986 = vunpack.c.h.b16 %v1563
  %v2987 = vunpack.c.l.b16 %v1564
  %v2988 = vunpack.c.h.b16 %v1564
  %v2989 = vunpack.c.l.b16 %v1565
  %v2990 = vunpack.c.h.b16 %v1565
  %v2991 = vunpack.c.l.b16 %v1566
  %v2992 = vunpack.c.h.b16 %v1566
  %v2993 = vunpack.c.l.b16 %v1567
  %v2994 = vunpack.c.h.b16 %v1567
  %v2995 = vunpack.c.l.b16 %v1568
  %v2996 = vunpack.c.h.b16 %v1568
  %v2997 = vunpack.c.l.b16 %v1569
  %v2998 = vunpack.c.h.b16 %v1569
  %v2999 = vunpack.c.l.b16 %v1570
  %v3000 = vunpack.c.h.b16 %v1570
  %v3001 = vunpack.c.l.b16 %v1571
  %v3002 = vunpack.c.h.b16 %v1571
  %v3003 = vunpack.c.l.b16 %v1572
  %v3004 = vunpack.c.h.b16 %v1572
  %v3005 = vunpack.c.l.b16 %v1573
  %v3006 = vunpack.c.h.b16 %v1573
  %v3007 = vunpack.c.l.b16 %v1574
  %v3008 = vunpack.c.h.b16 %v1574
  %v3009 = vunpack.c.l.b16 %v1575
  %v3010 = vunpack.c.h.b16 %v1575
  %v3011 = vunpack.c.l.b16 %v1576
  %v3012 = vunpack.c.h.b16 %v1576
  %v3013 = vunpack.c.l.b16 %v1577
  %v3014 = vunpack.c.h.b16 %v1577
  %v3015 = vunpack.c.l.b16 %v1578
  %v3016 = vunpack.c.h.b16 %v1578
  %v3017 = vunpack.c.l.b16 %v1579
  %v3018 = vunpack.c.h.b16 %v1579
  %v3019 = vunpack.c.l.b16 %v1580
  %v3020 = vunpack.c.h.b16 %v1580
  %v3021 = vunpack.c.l.b16 %v1581
  %v3022 = vunpack.c.h.b16 %v1581
  %v3023 = vunpack.c.l.b16 %v1582
  %v3024 = vunpack.c.h.b16 %v1582
  %v3025 = vunpack.c.l.b16 %v1583
  %v3026 = vunpack.c.h.b16 %v1583
  %v3027 = vunpack.c.l.b16 %v1584
  %v3028 = vunpack.c.h.b16 %v1584
  %v3029 = vunpack.c.l.b16 %v1585
  %v3030 = vunpack.c.h.b16 %v1585
  %v3031 = vunpack.c.l.b16 %v1586
  %v3032 = vunpack.c.h.b16 %v1586
  %v3033 = vunpack.c.l.b16 %v1587
  %v3034 = vunpack.c.h.b16 %v1587
  %v3035 = vunpack.c.l.b16 %v1588
  %v3036 = vunpack.c.h.b16 %v1588
  %v3037 = vunpack.c.l.b16 %v1589
  %v3038 = vunpack.c.h.b16 %v1589
  %v3039 = vunpack.c.l.b16 %v1590
  %v3040 = vunpack.c.h.b16 %v1590
  %v3041 = vunpack.c.l.b16 %v1591
  %v3042 = vunpack.c.h.b16 %v1591
  %v3043 = vunpack.c.l.b16 %v1592
  %v3044 = vunpack.c.h.b16 %v1592
  %v3045 = vunpack.c.l.b16 %v1593
  %v3046 = vunpack.c.h.b16 %v1593
  %v3047 = vunpack.c.l.b16 %v1594
  %v3048 = vunpack.c.h.b16 %v1594
  %v3049 = vunpack.c.l.b16 %v1595
  %v3050 = vunpack.c.h.b16 %v1595
  %v3051 = vunpack.c.l.b16 %v1596
  %v3052 = vunpack.c.h.b16 %v1596
  %v3053 = vunpack.c.l.b16 %v1597
  %v3054 = vunpack.c.h.b16 %v1597
  %v3055 = vunpack.c.l.b16 %v1598
  %v3056 = vunpack.c.h.b16 %v1598
  %v3057 = vunpack.c.l.b16 %v1599
  %v3058 = vunpack.c.h.b16 %v1599
  %v3059 = vunpack.c.l.b16 %v1600
  %v3060 = vunpack.c.h.b16 %v1600
  %v3061 = vunpack.c.l.b16 %v1601
  %v3062 = vunpack.c.h.b16 %v1601
  %v3063 = vunpack.c.l.b16 %v1602
  %v3064 = vunpack.c.h.b16 %v1602
  %v3065 = vunpack.c.l.b16 %v1603
  %v3066 = vunpack.c.h.b16 %v1603
  %v3067 = vunpack.c.l.b16 %v1604
  %v3068 = vunpack.c.h.b16 %v1604
  %v3069 = vunpack.c.l.b16 %v1605
  %v3070 = vunpack.c.h.b16 %v1605
  %v3071 = vunpack.c.l.b16 %v1606
  %v3072 = vunpack.c.h.b16 %v1606
  %v3073 = vunpack.c.l.b16 %v1607
  %v3074 = vunpack.c.h.b16 %v1607
  %v3075 = vunpack.c.l.b16 %v1608
  %v3076 = vunpack.c.h.b16 %v1608
  %v3077 = vunpack.c.l.b16 %v1609
  %v3078 = vunpack.c.h.b16 %v1609
  %v3079 = vunpack.c.l.b16 %v1610
  %v3080 = vunpack.c.h.b16 %v1610
  %v3081 = vunpack.c.l.b16 %v1611
  %v3082 = vunpack.c.h.b16 %v1611
  %v3083 = vunpack.c.l.b16 %v1612
  %v3084 = vunpack.c.h.b16 %v1612
  %v3085 = vunpack.c.l.b16 %v1613
  %v3086 = vunpack.c.h.b16 %v1613
  %v3087 = vunpack.c.l.b16 %v1614
  %v3088 = vunpack.c.h.b16 %v1614
  %v3089 = vunpack.c.l.b16 %v1615
  %v3090 = vunpack.c.h.b16 %v1615
  %v3091 = vunpack.c.l.b16 %v1616
  %v3092 = vunpack.c.h.b16 %v1616
  %v3093 = vunpack.c.l.b16 %v1617
  %v3094 = vunpack.c.h.b16 %v1617
  %v3095 = vunpack.c.l.b16 %v1618
  %v3096 = vunpack.c.h.b16 %v1618
  %v3097 = vunpack.c.l.b16 %v1619
  %v3098 = vunpack.c.h.b16 %v1619
  %v3099 = vunpack.c.l.b16 %v1620
  %v3100 = vunpack.c.h.b16 %v1620
  %v3101 = vunpack.c.l.b16 %v1621
  %v3102 = vunpack.c.h.b16 %v1621
  %v3103 = vunpack.c.l.b16 %v1622
  %v3104 = vunpack.c.h.b16 %v1622
  %v3105 = vunpack.c.l.b16 %v1623
  %v3106 = vunpack.c.h.b16 %v1623
  %v3107 = vunpack.c.l.b16 %v1624
  %v3108 = vunpack.c.h.b16 %v1624
  %v3109 = vunpack.c.l.b16 %v1625
  %v3110 = vunpack.c.h.b16 %v1625
  %v3111 = vunpack.c.l.b16 %v1626
  %v3112 = vunpack.c.h.b16 %v1626
  %v3113 = vunpack.c.l.b16 %v1627
  %v3114 = vunpack.c.h.b16 %v1627
  %v3115 = vunpack.c.l.b16 %v1628
  %v3116 = vunpack.c.h.b16 %v1628
  %v3117 = vunpack.c.l.b16 %v1629
  %v3118 = vunpack.c.h.b16 %v1629
  %v3119 = vunpack.c.l.b16 %v1630
  %v3120 = vunpack.c.h.b16 %v1630
  %v3121 = vunpack.c.l.b16 %v1631
  %v3122 = vunpack.c.h.b16 %v1631
  %v3123 = vunpack.c.l.b16 %v1632
  %v3124 = vunpack.c.h.b16 %v1632
  %v3125 = vunpack.c.l.b16 %v1633
  %v3126 = vunpack.c.h.b16 %v1633
  %v3127 = vunpack.c.l.b16 %v1634
  %v3128 = vunpack.c.h.b16 %v1634
  %v3129 = vunpack.c.l.b16 %v1635
  %v3130 = vunpack.c.h.b16 %v1635
  %v3131 = vunpack.c.l.b16 %v1636
  %v3132 = vunpack.c.h.b16 %v1636
  %v3133 = vunpack.c.l.b16 %v1637
  %v3134 = vunpack.c.h.b16 %v1637
  %v3135 = vunpack.c.l.b16 %v1638
  %v3136 = vunpack.c.h.b16 %v1638
  %v3137 = vunpack.c.l.b16 %v1639
  %v3138 = vunpack.c.h.b16 %v1639
  %v3139 = vunpack.c.l.b16 %v1640
  %v3140 = vunpack.c.h.b16 %v1640
  %v3141 = vunpack.c.l.b16 %v1641
  %v3142 = vunpack.c.h.b16 %v1641
  %v3143 = vunpack.c.l.b16 %v1642
  %v3144 = vunpack.c.h.b16 %v1642
  %v3145 = vunpack.c.l.b16 %v1643
  %v3146 = vunpack.c.h.b16 %v1643
  %v3147 = vunpack.c.l.b16 %v1644
  %v3148 = vunpack.c.h.b16 %v1644
  %v3149 = vunpack.c.l.b16 %v1645
  %v3150 = vunpack.c.h.b16 %v1645
  %v3151 = vunpack.c.l.b16 %v1646
  %v3152 = vunpack.c.h.b16 %v1646
  %v3153 = vunpack.c.l.b16 %v1647
  %v3154 = vunpack.c.h.b16 %v1647
  %v3155 = vunpack.c.l.b16 %v1648
  %v3156 = vunpack.c.h.b16 %v1648
  %v3157 = vunpack.c.l.b16 %v1649
  %v3158 = vunpack.c.h.b16 %v1649
  %v3159 = vunpack.c.l.b16 %v1650
  %v3160 = vunpack.c.h.b16 %v1650
  %v3161 = vunpack.c.l.b16 %v1651
  %v3162 = vunpack.c.h.b16 %v1651
  %v3163 = vunpack.c.l.b16 %v1652
  %v3164 = vunpack.c.h.b16 %v1652
  %v3165 = vunpack.c.l.b16 %v1653
  %v3166 = vunpack.c.h.b16 %v1653
  %v3167 = vunpack.c.l.b16 %v1654
  %v3168 = vunpack.c.h.b16 %v1654
  %v3169 = vunpack.c.l.b16 %v1655
  %v3170 = vunpack.c.h.b16 %v1655
  %v3171 = vunpack.c.l.b16 %v1656
  %v3172 = vunpack.c.h.b16 %v1656
  %v3173 = vunpack.c.l.b16 %v1657
  %v3174 = vunpack.c.h.b16 %v1657
  %v3175 = vunpack.c.l.b16 %v1658
  %v3176 = vunpack.c.h.b16 %v1658
  %v3177 = vunpack.c.l.b16 %v1659
  %v3178 = vunpack.c.h.b16 %v1659
  %v3179 = vunpack.c.l.b16 %v1660
  %v3180 = vunpack.c.h.b16 %v1660
  %v3181 = vunpack.c.l.b16 %v1661
  %v3182 = vunpack.c.h.b16 %v1661
  %v3183 = vunpack.c.l.b16 %v1662
  %v3184 = vunpack.c.h.b16 %v1662
  %v3185 = vunpack.c.l.b16 %v1663
  %v3186 = vunpack.c.h.b16 %v1663
  %v3187 = vunpack.c.l.b16 %v1664
  %v3188 = vunpack.c.h.b16 %v1664
  %v3189 = vunpack.c.l.b16 %v1665
  %v3190 = vunpack.c.h.b16 %v1665
  %v3191 = vunpack.c.l.b16 %v1666
  %v3192 = vunpack.c.h.b16 %v1666
  %v3193 = vunpack.c.l.b16 %v1667
  %v3194 = vunpack.c.h.b16 %v1667
  %v3195 = vunpack.c.l.b16 %v1668
  %v3196 = vunpack.c.h.b16 %v1668
  %v3197 = vunpack.c.l.b16 %v1669
  %v3198 = vunpack.c.h.b16 %v1669
  %v3199 = vunpack.c.l.b16 %v1670
  %v3200 = vunpack.c.h.b16 %v1670
  %v3201 = vunpack.c.l.b16 %v1671
  %v3202 = vunpack.c.h.b16 %v1671
  %v3203 = vunpack.c.l.b16 %v1672
  %v3204 = vunpack.c.h.b16 %v1672
  %v3205 = vunpack.c.l.b16 %v1673
  %v3206 = vunpack.c.h.b16 %v1673
  %v3207 = vunpack.c.l.b16 %v1674
  %v3208 = vunpack.c.h.b16 %v1674
  %v3209 = vunpack.c.l.b16 %v1675
  %v3210 = vunpack.c.h.b16 %v1675
  %v3211 = vunpack.c.l.b16 %v1676
  %v3212 = vunpack.c.h.b16 %v1676
  %v3213 = vunpack.c.l.b16 %v1677
  %v3214 = vunpack.c.h.b16 %v1677
  %v3215 = vunpack.c.l.b16 %v1678
  %v3216 = vunpack.c.h.b16 %v1678
  %v3217 = vunpack.c.l.b16 %v1679
  %v3218 = vunpack.c.h.b16 %v1679
  %v3219 = vunpack.c.l.b16 %v1680
  %v3220 = vunpack.c.h.b16 %v1680
  %v3221 = vunpack.c.l.b16 %v1681
  %v3222 = vunpack.c.h.b16 %v1681
  %v3223 = vunpack.c.l.b16 %v1682
  %v3224 = vunpack.c.h.b16 %v1682
  %v3225 = vunpack.c.l.b16 %v1683
  %v3226 = vunpack.c.h.b16 %v1683
  %v3227 = vunpack.c.l.b16 %v1684
  %v3228 = vunpack.c.h.b16 %v1684
  %v3229 = vunpack.c.l.b16 %v1685
  %v3230 = vunpack.c.h.b16 %v1685
  %v3231 = vunpack.c.l.b16 %v1686
  %v3232 = vunpack.c.h.b16 %v1686
  %v3233 = vunpack.c.l.b16 %v1687
  %v3234 = vunpack.c.h.b16 %v1687
  %v3235 = vunpack.c.l.b16 %v1688
  %v3236 = vunpack.c.h.b16 %v1688
  %v3237 = vpack.c.b16 %v2245, %v2229
  %v3238 = vpack.c.b16 %v2246, %v2230
  %v3239 = vpack.c.b16 %v2247, %v2231
  %v3240 = vpack.c.b16 %v2248, %v2232
  %v3241 = vpack.c.b16 %v2249, %v2233
  %v3242 = vpack.c.b16 %v2250, %v2234
  %v3243 = vpack.c.b16 %v2251, %v2235
  %v3244 = vpack.c.b16 %v2252, %v2236
  %v3245 = vpack.c.b16 %v2253, %v2237
  %v3246 = vpack.c.b16 %v2254, %v2238
  %v3247 = vpack.c.b16 %v2255, %v2239
  %v3248 = vpack.c.b16 %v2256, %v2240
  %v3249 = vpack.c.b16 %v2257, %v2241
  %v3250 = vpack.c.b16 %v2258, %v2242
  %v3251 = vpack.c.b16 %v2259, %v2243
  %v3252 = vpack.c.b16 %v2260, %v2244
  %v3253 = vpack.c.b16 %v2277, %v2261
  %v3254 = vpack.c.b16 %v2278, %v2262
  %v3255 = vpack.c.b16 %v2279, %v2263
  %v3256 = vpack.c.b16 %v2280, %v2264
  %v3257 = vpack.c.b16 %v2281, %v2265
  %v3258 = vpack.c.b16 %v2282, %v2266
  %v3259 = vpack.c.b16 %v2283, %v2267
  %v3260 = vpack.c.b16 %v2284, %v2268
  %v3261 = vpack.c.b16 %v2285, %v2269
  %v3262 = vpack.c.b16 %v2286, %v2270
  %v3263 = vpack.c.b16 %v2287, %v2271
  %v3264 = vpack.c.b16 %v2288, %v2272
  %v3265 = vpack.c.b16 %v2289, %v2273
  %v3266 = vpack.c.b16 %v2290, %v2274
  %v3267 = vpack.c.b16 %v2291, %v2275
  %v3268 = vpack.c.b16 %v2292, %v2276
  %v3269 = vpack.c.b16 %v2309, %v2293
  %v3270 = vpack.c.b16 %v2310, %v2294
  %v3271 = vpack.c.b16 %v2311, %v2295
  %v3272 = vpack.c.b16 %v2312, %v2296
  %v3273 = vpack.c.b16 %v2313, %v2297
  %v3274 = vpack.c.b16 %v2314, %v2298
  %v3275 = vpack.c.b16 %v2315, %v2299
  %v3276 = vpack.c.b16 %v2316, %v2300
  %v3277 = vpack.c.b16 %v2317, %v2301
  %v3278 = vpack.c.b16 %v2318, %v2302
  %v3279 = vpack.c.b16 %v2319, %v2303
  %v3280 = vpack.c.b16 %v2320, %v2304
  %v3281 = vpack.c.b16 %v2321, %v2305
  %v3282 = vpack.c.b16 %v2322, %v2306
  %v3283 = vpack.c.b16 %v2323, %v2307
  %v3284 = vpack.c.b16 %v2324, %v2308
  %v3285 = vpack.c.b16 %v2341, %v2325
  %v3286 = vpack.c.b16 %v2342, %v2326
  %v3287 = vpack.c.b16 %v2343, %v2327
  %v3288 = vpack.c.b16 %v2344, %v2328
  %v3289 = vpack.c.b16 %v2345, %v2329
  %v3290 = vpack.c.b16 %v2346, %v2330
  %v3291 = vpack.c.b16 %v2347, %v2331
  %v3292 = vpack.c.b16 %v2348, %v2332
  %v3293 = vpack.c.b16 %v2349, %v2333
  %v3294 = vpack.c.b16 %v2350, %v2334
  %v3295 = vpack.c.b16 %v2351, %v2335
  %v3296 = vpack.c.b16 %v2352, %v2336
  %v3297 = vpack.c.b16 %v2353, %v2337
  %v3298 = vpack.c.b16 %v2354, %v2338
  %v3299 = vpack.c.b16 %v2355, %v2339
  %v3300 = vpack.c.b16 %v2356, %v2340
  %v3301 = vpack.c.b16 %v2373, %v2357
  %v3302 = vpack.c.b16 %v2374, %v2358
  %v3303 = vpack.c.b16 %v2375, %v2359
  %v3304 = vpack.c.b16 %v2376, %v2360
  %v3305 = vpack.c.b16 %v2377, %v2361
  %v3306 = vpack.c.b16 %v2378, %v2362
  %v3307 = vpack.c.b16 %v2379, %v2363
  %v3308 = vpack.c.b16 %v2380, %v2364
  %v3309 = vpack.c.b16 %v2381, %v2365
  %v3310 = vpack.c.b16 %v2382, %v2366
  %v3311 = vpack.c.b16 %v2383, %v2367
  %v3312 = vpack.c.b16 %v2384, %v2368
  %v3313 = vpack.c.b16 %v2385, %v2369
  %v3314 = vpack.c.b16 %v2386, %v2370
  %v3315 = vpack.c.b16 %v2387, %v2371
  %v3316 = vpack.c.b16 %v2388, %v2372
  %v3317 = vpack.c.b16 %v2405, %v2389
  %v3318 = vpack.c.b16 %v2406, %v2390
  %v3319 = vpack.c.b16 %v2407, %v2391
  %v3320 = vpack.c.b16 %v2408, %v2392
  %v3321 = vpack.c.b16 %v2409, %v2393
  %v3322 = vpack.c.b16 %v2410, %v2394
  %v3323 = vpack.c.b16 %v2411, %v2395
  %v3324 = vpack.c.b16 %v2412, %v2396
  %v3325 = vpack.c.b16 %v2413, %v2397
  %v3326 = vpack.c.b16 %v2414, %v2398
  %v3327 = vpack.c.b16 %v2415, %v2399
  %v3328 = vpack.c.b16 %v2416, %v2400
  %v3329 = vpack.c.b16 %v2417, %v2401
  %v3330 = vpack.c.b16 %v2418, %v2402
  %v3331 = vpack.c.b16 %v2419, %v2403
  %v3332 = vpack.c.b16 %v2420, %v2404
  %v3333 = vpack.c.b16 %v2437, %v2421
  %v3334 = vpack.c.b16 %v2438, %v2422
  %v3335 = vpack.c.b16 %v2439, %v2423
  %v3336 = vpack.c.b16 %v2440, %v2424
  %v3337 = vpack.c.b16 %v2441, %v2425
  %v3338 = vpack.c.b16 %v2442, %v2426
  %v3339 = vpack.c.b16 %v2443, %v2427
  %v3340 = vpack.c.b16 %v2444, %v2428
  %v3341 = vpack.c.b16 %v2445, %v2429
  %v3342 = vpack.c.b16 %v2446, %v2430
  %v3343 = vpack.c.b16 %v2447, %v2431
  %v3344 = vpack.c.b16 %v2448, %v2432
  %v3345 = vpack.c.b16 %v2449, %v2433
  %v3346 = vpack.c.b16 %v2450, %v2434
  %v3347 = vpack.c.b16 %v2451, %v2435
  %v3348 = vpack.c.b16 %v2452, %v2436
  %v3349 = vpack.c.b16 %v2469, %v2453
  %v3350 = vpack.c.b16 %v2470, %v2454
  %v3351 = vpack.c.b16 %v2471, %v2455
  %v3352 = vpack.c.b16 %v2472, %v2456
  %v3353 = vpack.c.b16 %v2473, %v2457
  %v3354 = vpack.c.b16 %v2474, %v2458
  %v3355 = vpack.c.b16 %v2475, %v2459
  %v3356 = vpack.c.b16 %v2476, %v2460
  %v3357 = vpack.c.b16 %v2477, %v2461
  %v3358 = vpack.c.b16 %v2478, %v2462
  %v3359 = vpack.c.b16 %v2479, %v2463
  %v3360 = vpack.c.b16 %v2480, %v2464
  %v3361 = vpack.c.b16 %v2481, %v2465
  %v3362 = vpack.c.b16 %v2482, %v2466
  %v3363 = vpack.c.b16 %v2483, %v2467
  %v3364 = vpack.c.b16 %v2484, %v2468
  %v3365 = vpack.c.b16 %v2501, %v2485
  %v3366 = vpack.c.b16 %v2502, %v2486
  %v3367 = vpack.c.b16 %v2503, %v2487
  %v3368 = vpack.c.b16 %v2504, %v2488
  %v3369 = vpack.c.b16 %v2505, %v2489
  %v3370 = vpack.c.b16 %v2506, %v2490
  %v3371 = vpack.c.b16 %v2507, %v2491
  %v3372 = vpack.c.b16 %v2508, %v2492
  %v3373 = vpack.c.b16 %v2509, %v2493
  %v3374 = vpack.c.b16 %v2510, %v2494
  %v3375 = vpack.c.b16 %v2511, %v2495
  %v3376 = vpack.c.b16 %v2512, %v2496
  %v3377 = vpack.c.b16 %v2513, %v2497
  %v3378 = vpack.c.b16 %v2514, %v2498
  %v3379 = vpack.c.b16 %v2515, %v2499
  %v3380 = vpack.c.b16 %v2516, %v2500
  %v3381 = vpack.c.b16 %v2533, %v2517
  %v3382 = vpack.c.b16 %v2534, %v2518
  %v3383 = vpack.c.b16 %v2535, %v2519
  %v3384 = vpack.c.b16 %v2536, %v2520
  %v3385 = vpack.c.b16 %v2537, %v2521
  %v3386 = vpack.c.b16 %v2538, %v2522
  %v3387 = vpack.c.b16 %v2539, %v2523
  %v3388 = vpack.c.b16 %v2540, %v2524
  %v3389 = vpack.c.b16 %v2541, %v2525
  %v3390 = vpack.c.b16 %v2542, %v2526
  %v3391 = vpack.c.b16 %v2543, %v2527
  %v3392 = vpack.c.b16 %v2544, %v2528
  %v3393 = vpack.c.b16 %v2545, %v2529
  %v3394 = vpack.c.b16 %v2546, %v2530
  %v3395 = vpack.c.b16 %v2547, %v2531
  %v3396 = vpack.c.b16 %v2548, %v2532
  %v3397 = vpack.c.b16 %v2565, %v2549
  %v3398 = vpack.c.b16 %v2566, %v2550
  %v3399 = vpack.c.b16 %v2567, %v2551
  %v3400 = vpack.c.b16 %v2568, %v2552
  %v3401 = vpack.c.b16 %v2569, %v2553
  %v3402 = vpack.c.b16 %v2570, %v2554
  %v3403 = vpack.c.b16 %v2571, %v2555
  %v3404 = vpack.c.b16 %v2572, %v2556
  %v3405 = vpack.c.b16 %v2573, %v2557
  %v3406 = vpack.c.b16 %v2574, %v2558
  %v3407 = vpack.c.b16 %v2575, %v2559
  %v3408 = vpack.c.b16 %v2576, %v2560
  %v3409 = vpack.c.b16 %v2577, %v2561
  %v3410 = vpack.c.b16 %v2578, %v2562
  %v3411 = vpack.c.b16 %v2579, %v2563
  %v3412 = vpack.c.b16 %v2580, %v2564
  %v3413 = vpack.c.b16 %v2597, %v2581
  %v3414 = vpack.c.b16 %v2598, %v2582
  %v3415 = vpack.c.b16 %v2599, %v2583
  %v3416 = vpack.c.b16 %v2600, %v2584
  %v3417 = vpack.c.b16 %v2601, %v2585
  %v3418 = vpack.c.b16 %v2602, %v2586
  %v3419 = vpack.c.b16 %v2603, %v2587
  %v3420 = vpack.c.b16 %v2604, %v2588
  %v3421 = vpack.c.b16 %v2605, %v2589
  %v3422 = vpack.c.b16 %v2606, %v2590
  %v3423 = vpack.c.b16 %v2607, %v2591
  %v3424 = vpack.c.b16 %v2608, %v2592
  %v3425 = vpack.c.b16 %v2609, %v2593
  %v3426 = vpack.c.b16 %v2610, %v2594
  %v3427 = vpack.c.b16 %v2611, %v2595
  %v3428 = vpack.c.b16 %v2612, %v2596
  %v3429 = vpack.c.b16 %v2629, %v2613
  %v3430 = vpack.c.b16 %v2630, %v2614
  %v3431 = vpack.c.b16 %v2631, %v2615
  %v3432 = vpack.c.b16 %v2632, %v2616
  %v3433 = vpack.c.b16 %v2633, %v2617
  %v3434 = vpack.c.b16 %v2634, %v2618
  %v3435 = vpack.c.b16 %v2635, %v2619
  %v3436 = vpack.c.b16 %v2636, %v2620
  %v3437 = vpack.c.b16 %v2637, %v2621
  %v3438 = vpack.c.b16 %v2638, %v2622
  %v3439 = vpack.c.b16 %v2639, %v2623
  %v3440 = vpack.c.b16 %v2640, %v2624
  %v3441 = vpack.c.b16 %v2641, %v2625
  %v3442 = vpack.c.b16 %v2642, %v2626
  %v3443 = vpack.c.b16 %v2643, %v2627
  %v3444 = vpack.c.b16 %v2644, %v2628
  %v3445 = vpack.c.b16 %v2661, %v2645
  %v3446 = vpack.c.b16 %v2662, %v2646
  %v3447 = vpack.c.b16 %v2663, %v2647
  %v3448 = vpack.c.b16 %v2664, %v2648
  %v3449 = vpack.c.b16 %v2665, %v2649
  %v3450 = vpack.c.b16 %v2666, %v2650
  %v3451 = vpack.c.b16 %v2667, %v2651
  %v3452 = vpack.c.b16 %v2668, %v2652
  %v3453 = vpack.c.b16 %v2669, %v2653
  %v3454 = vpack.c.b16 %v2670, %v2654
  %v3455 = vpack.c.b16 %v2671, %v2655
  %v3456 = vpack.c.b16 %v2672, %v2656
  %v3457 = vpack.c.b16 %v2673, %v2657
  %v3458 = vpack.c.b16 %v2674, %v2658
  %v3459 = vpack.c.b16 %v2675, %v2659
  %v3460 = vpack.c.b16 %v2676, %v2660
  %v3461 = vpack.c.b16 %v2693, %v2677
  %v3462 = vpack.c.b16 %v2694, %v2678
  %v3463 = vpack.c.b16 %v2695, %v2679
  %v3464 = vpack.c.b16 %v2696, %v2680
  %v3465 = vpack.c.b16 %v2697, %v2681
  %v3466 = vpack.c.b16 %v2698, %v2682
  %v3467 = vpack.c.b16 %v2699, %v2683
  %v3468 = vpack.c.b16 %v2700, %v2684
  %v3469 = vpack.c.b16 %v2701, %v2685
  %v3470 = vpack.c.b16 %v2702, %v2686
  %v3471 = vpack.c.b16 %v2703, %v2687
  %v3472 = vpack.c.b16 %v2704, %v2688
  %v3473 = vpack.c.b16 %v2705, %v2689
  %v3474 = vpack.c.b16 %v2706, %v2690
  %v3475 = vpack.c.b16 %v2707, %v2691
  %v3476 = vpack.c.b16 %v2708, %v2692
  %v3477 = vpack.c.b16 %v2725, %v2709
  %v3478 = vpack.c.b16 %v2726, %v2710
  %v3479 = vpack.c.b16 %v2727, %v2711
  %v3480 = vpack.c.b16 %v2728, %v2712
  %v3481 = vpack.c.b16 %v2729, %v2713
  %v3482 = vpack.c.b16 %v2730, %v2714
  %v3483 = vpack.c.b16 %v2731, %v2715
  %v3484 = vpack.c.b16 %v2732, %v2716
  %v3485 = vpack.c.b16 %v2733, %v2717
  %v3486 = vpack.c.b16 %v2734, %v2718
  %v3487 = vpack.c.b16 %v2735, %v2719
  %v3488 = vpack.c.b16 %v2736, %v2720
  %v3489 = vpack.c.b16 %v2737, %v2721
  %v3490 = vpack.c.b16 %v2738, %v2722
  %v3491 = vpack.c.b16 %v2739, %v2723
  %v3492 = vpack.c.b16 %v2740, %v2724
  %v3493 = vpack.c.b16 %v2757, %v2741
  %v3494 = vpack.c.b16 %v2758, %v2742
  %v3495 = vpack.c.b16 %v2759, %v2743
  %v3496 = vpack.c.b16 %v2760, %v2744
  %v3497 = vpack.c.b16 %v2761, %v2745
  %v3498 = vpack.c.b16 %v2762, %v2746
  %v3499 = vpack.c.b16 %v2763, %v2747
  %v3500 = vpack.c.b16 %v2764, %v2748
  %v3501 = vpack.c.b16 %v2765, %v2749
  %v3502 = vpack.c.b16 %v2766, %v2750
  %v3503 = vpack.c.b16 %v2767, %v2751
  %v3504 = vpack.c.b16 %v2768, %v2752
  %v3505 = vpack.c.b16 %v2769, %v2753
  %v3506 = vpack.c.b16 %v2770, %v2754
  %v3507 = vpack.c.b16 %v2771, %v2755
  %v3508 = vpack.c.b16 %v2772, %v2756
  %v3509 = vpack.c.b16 %v2789, %v2773
  %v3510 = vpack.c.b16 %v2790, %v2774
  %v3511 = vpack.c.b16 %v2791, %v2775
  %v3512 = vpack.c.b16 %v2792, %v2776
  %v3513 = vpack.c.b16 %v2793, %v2777
  %v3514 = vpack.c.b16 %v2794, %v2778
  %v3515 = vpack.c.b16 %v2795, %v2779
  %v3516 = vpack.c.b16 %v2796, %v2780
  %v3517 = vpack.c.b16 %v2797, %v2781
  %v3518 = vpack.c.b16 %v2798, %v2782
  %v3519 = vpack.c.b16 %v2799, %v2783
  %v3520 = vpack.c.b16 %v2800, %v2784
  %v3521 = vpack.c.b16 %v2801, %v2785
  %v3522 = vpack.c.b16 %v2802, %v2786
  %v3523 = vpack.c.b16 %v2803, %v2787
  %v3524 = vpack.c.b16 %v2804, %v2788
  %v3525 = vpack.c.b16 %v2821, %v2805
  %v3526 = vpack.c.b16 %v2822, %v2806
  %v3527 = vpack.c.b16 %v2823, %v2807
  %v3528 = vpack.c.b16 %v2824, %v2808
  %v3529 = vpack.c.b16 %v2825, %v2809
  %v3530 = vpack.c.b16 %v2826, %v2810
  %v3531 = vpack.c.b16 %v2827, %v2811
  %v3532 = vpack.c.b16 %v2828, %v2812
  %v3533 = vpack.c.b16 %v2829, %v2813
  %v3534 = vpack.c.b16 %v2830, %v2814
  %v3535 = vpack.c.b16 %v2831, %v2815
  %v3536 = vpack.c.b16 %v2832, %v2816
  %v3537 = vpack.c.b16 %v2833, %v2817
  %v3538 = vpack.c.b16 %v2834, %v2818
  %v3539 = vpack.c.b16 %v2835, %v2819
  %v3540 = vpack.c.b16 %v2836, %v2820
  %v3541 = vpack.c.b16 %v2853, %v2837
  %v3542 = vpack.c.b16 %v2854, %v2838
  %v3543 = vpack.c.b16 %v2855, %v2839
  %v3544 = vpack.c.b16 %v2856, %v2840
  %v3545 = vpack.c.b16 %v2857, %v2841
  %v3546 = vpack.c.b16 %v2858, %v2842
  %v3547 = vpack.c.b16 %v2859, %v2843
  %v3548 = vpack.c.b16 %v2860, %v2844
  %v3549 = vpack.c.b16 %v2861, %v2845
  %v3550 = vpack.c.b16 %v2862, %v2846
  %v3551 = vpack.c.b16 %v2863, %v2847
  %v3552 = vpack.c.b16 %v2864, %v2848
  %v3553 = vpack.c.b16 %v2865, %v2849
  %v3554 = vpack.c.b16 %v2866, %v2850
  %v3555 = vpack.c.b16 %v2867, %v2851
  %v3556 = vpack.c.b16 %v2868, %v2852
  %v3557 = vpack.c.b16 %v2885, %v2869
  %v3558 = vpack.c.b16 %v2886, %v2870
  %v3559 = vpack.c.b16 %v2887, %v2871
  %v3560 = vpack.c.b16 %v2888, %v2872
  %v3561 = vpack.c.b16 %v2889, %v2873
  %v3562 = vpack.c.b16 %v2890, %v2874
  %v3563 = vpack.c.b16 %v2891, %v2875
  %v3564 = vpack.c.b16 %v2892, %v2876
  %v3565 = vpack.c.b16 %v2893, %v2877
  %v3566 = vpack.c.b16 %v2894, %v2878
  %v3567 = vpack.c.b16 %v2895, %v2879
  %v3568 = vpack.c.b16 %v2896, %v2880
  %v3569 = vpack.c.b16 %v2897, %v2881
  %v3570 = vpack.c.b16 %v2898, %v2882
  %v3571 = vpack.c.b16 %v2899, %v2883
  %v3572 = vpack.c.b16 %v2900, %v2884
  %v3573 = vpack.c.b16 %v2917, %v2901
  %v3574 = vpack.c.b16 %v2918, %v2902
  %v3575 = vpack.c.b16 %v2919, %v2903
  %v3576 = vpack.c.b16 %v2920, %v2904
  %v3577 = vpack.c.b16 %v2921, %v2905
  %v3578 = vpack.c.b16 %v2922, %v2906
  %v3579 = vpack.c.b16 %v2923, %v2907
  %v3580 = vpack.c.b16 %v2924, %v2908
  %v3581 = vpack.c.b16 %v2925, %v2909
  %v3582 = vpack.c.b16 %v2926, %v2910
  %v3583 = vpack.c.b16 %v2927, %v2911
  %v3584 = vpack.c.b16 %v2928, %v2912
  %v3585 = vpack.c.b16 %v2929, %v2913
  %v3586 = vpack.c.b16 %v2930, %v2914
  %v3587 = vpack.c.b16 %v2931, %v2915
  %v3588 = vpack.c.b16 %v2932, %v2916
  %v3589 = vpack.c.b16 %v2949, %v2933
  %v3590 = vpack.c.b16 %v2950, %v2934
  %v3591 = vpack.c.b16 %v2951, %v2935
  %v3592 = vpack.c.b16 %v2952, %v2936
  %v3593 = vpack.c.b16 %v2953, %v2937
  %v3594 = vpack.c.b16 %v2954, %v2938
  %v3595 = vpack.c.b16 %v2955, %v2939
  %v3596 = vpack.c.b16 %v2956, %v2940
  %v3597 = vpack.c.b16 %v2957, %v2941
  %v3598 = vpack.c.b16 %v2958, %v2942
  %v3599 = vpack.c.b16 %v2959, %v2943
  %v3600 = vpack.c.b16 %v2960, %v2944
  %v3601 = vpack.c.b16 %v2961, %v2945
  %v3602 = vpack.c.b16 %v2962, %v2946
  %v3603 = vpack.c.b16 %v2963, %v2947
  %v3604 = vpack.c.b16 %v2964, %v2948
  %v3605 = vpack.c.b16 %v2981, %v2965
  %v3606 = vpack.c.b16 %v2982, %v2966
  %v3607 = vpack.c.b16 %v2983, %v2967
  %v3608 = vpack.c.b16 %v2984, %v2968
  %v3609 = vpack.c.b16 %v2985, %v2969
  %v3610 = vpack.c.b16 %v2986, %v2970
  %v3611 = vpack.c.b16 %v2987, %v2971
  %v3612 = vpack.c.b16 %v2988, %v2972
  %v3613 = vpack.c.b16 %v2989, %v2973
  %v3614 = vpack.c.b16 %v2990, %v2974
  %v3615 = vpack.c.b16 %v2991, %v2975
  %v3616 = vpack.c.b16 %v2992, %v2976
  %v3617 = vpack.c.b16 %v2993, %v2977
  %v3618 = vpack.c.b16 %v2994, %v2978
  %v3619 = vpack.c.b16 %v2995, %v2979
  %v3620 = vpack.c.b16 %v2996, %v2980
  %v3621 = vpack.c.b16 %v3013, %v2997
  %v3622 = vpack.c.b16 %v3014, %v2998
  %v3623 = vpack.c.b16 %v3015, %v2999
  %v3624 = vpack.c.b16 %v3016, %v3000
  %v3625 = vpack.c.b16 %v3017, %v3001
  %v3626 = vpack.c.b16 %v3018, %v3002
  %v3627 = vpack.c.b16 %v3019, %v3003
  %v3628 = vpack.c.b16 %v3020, %v3004
  %v3629 = vpack.c.b16 %v3021, %v3005
  %v3630 = vpack.c.b16 %v3022, %v3006
  %v3631 = vpack.c.b16 %v3023, %v3007
  %v3632 = vpack.c.b16 %v3024, %v3008
  %v3633 = vpack.c.b16 %v3025, %v3009
  %v3634 = vpack.c.b16 %v3026, %v3010
  %v3635 = vpack.c.b16 %v3027, %v3011
  %v3636 = vpack.c.b16 %v3028, %v3012
  %v3637 = vpack.c.b16 %v3045, %v3029
  %v3638 = vpack.c.b16 %v3046, %v3030
  %v3639 = vpack.c.b16 %v3047, %v3031
  %v3640 = vpack.c.b16 %v3048, %v3032
  %v3641 = vpack.c.b16 %v3049, %v3033
  %v3642 = vpack.c.b16 %v3050, %v3034
  %v3643 = vpack.c.b16 %v3051, %v3035
  %v3644 = vpack.c.b16 %v3052, %v3036
  %v3645 = vpack.c.b16 %v3053, %v3037
  %v3646 = vpack.c.b16 %v3054, %v3038
  %v3647 = vpack.c.b16 %v3055, %v3039
  %v3648 = vpack.c.b16 %v3056, %v3040
  %v3649 = vpack.c.b16 %v3057, %v3041
  %v3650 = vpack.c.b16 %v3058, %v3042
  %v3651 = vpack.c.b16 %v3059, %v3043
  %v3652 = vpack.c.b16 %v3060, %v3044
  %v3653 = vpack.c.b16 %v3077, %v3061
  %v3654 = vpack.c.b16 %v3078, %v3062
  %v3655 = vpack.c.b16 %v3079, %v3063
  %v3656 = vpack.c.b16 %v3080, %v3064
  %v3657 = vpack.c.b16 %v3081, %v3065
  %v3658 = vpack.c.b16 %v3082, %v3066
  %v3659 = vpack.c.b16 %v3083, %v3067
  %v3660 = vpack.c.b16 %v3084, %v3068
  %v3661 = vpack.c.b16 %v3085, %v3069
  %v3662 = vpack.c.b16 %v3086, %v3070
  %v3663 = vpack.c.b16 %v3087, %v3071
  %v3664 = vpack.c.b16 %v3088, %v3072
  %v3665 = vpack.c.b16 %v3089, %v3073
  %v3666 = vpack.c.b16 %v3090, %v3074
  %v3667 = vpack.c.b16 %v3091, %v3075
  %v3668 = vpack.c.b16 %v3092, %v3076
  %v3669 = vpack.c.b16 %v3109, %v3093
  %v3670 = vpack.c.b16 %v3110, %v3094
  %v3671 = vpack.c.b16 %v3111, %v3095
  %v3672 = vpack.c.b16 %v3112, %v3096
  %v3673 = vpack.c.b16 %v3113, %v3097
  %v3674 = vpack.c.b16 %v3114, %v3098
  %v3675 = vpack.c.b16 %v3115, %v3099
  %v3676 = vpack.c.b16 %v3116, %v3100
  %v3677 = vpack.c.b16 %v3117, %v3101
  %v3678 = vpack.c.b16 %v3118, %v3102
  %v3679 = vpack.c.b16 %v3119, %v3103
  %v3680 = vpack.c.b16 %v3120, %v3104
  %v3681 = vpack.c.b16 %v3121, %v3105
  %v3682 = vpack.c.b16 %v3122, %v3106
  %v3683 = vpack.c.b16 %v3123, %v3107
  %v3684 = vpack.c.b16 %v3124, %v3108
  %v3685 = vpack.c.b16 %v3141, %v3125
  %v3686 = vpack.c.b16 %v3142, %v3126
  %v3687 = vpack.c.b16 %v3143, %v3127
  %v3688 = vpack.c.b16 %v3144, %v3128
  %v3689 = vpack.c.b16 %v3145, %v3129
  %v3690 = vpack.c.b16 %v3146, %v3130
  %v3691 = vpack.c.b16 %v3147, %v3131
  %v3692 = vpack.c.b16 %v3148, %v3132
  %v3693 = vpack.c.b16 %v3149, %v3133
  %v3694 = vpack.c.b16 %v3150, %v3134
  %v3695 = vpack.c.b16 %v3151, %v3135
  %v3696 = vpack.c.b16 %v3152, %v3136
  %v3697 = vpack.c.b16 %v3153, %v3137
  %v3698 = vpack.c.b16 %v3154, %v3138
  %v3699 = vpack.c.b16 %v3155, %v3139
  %v3700 = vpack.c.b16 %v3156, %v3140
  %v3701 = vpack.c.b16 %v3173, %v3157
  %v3702 = vpack.c.b16 %v3174, %v3158
  %v3703 = vpack.c.b16 %v3175, %v3159
  %v3704 = vpack.c.b16 %v3176, %v3160
  %v3705 = vpack.c.b16 %v3177, %v3161
  %v3706 = vpack.c.b16 %v3178, %v3162
  %v3707 = vpack.c.b16 %v3179, %v3163
  %v3708 = vpack.c.b16 %v3180, %v3164
  %v3709 = vpack.c.b16 %v3181, %v3165
  %v3710 = vpack.c.b16 %v3182, %v3166
  %v3711 = vpack.c.b16 %v3183, %v3167
  %v3712 = vpack.c.b16 %v3184, %v3168
  %v3713 = vpack.c.b16 %v3185, %v3169
  %v3714 = vpack.c.b16 %v3186, %v3170
  %v3715 = vpack.c.b16 %v3187, %v3171
  %v3716 = vpack.c.b16 %v3188, %v3172
  %v3717 = vpack.c.b16 %v3205, %v3189
  %v3718 = vpack.c.b16 %v3206, %v3190
  %v3719 = vpack.c.b16 %v3207, %v3191
  %v3720 = vpack.c.b16 %v3208, %v3192
  %v3721 = vpack.c.b16 %v3209, %v3193
  %v3722 = vpack.c.b16 %v3210, %v3194
  %v3723 = vpack.c.b16 %v3211, %v3195
  %v3724 = vpack.c.b16 %v3212, %v3196
  %v3725 = vpack.c.b16 %v3213, %v3197
  %v3726 = vpack.c.b16 %v3214, %v3198
  %v3727 = vpack.c.b16 %v3215, %v3199
  %v3728 = vpack.c.b16 %v3216, %v3200
  %v3729 = vpack.c.b16 %v3217, %v3201
  %v3730 = vpack.c.b16 %v3218, %v3202
  %v3731 = vpack.c.b16 %v3219, %v3203
  %v3732 = vpack.c.b16 %v3220, %v3204
  %v3733 = vpack.c.b16 %v3221, %v3221
  %v3734 = vpack.c.b16 %v3222, %v3222
  %v3735 = vpack.c.b16 %v3223, %v3223
  %v3736 = vpack.c.b16 %v3224, %v3224
  %v3737 = vpack.c.b16 %v3225, %v3225
  %v3738 = vpack.c.b16 %v3226, %v3226
  %v3739 = vpack.c.b16 %v3227, %v3227
  %v3740 = vpack.c.b16 %v3228, %v3228
  %v3741 = vpack.c.b16 %v3229, %v3229
  %v3742 = vpack.c.b16 %v3230, %v3230
  %v3743 = vpack.c.b16 %v3231, %v3231
  %v3744 = vpack.c.b16 %v3232, %v3232
  %v3745 = vpack.c.b16 %v3233, %v3233
  %v3746 = vpack.c.b16 %v3234, %v3234
  %v3747 = vpack.c.b16 %v3235, %v3235
  %v3748 = vpack.c.b16 %v3236, %v3236
  %v4246 = vsel %vm932, %v1184, 0
  %v4249 = vsel %vm936, %v3733, 0
  %v4252 = vsel %vm936, %v3734, 0
  %v4255 = vsel %vm936, %v3735, 0
  %v4258 = vsel %vm936, %v3736, 0
  %v4261 = vsel %vm936, %v3737, 0
  %v4264 = vsel %vm936, %v3738, 0
  %v4267 = vsel %vm936, %v3739, 0
  %v4270 = vsel %vm936, %v3740, 0
  %v4273 = vsel %vm936, %v3741, 0
  %v4276 = vsel %vm936, %v3742, 0
  %v4279 = vsel %vm936, %v3743, 0
  %v4282 = vsel %vm936, %v3744, 0
  %v4285 = vsel %vm936, %v3745, 0
  %v4288 = vsel %vm936, %v3746, 0
  %v4291 = vsel %vm936, %v3747, 0
  %v4294 = vsel %vm936, %v3748, 0
  %4296 = vmatpush.bf16.msra.mxu0 %v3349
  %4297 = vmatpush.bf16.msra.mxu0 %v3333
  %4298 = vmatpush.bf16.msra.mxu0 %v3317
  %4299 = vmatpush.bf16.msra.mxu0 %v3301
  %4300 = vmatpush.bf16.msra.mxu0 %v3285
  %4301 = vmatpush.bf16.msra.mxu0 %v3269
  %4302 = vmatpush.bf16.msra.mxu0 %v3253
  %4303 = vmatpush.bf16.msra.mxu0 %v3237
  %4304 = vmatmul.bf16.gmra.mxu0 %v1181
  %v4305 = vpop.f32.mrf.mxu0
  %v4306 = vadd.f32 %v1693, %v4305
  %v4307 = vpop.f32.mrf.mxu0
  %v4308 = vadd.f32 %v1693, %v4307
  %4309 = vdwg.mxu0
  %4310 = vmatpush.bf16.msra.mxu0 %v3477
  %4311 = vmatpush.bf16.msra.mxu0 %v3461
  %4312 = vmatpush.bf16.msra.mxu0 %v3445
  %4313 = vmatpush.bf16.msra.mxu0 %v3429
  %4314 = vmatpush.bf16.msra.mxu0 %v3413
  %4315 = vmatpush.bf16.msra.mxu0 %v3397
  %4316 = vmatpush.bf16.msra.mxu0 %v3381
  %4317 = vmatpush.bf16.msra.mxu0 %v3365
  %4318 = vmatmul.bf16.gmra.mxu0 %v1182
  %v4319 = vpop.f32.mrf.mxu0
  %v4320 = vadd.f32 %v4306, %v4319
  %v4321 = vpop.f32.mrf.mxu0
  %v4322 = vadd.f32 %v4308, %v4321
  %4323 = vdwg.mxu0
  %4324 = vmatpush.bf16.msra.mxu0 %v3605
  %4325 = vmatpush.bf16.msra.mxu0 %v3589
  %4326 = vmatpush.bf16.msra.mxu0 %v3573
  %4327 = vmatpush.bf16.msra.mxu0 %v3557
  %4328 = vmatpush.bf16.msra.mxu0 %v3541
  %4329 = vmatpush.bf16.msra.mxu0 %v3525
  %4330 = vmatpush.bf16.msra.mxu0 %v3509
  %4331 = vmatpush.bf16.msra.mxu0 %v3493
  %4332 = vmatmul.bf16.gmra.mxu0 %v1183
  %v4333 = vpop.f32.mrf.mxu0
  %v4334 = vadd.f32 %v4320, %v4333
  %v4335 = vpop.f32.mrf.mxu0
  %v4336 = vadd.f32 %v4322, %v4335
  %4337 = vdwg.mxu0
  %4338 = vmatpush.bf16.msra.mxu0 %v4249
  %4339 = vmatpush.bf16.msra.mxu0 %v3717
  %4340 = vmatpush.bf16.msra.mxu0 %v3701
  %4341 = vmatpush.bf16.msra.mxu0 %v3685
  %4342 = vmatpush.bf16.msra.mxu0 %v3669
  %4343 = vmatpush.bf16.msra.mxu0 %v3653
  %4344 = vmatpush.bf16.msra.mxu0 %v3637
  %4345 = vmatpush.bf16.msra.mxu0 %v3621
  %4346 = vmatmul.bf16.gmra.mxu0 %v4246
  %v4347 = vpop.f32.mrf.mxu0
  %v4348 = vadd.f32 %v4334, %v4347
  %v4349 = vpop.f32.mrf.mxu0
  %v4350 = vadd.f32 %v4336, %v4349
  %4351 = vdwg.mxu0
  %4352 = vmatpush.bf16.msra.mxu0 %v3350
  %4353 = vmatpush.bf16.msra.mxu0 %v3334
  %4354 = vmatpush.bf16.msra.mxu0 %v3318
  %4355 = vmatpush.bf16.msra.mxu0 %v3302
  %4356 = vmatpush.bf16.msra.mxu0 %v3286
  %4357 = vmatpush.bf16.msra.mxu0 %v3270
  %4358 = vmatpush.bf16.msra.mxu0 %v3254
  %4359 = vmatpush.bf16.msra.mxu0 %v3238
  %4360 = vmatmul.bf16.gmra.mxu0 %v1181
  %v4361 = vpop.f32.mrf.mxu0
  %v4362 = vadd.f32 %v1694, %v4361
  %v4363 = vpop.f32.mrf.mxu0
  %v4364 = vadd.f32 %v1694, %v4363
  %4365 = vdwg.mxu0
  %4366 = vmatpush.bf16.msra.mxu0 %v3478
  %4367 = vmatpush.bf16.msra.mxu0 %v3462
  %4368 = vmatpush.bf16.msra.mxu0 %v3446
  %4369 = vmatpush.bf16.msra.mxu0 %v3430
  %4370 = vmatpush.bf16.msra.mxu0 %v3414
  %4371 = vmatpush.bf16.msra.mxu0 %v3398
  %4372 = vmatpush.bf16.msra.mxu0 %v3382
  %4373 = vmatpush.bf16.msra.mxu0 %v3366
  %4374 = vmatmul.bf16.gmra.mxu0 %v1182
  %v4375 = vpop.f32.mrf.mxu0
  %v4376 = vadd.f32 %v4362, %v4375
  %v4377 = vpop.f32.mrf.mxu0
  %v4378 = vadd.f32 %v4364, %v4377
  %4379 = vdwg.mxu0
  %4380 = vmatpush.bf16.msra.mxu0 %v3606
  %4381 = vmatpush.bf16.msra.mxu0 %v3590
  %4382 = vmatpush.bf16.msra.mxu0 %v3574
  %4383 = vmatpush.bf16.msra.mxu0 %v3558
  %4384 = vmatpush.bf16.msra.mxu0 %v3542
  %4385 = vmatpush.bf16.msra.mxu0 %v3526
  %4386 = vmatpush.bf16.msra.mxu0 %v3510
  %4387 = vmatpush.bf16.msra.mxu0 %v3494
  %4388 = vmatmul.bf16.gmra.mxu0 %v1183
  %v4389 = vpop.f32.mrf.mxu0
  %v4390 = vadd.f32 %v4376, %v4389
  %v4391 = vpop.f32.mrf.mxu0
  %v4392 = vadd.f32 %v4378, %v4391
  %4393 = vdwg.mxu0
  %4394 = vmatpush.bf16.msra.mxu0 %v4252
  %4395 = vmatpush.bf16.msra.mxu0 %v3718
  %4396 = vmatpush.bf16.msra.mxu0 %v3702
  %4397 = vmatpush.bf16.msra.mxu0 %v3686
  %4398 = vmatpush.bf16.msra.mxu0 %v3670
  %4399 = vmatpush.bf16.msra.mxu0 %v3654
  %4400 = vmatpush.bf16.msra.mxu0 %v3638
  %4401 = vmatpush.bf16.msra.mxu0 %v3622
  %4402 = vmatmul.bf16.gmra.mxu0 %v4246
  %v4403 = vpop.f32.mrf.mxu0
  %v4404 = vadd.f32 %v4390, %v4403
  %v4405 = vpop.f32.mrf.mxu0
  %v4406 = vadd.f32 %v4392, %v4405
  %4407 = vdwg.mxu0
  %4408 = vmatpush.bf16.msra.mxu0 %v3351
  %4409 = vmatpush.bf16.msra.mxu0 %v3335
  %4410 = vmatpush.bf16.msra.mxu0 %v3319
  %4411 = vmatpush.bf16.msra.mxu0 %v3303
  %4412 = vmatpush.bf16.msra.mxu0 %v3287
  %4413 = vmatpush.bf16.msra.mxu0 %v3271
  %4414 = vmatpush.bf16.msra.mxu0 %v3255
  %4415 = vmatpush.bf16.msra.mxu0 %v3239
  %4416 = vmatmul.bf16.gmra.mxu0 %v1181
  %v4417 = vpop.f32.mrf.mxu0
  %v4418 = vadd.f32 %v1695, %v4417
  %v4419 = vpop.f32.mrf.mxu0
  %v4420 = vadd.f32 %v1695, %v4419
  %4421 = vdwg.mxu0
  %4422 = vmatpush.bf16.msra.mxu0 %v3479
  %4423 = vmatpush.bf16.msra.mxu0 %v3463
  %4424 = vmatpush.bf16.msra.mxu0 %v3447
  %4425 = vmatpush.bf16.msra.mxu0 %v3431
  %4426 = vmatpush.bf16.msra.mxu0 %v3415
  %4427 = vmatpush.bf16.msra.mxu0 %v3399
  %4428 = vmatpush.bf16.msra.mxu0 %v3383
  %4429 = vmatpush.bf16.msra.mxu0 %v3367
  %4430 = vmatmul.bf16.gmra.mxu0 %v1182
  %v4431 = vpop.f32.mrf.mxu0
  %v4432 = vadd.f32 %v4418, %v4431
  %v4433 = vpop.f32.mrf.mxu0
  %v4434 = vadd.f32 %v4420, %v4433
  %4435 = vdwg.mxu0
  %4436 = vmatpush.bf16.msra.mxu0 %v3607
  %4437 = vmatpush.bf16.msra.mxu0 %v3591
  %4438 = vmatpush.bf16.msra.mxu0 %v3575
  %4439 = vmatpush.bf16.msra.mxu0 %v3559
  %4440 = vmatpush.bf16.msra.mxu0 %v3543
  %4441 = vmatpush.bf16.msra.mxu0 %v3527
  %4442 = vmatpush.bf16.msra.mxu0 %v3511
  %4443 = vmatpush.bf16.msra.mxu0 %v3495
  %4444 = vmatmul.bf16.gmra.mxu0 %v1183
  %v4445 = vpop.f32.mrf.mxu0
  %v4446 = vadd.f32 %v4432, %v4445
  %v4447 = vpop.f32.mrf.mxu0
  %v4448 = vadd.f32 %v4434, %v4447
  %4449 = vdwg.mxu0
  %4450 = vmatpush.bf16.msra.mxu0 %v4255
  %4451 = vmatpush.bf16.msra.mxu0 %v3719
  %4452 = vmatpush.bf16.msra.mxu0 %v3703
  %4453 = vmatpush.bf16.msra.mxu0 %v3687
  %4454 = vmatpush.bf16.msra.mxu0 %v3671
  %4455 = vmatpush.bf16.msra.mxu0 %v3655
  %4456 = vmatpush.bf16.msra.mxu0 %v3639
  %4457 = vmatpush.bf16.msra.mxu0 %v3623
  %4458 = vmatmul.bf16.gmra.mxu0 %v4246
  %v4459 = vpop.f32.mrf.mxu0
  %v4460 = vadd.f32 %v4446, %v4459
  %v4461 = vpop.f32.mrf.mxu0
  %v4462 = vadd.f32 %v4448, %v4461
  %4463 = vdwg.mxu0
  %4464 = vmatpush.bf16.msra.mxu0 %v3352
  %4465 = vmatpush.bf16.msra.mxu0 %v3336
  %4466 = vmatpush.bf16.msra.mxu0 %v3320
  %4467 = vmatpush.bf16.msra.mxu0 %v3304
  %4468 = vmatpush.bf16.msra.mxu0 %v3288
  %4469 = vmatpush.bf16.msra.mxu0 %v3272
  %4470 = vmatpush.bf16.msra.mxu0 %v3256
  %4471 = vmatpush.bf16.msra.mxu0 %v3240
  %4472 = vmatmul.bf16.gmra.mxu0 %v1181
  %v4473 = vpop.f32.mrf.mxu0
  %v4474 = vadd.f32 %v1696, %v4473
  %v4475 = vpop.f32.mrf.mxu0
  %v4476 = vadd.f32 %v1696, %v4475
  %4477 = vdwg.mxu0
  %4478 = vmatpush.bf16.msra.mxu0 %v3480
  %4479 = vmatpush.bf16.msra.mxu0 %v3464
  %4480 = vmatpush.bf16.msra.mxu0 %v3448
  %4481 = vmatpush.bf16.msra.mxu0 %v3432
  %4482 = vmatpush.bf16.msra.mxu0 %v3416
  %4483 = vmatpush.bf16.msra.mxu0 %v3400
  %4484 = vmatpush.bf16.msra.mxu0 %v3384
  %4485 = vmatpush.bf16.msra.mxu0 %v3368
  %4486 = vmatmul.bf16.gmra.mxu0 %v1182
  %v4487 = vpop.f32.mrf.mxu0
  %v4488 = vadd.f32 %v4474, %v4487
  %v4489 = vpop.f32.mrf.mxu0
  %v4490 = vadd.f32 %v4476, %v4489
  %4491 = vdwg.mxu0
  %4492 = vmatpush.bf16.msra.mxu0 %v3608
  %4493 = vmatpush.bf16.msra.mxu0 %v3592
  %4494 = vmatpush.bf16.msra.mxu0 %v3576
  %4495 = vmatpush.bf16.msra.mxu0 %v3560
  %4496 = vmatpush.bf16.msra.mxu0 %v3544
  %4497 = vmatpush.bf16.msra.mxu0 %v3528
  %4498 = vmatpush.bf16.msra.mxu0 %v3512
  %4499 = vmatpush.bf16.msra.mxu0 %v3496
  %4500 = vmatmul.bf16.gmra.mxu0 %v1183
  %v4501 = vpop.f32.mrf.mxu0
  %v4502 = vadd.f32 %v4488, %v4501
  %v4503 = vpop.f32.mrf.mxu0
  %v4504 = vadd.f32 %v4490, %v4503
  %4505 = vdwg.mxu0
  %4506 = vmatpush.bf16.msra.mxu0 %v4258
  %4507 = vmatpush.bf16.msra.mxu0 %v3720
  %4508 = vmatpush.bf16.msra.mxu0 %v3704
  %4509 = vmatpush.bf16.msra.mxu0 %v3688
  %4510 = vmatpush.bf16.msra.mxu0 %v3672
  %4511 = vmatpush.bf16.msra.mxu0 %v3656
  %4512 = vmatpush.bf16.msra.mxu0 %v3640
  %4513 = vmatpush.bf16.msra.mxu0 %v3624
  %4514 = vmatmul.bf16.gmra.mxu0 %v4246
  %v4515 = vpop.f32.mrf.mxu0
  %v4516 = vadd.f32 %v4502, %v4515
  %v4517 = vpop.f32.mrf.mxu0
  %v4518 = vadd.f32 %v4504, %v4517
  %4519 = vdwg.mxu0
  %4520 = vmatpush.bf16.msra.mxu0 %v3353
  %4521 = vmatpush.bf16.msra.mxu0 %v3337
  %4522 = vmatpush.bf16.msra.mxu0 %v3321
  %4523 = vmatpush.bf16.msra.mxu0 %v3305
  %4524 = vmatpush.bf16.msra.mxu0 %v3289
  %4525 = vmatpush.bf16.msra.mxu0 %v3273
  %4526 = vmatpush.bf16.msra.mxu0 %v3257
  %4527 = vmatpush.bf16.msra.mxu0 %v3241
  %4528 = vmatmul.bf16.gmra.mxu0 %v1181
  %v4529 = vpop.f32.mrf.mxu0
  %v4530 = vadd.f32 %v1697, %v4529
  %v4531 = vpop.f32.mrf.mxu0
  %v4532 = vadd.f32 %v1697, %v4531
  %4533 = vdwg.mxu0
  %4534 = vmatpush.bf16.msra.mxu0 %v3481
  %4535 = vmatpush.bf16.msra.mxu0 %v3465
  %4536 = vmatpush.bf16.msra.mxu0 %v3449
  %4537 = vmatpush.bf16.msra.mxu0 %v3433
  %4538 = vmatpush.bf16.msra.mxu0 %v3417
  %4539 = vmatpush.bf16.msra.mxu0 %v3401
  %4540 = vmatpush.bf16.msra.mxu0 %v3385
  %4541 = vmatpush.bf16.msra.mxu0 %v3369
  %4542 = vmatmul.bf16.gmra.mxu0 %v1182
  %v4543 = vpop.f32.mrf.mxu0
  %v4544 = vadd.f32 %v4530, %v4543
  %v4545 = vpop.f32.mrf.mxu0
  %v4546 = vadd.f32 %v4532, %v4545
  %4547 = vdwg.mxu0
  %4548 = vmatpush.bf16.msra.mxu0 %v3609
  %4549 = vmatpush.bf16.msra.mxu0 %v3593
  %4550 = vmatpush.bf16.msra.mxu0 %v3577
  %4551 = vmatpush.bf16.msra.mxu0 %v3561
  %4552 = vmatpush.bf16.msra.mxu0 %v3545
  %4553 = vmatpush.bf16.msra.mxu0 %v3529
  %4554 = vmatpush.bf16.msra.mxu0 %v3513
  %4555 = vmatpush.bf16.msra.mxu0 %v3497
  %4556 = vmatmul.bf16.gmra.mxu0 %v1183
  %v4557 = vpop.f32.mrf.mxu0
  %v4558 = vadd.f32 %v4544, %v4557
  %v4559 = vpop.f32.mrf.mxu0
  %v4560 = vadd.f32 %v4546, %v4559
  %4561 = vdwg.mxu0
  %4562 = vmatpush.bf16.msra.mxu0 %v4261
  %4563 = vmatpush.bf16.msra.mxu0 %v3721
  %4564 = vmatpush.bf16.msra.mxu0 %v3705
  %4565 = vmatpush.bf16.msra.mxu0 %v3689
  %4566 = vmatpush.bf16.msra.mxu0 %v3673
  %4567 = vmatpush.bf16.msra.mxu0 %v3657
  %4568 = vmatpush.bf16.msra.mxu0 %v3641
  %4569 = vmatpush.bf16.msra.mxu0 %v3625
  %4570 = vmatmul.bf16.gmra.mxu0 %v4246
  %v4571 = vpop.f32.mrf.mxu0
  %v4572 = vadd.f32 %v4558, %v4571
  %v4573 = vpop.f32.mrf.mxu0
  %v4574 = vadd.f32 %v4560, %v4573
  %4575 = vdwg.mxu0
  %4576 = vmatpush.bf16.msra.mxu0 %v3354
  %4577 = vmatpush.bf16.msra.mxu0 %v3338
  %4578 = vmatpush.bf16.msra.mxu0 %v3322
  %4579 = vmatpush.bf16.msra.mxu0 %v3306
  %4580 = vmatpush.bf16.msra.mxu0 %v3290
  %4581 = vmatpush.bf16.msra.mxu0 %v3274
  %4582 = vmatpush.bf16.msra.mxu0 %v3258
  %4583 = vmatpush.bf16.msra.mxu0 %v3242
  %4584 = vmatmul.bf16.gmra.mxu0 %v1181
  %v4585 = vpop.f32.mrf.mxu0
  %v4586 = vadd.f32 %v1698, %v4585
  %v4587 = vpop.f32.mrf.mxu0
  %v4588 = vadd.f32 %v1698, %v4587
  %4589 = vdwg.mxu0
  %4590 = vmatpush.bf16.msra.mxu0 %v3482
  %4591 = vmatpush.bf16.msra.mxu0 %v3466
  %4592 = vmatpush.bf16.msra.mxu0 %v3450
  %4593 = vmatpush.bf16.msra.mxu0 %v3434
  %4594 = vmatpush.bf16.msra.mxu0 %v3418
  %4595 = vmatpush.bf16.msra.mxu0 %v3402
  %4596 = vmatpush.bf16.msra.mxu0 %v3386
  %4597 = vmatpush.bf16.msra.mxu0 %v3370
  %4598 = vmatmul.bf16.gmra.mxu0 %v1182
  %v4599 = vpop.f32.mrf.mxu0
  %v4600 = vadd.f32 %v4586, %v4599
  %v4601 = vpop.f32.mrf.mxu0
  %v4602 = vadd.f32 %v4588, %v4601
  %4603 = vdwg.mxu0
  %4604 = vmatpush.bf16.msra.mxu0 %v3610
  %4605 = vmatpush.bf16.msra.mxu0 %v3594
  %4606 = vmatpush.bf16.msra.mxu0 %v3578
  %4607 = vmatpush.bf16.msra.mxu0 %v3562
  %4608 = vmatpush.bf16.msra.mxu0 %v3546
  %4609 = vmatpush.bf16.msra.mxu0 %v3530
  %4610 = vmatpush.bf16.msra.mxu0 %v3514
  %4611 = vmatpush.bf16.msra.mxu0 %v3498
  %4612 = vmatmul.bf16.gmra.mxu0 %v1183
  %v4613 = vpop.f32.mrf.mxu0
  %v4614 = vadd.f32 %v4600, %v4613
  %v4615 = vpop.f32.mrf.mxu0
  %v4616 = vadd.f32 %v4602, %v4615
  %4617 = vdwg.mxu0
  %4618 = vmatpush.bf16.msra.mxu0 %v4264
  %4619 = vmatpush.bf16.msra.mxu0 %v3722
  %4620 = vmatpush.bf16.msra.mxu0 %v3706
  %4621 = vmatpush.bf16.msra.mxu0 %v3690
  %4622 = vmatpush.bf16.msra.mxu0 %v3674
  %4623 = vmatpush.bf16.msra.mxu0 %v3658
  %4624 = vmatpush.bf16.msra.mxu0 %v3642
  %4625 = vmatpush.bf16.msra.mxu0 %v3626
  %4626 = vmatmul.bf16.gmra.mxu0 %v4246
  %v4627 = vpop.f32.mrf.mxu0
  %v4628 = vadd.f32 %v4614, %v4627
  %v4629 = vpop.f32.mrf.mxu0
  %v4630 = vadd.f32 %v4616, %v4629
  %4631 = vdwg.mxu0
  %4632 = vmatpush.bf16.msra.mxu0 %v3355
  %4633 = vmatpush.bf16.msra.mxu0 %v3339
  %4634 = vmatpush.bf16.msra.mxu0 %v3323
  %4635 = vmatpush.bf16.msra.mxu0 %v3307
  %4636 = vmatpush.bf16.msra.mxu0 %v3291
  %4637 = vmatpush.bf16.msra.mxu0 %v3275
  %4638 = vmatpush.bf16.msra.mxu0 %v3259
  %4639 = vmatpush.bf16.msra.mxu0 %v3243
  %4640 = vmatmul.bf16.gmra.mxu0 %v1181
  %v4641 = vpop.f32.mrf.mxu0
  %v4642 = vadd.f32 %v1699, %v4641
  %v4643 = vpop.f32.mrf.mxu0
  %v4644 = vadd.f32 %v1699, %v4643
  %4645 = vdwg.mxu0
  %4646 = vmatpush.bf16.msra.mxu0 %v3483
  %4647 = vmatpush.bf16.msra.mxu0 %v3467
  %4648 = vmatpush.bf16.msra.mxu0 %v3451
  %4649 = vmatpush.bf16.msra.mxu0 %v3435
  %4650 = vmatpush.bf16.msra.mxu0 %v3419
  %4651 = vmatpush.bf16.msra.mxu0 %v3403
  %4652 = vmatpush.bf16.msra.mxu0 %v3387
  %4653 = vmatpush.bf16.msra.mxu0 %v3371
  %4654 = vmatmul.bf16.gmra.mxu0 %v1182
  %v4655 = vpop.f32.mrf.mxu0
  %v4656 = vadd.f32 %v4642, %v4655
  %v4657 = vpop.f32.mrf.mxu0
  %v4658 = vadd.f32 %v4644, %v4657
  %4659 = vdwg.mxu0
  %4660 = vmatpush.bf16.msra.mxu0 %v3611
  %4661 = vmatpush.bf16.msra.mxu0 %v3595
  %4662 = vmatpush.bf16.msra.mxu0 %v3579
  %4663 = vmatpush.bf16.msra.mxu0 %v3563
  %4664 = vmatpush.bf16.msra.mxu0 %v3547
  %4665 = vmatpush.bf16.msra.mxu0 %v3531
  %4666 = vmatpush.bf16.msra.mxu0 %v3515
  %4667 = vmatpush.bf16.msra.mxu0 %v3499
  %4668 = vmatmul.bf16.gmra.mxu0 %v1183
  %v4669 = vpop.f32.mrf.mxu0
  %v4670 = vadd.f32 %v4656, %v4669
  %v4671 = vpop.f32.mrf.mxu0
  %v4672 = vadd.f32 %v4658, %v4671
  %4673 = vdwg.mxu0
  %4674 = vmatpush.bf16.msra.mxu0 %v4267
  %4675 = vmatpush.bf16.msra.mxu0 %v3723
  %4676 = vmatpush.bf16.msra.mxu0 %v3707
  %4677 = vmatpush.bf16.msra.mxu0 %v3691
  %4678 = vmatpush.bf16.msra.mxu0 %v3675
  %4679 = vmatpush.bf16.msra.mxu0 %v3659
  %4680 = vmatpush.bf16.msra.mxu0 %v3643
  %4681 = vmatpush.bf16.msra.mxu0 %v3627
  %4682 = vmatmul.bf16.gmra.mxu0 %v4246
  %v4683 = vpop.f32.mrf.mxu0
  %v4684 = vadd.f32 %v4670, %v4683
  %v4685 = vpop.f32.mrf.mxu0
  %v4686 = vadd.f32 %v4672, %v4685
  %4687 = vdwg.mxu0
  %4688 = vmatpush.bf16.msra.mxu0 %v3356
  %4689 = vmatpush.bf16.msra.mxu0 %v3340
  %4690 = vmatpush.bf16.msra.mxu0 %v3324
  %4691 = vmatpush.bf16.msra.mxu0 %v3308
  %4692 = vmatpush.bf16.msra.mxu0 %v3292
  %4693 = vmatpush.bf16.msra.mxu0 %v3276
  %4694 = vmatpush.bf16.msra.mxu0 %v3260
  %4695 = vmatpush.bf16.msra.mxu0 %v3244
  %4696 = vmatmul.bf16.gmra.mxu0 %v1181
  %v4697 = vpop.f32.mrf.mxu0
  %v4698 = vadd.f32 %v1700, %v4697
  %v4699 = vpop.f32.mrf.mxu0
  %v4700 = vadd.f32 %v1700, %v4699
  %4701 = vdwg.mxu0
  %4702 = vmatpush.bf16.msra.mxu0 %v3484
  %4703 = vmatpush.bf16.msra.mxu0 %v3468
  %4704 = vmatpush.bf16.msra.mxu0 %v3452
  %4705 = vmatpush.bf16.msra.mxu0 %v3436
  %4706 = vmatpush.bf16.msra.mxu0 %v3420
  %4707 = vmatpush.bf16.msra.mxu0 %v3404
  %4708 = vmatpush.bf16.msra.mxu0 %v3388
  %4709 = vmatpush.bf16.msra.mxu0 %v3372
  %4710 = vmatmul.bf16.gmra.mxu0 %v1182
  %v4711 = vpop.f32.mrf.mxu0
  %v4712 = vadd.f32 %v4698, %v4711
  %v4713 = vpop.f32.mrf.mxu0
  %v4714 = vadd.f32 %v4700, %v4713
  %4715 = vdwg.mxu0
  %4716 = vmatpush.bf16.msra.mxu0 %v3612
  %4717 = vmatpush.bf16.msra.mxu0 %v3596
  %4718 = vmatpush.bf16.msra.mxu0 %v3580
  %4719 = vmatpush.bf16.msra.mxu0 %v3564
  %4720 = vmatpush.bf16.msra.mxu0 %v3548
  %4721 = vmatpush.bf16.msra.mxu0 %v3532
  %4722 = vmatpush.bf16.msra.mxu0 %v3516
  %4723 = vmatpush.bf16.msra.mxu0 %v3500
  %4724 = vmatmul.bf16.gmra.mxu0 %v1183
  %v4725 = vpop.f32.mrf.mxu0
  %v4726 = vadd.f32 %v4712, %v4725
  %v4727 = vpop.f32.mrf.mxu0
  %v4728 = vadd.f32 %v4714, %v4727
  %4729 = vdwg.mxu0
  %4730 = vmatpush.bf16.msra.mxu0 %v4270
  %4731 = vmatpush.bf16.msra.mxu0 %v3724
  %4732 = vmatpush.bf16.msra.mxu0 %v3708
  %4733 = vmatpush.bf16.msra.mxu0 %v3692
  %4734 = vmatpush.bf16.msra.mxu0 %v3676
  %4735 = vmatpush.bf16.msra.mxu0 %v3660
  %4736 = vmatpush.bf16.msra.mxu0 %v3644
  %4737 = vmatpush.bf16.msra.mxu0 %v3628
  %4738 = vmatmul.bf16.gmra.mxu0 %v4246
  %v4739 = vpop.f32.mrf.mxu0
  %v4740 = vadd.f32 %v4726, %v4739
  %v4741 = vpop.f32.mrf.mxu0
  %v4742 = vadd.f32 %v4728, %v4741
  %4743 = vdwg.mxu0
  %4744 = vmatpush.bf16.msra.mxu0 %v3357
  %4745 = vmatpush.bf16.msra.mxu0 %v3341
  %4746 = vmatpush.bf16.msra.mxu0 %v3325
  %4747 = vmatpush.bf16.msra.mxu0 %v3309
  %4748 = vmatpush.bf16.msra.mxu0 %v3293
  %4749 = vmatpush.bf16.msra.mxu0 %v3277
  %4750 = vmatpush.bf16.msra.mxu0 %v3261
  %4751 = vmatpush.bf16.msra.mxu0 %v3245
  %4752 = vmatmul.bf16.gmra.mxu0 %v1181
  %v4753 = vpop.f32.mrf.mxu0
  %v4754 = vadd.f32 %v1701, %v4753
  %v4755 = vpop.f32.mrf.mxu0
  %v4756 = vadd.f32 %v1701, %v4755
  %4757 = vdwg.mxu0
  %4758 = vmatpush.bf16.msra.mxu0 %v3485
  %4759 = vmatpush.bf16.msra.mxu0 %v3469
  %4760 = vmatpush.bf16.msra.mxu0 %v3453
  %4761 = vmatpush.bf16.msra.mxu0 %v3437
  %4762 = vmatpush.bf16.msra.mxu0 %v3421
  %4763 = vmatpush.bf16.msra.mxu0 %v3405
  %4764 = vmatpush.bf16.msra.mxu0 %v3389
  %4765 = vmatpush.bf16.msra.mxu0 %v3373
  %4766 = vmatmul.bf16.gmra.mxu0 %v1182
  %v4767 = vpop.f32.mrf.mxu0
  %v4768 = vadd.f32 %v4754, %v4767
  %v4769 = vpop.f32.mrf.mxu0
  %v4770 = vadd.f32 %v4756, %v4769
  %4771 = vdwg.mxu0
  %4772 = vmatpush.bf16.msra.mxu0 %v3613
  %4773 = vmatpush.bf16.msra.mxu0 %v3597
  %4774 = vmatpush.bf16.msra.mxu0 %v3581
  %4775 = vmatpush.bf16.msra.mxu0 %v3565
  %4776 = vmatpush.bf16.msra.mxu0 %v3549
  %4777 = vmatpush.bf16.msra.mxu0 %v3533
  %4778 = vmatpush.bf16.msra.mxu0 %v3517
  %4779 = vmatpush.bf16.msra.mxu0 %v3501
  %4780 = vmatmul.bf16.gmra.mxu0 %v1183
  %v4781 = vpop.f32.mrf.mxu0
  %v4782 = vadd.f32 %v4768, %v4781
  %v4783 = vpop.f32.mrf.mxu0
  %v4784 = vadd.f32 %v4770, %v4783
  %4785 = vdwg.mxu0
  %4786 = vmatpush.bf16.msra.mxu0 %v4273
  %4787 = vmatpush.bf16.msra.mxu0 %v3725
  %4788 = vmatpush.bf16.msra.mxu0 %v3709
  %4789 = vmatpush.bf16.msra.mxu0 %v3693
  %4790 = vmatpush.bf16.msra.mxu0 %v3677
  %4791 = vmatpush.bf16.msra.mxu0 %v3661
  %4792 = vmatpush.bf16.msra.mxu0 %v3645
  %4793 = vmatpush.bf16.msra.mxu0 %v3629
  %4794 = vmatmul.bf16.gmra.mxu0 %v4246
  %v4795 = vpop.f32.mrf.mxu0
  %v4796 = vadd.f32 %v4782, %v4795
  %v4797 = vpop.f32.mrf.mxu0
  %v4798 = vadd.f32 %v4784, %v4797
  %4799 = vdwg.mxu0
  %4800 = vmatpush.bf16.msra.mxu0 %v3358
  %4801 = vmatpush.bf16.msra.mxu0 %v3342
  %4802 = vmatpush.bf16.msra.mxu0 %v3326
  %4803 = vmatpush.bf16.msra.mxu0 %v3310
  %4804 = vmatpush.bf16.msra.mxu0 %v3294
  %4805 = vmatpush.bf16.msra.mxu0 %v3278
  %4806 = vmatpush.bf16.msra.mxu0 %v3262
  %4807 = vmatpush.bf16.msra.mxu0 %v3246
  %4808 = vmatmul.bf16.gmra.mxu0 %v1181
  %v4809 = vpop.f32.mrf.mxu0
  %v4810 = vadd.f32 %v1702, %v4809
  %v4811 = vpop.f32.mrf.mxu0
  %v4812 = vadd.f32 %v1702, %v4811
  %4813 = vdwg.mxu0
  %4814 = vmatpush.bf16.msra.mxu0 %v3486
  %4815 = vmatpush.bf16.msra.mxu0 %v3470
  %4816 = vmatpush.bf16.msra.mxu0 %v3454
  %4817 = vmatpush.bf16.msra.mxu0 %v3438
  %4818 = vmatpush.bf16.msra.mxu0 %v3422
  %4819 = vmatpush.bf16.msra.mxu0 %v3406
  %4820 = vmatpush.bf16.msra.mxu0 %v3390
  %4821 = vmatpush.bf16.msra.mxu0 %v3374
  %4822 = vmatmul.bf16.gmra.mxu0 %v1182
  %v4823 = vpop.f32.mrf.mxu0
  %v4824 = vadd.f32 %v4810, %v4823
  %v4825 = vpop.f32.mrf.mxu0
  %v4826 = vadd.f32 %v4812, %v4825
  %4827 = vdwg.mxu0
  %4828 = vmatpush.bf16.msra.mxu0 %v3614
  %4829 = vmatpush.bf16.msra.mxu0 %v3598
  %4830 = vmatpush.bf16.msra.mxu0 %v3582
  %4831 = vmatpush.bf16.msra.mxu0 %v3566
  %4832 = vmatpush.bf16.msra.mxu0 %v3550
  %4833 = vmatpush.bf16.msra.mxu0 %v3534
  %4834 = vmatpush.bf16.msra.mxu0 %v3518
  %4835 = vmatpush.bf16.msra.mxu0 %v3502
  %4836 = vmatmul.bf16.gmra.mxu0 %v1183
  %v4837 = vpop.f32.mrf.mxu0
  %v4838 = vadd.f32 %v4824, %v4837
  %v4839 = vpop.f32.mrf.mxu0
  %v4840 = vadd.f32 %v4826, %v4839
  %4841 = vdwg.mxu0
  %4842 = vmatpush.bf16.msra.mxu0 %v4276
  %4843 = vmatpush.bf16.msra.mxu0 %v3726
  %4844 = vmatpush.bf16.msra.mxu0 %v3710
  %4845 = vmatpush.bf16.msra.mxu0 %v3694
  %4846 = vmatpush.bf16.msra.mxu0 %v3678
  %4847 = vmatpush.bf16.msra.mxu0 %v3662
  %4848 = vmatpush.bf16.msra.mxu0 %v3646
  %4849 = vmatpush.bf16.msra.mxu0 %v3630
  %4850 = vmatmul.bf16.gmra.mxu0 %v4246
  %v4851 = vpop.f32.mrf.mxu0
  %v4852 = vadd.f32 %v4838, %v4851
  %v4853 = vpop.f32.mrf.mxu0
  %v4854 = vadd.f32 %v4840, %v4853
  %4855 = vdwg.mxu0
  %4856 = vmatpush.bf16.msra.mxu0 %v3359
  %4857 = vmatpush.bf16.msra.mxu0 %v3343
  %4858 = vmatpush.bf16.msra.mxu0 %v3327
  %4859 = vmatpush.bf16.msra.mxu0 %v3311
  %4860 = vmatpush.bf16.msra.mxu0 %v3295
  %4861 = vmatpush.bf16.msra.mxu0 %v3279
  %4862 = vmatpush.bf16.msra.mxu0 %v3263
  %4863 = vmatpush.bf16.msra.mxu0 %v3247
  %4864 = vmatmul.bf16.gmra.mxu0 %v1181
  %v4865 = vpop.f32.mrf.mxu0
  %v4866 = vadd.f32 %v1703, %v4865
  %v4867 = vpop.f32.mrf.mxu0
  %v4868 = vadd.f32 %v1703, %v4867
  %4869 = vdwg.mxu0
  %4870 = vmatpush.bf16.msra.mxu0 %v3487
  %4871 = vmatpush.bf16.msra.mxu0 %v3471
  %4872 = vmatpush.bf16.msra.mxu0 %v3455
  %4873 = vmatpush.bf16.msra.mxu0 %v3439
  %4874 = vmatpush.bf16.msra.mxu0 %v3423
  %4875 = vmatpush.bf16.msra.mxu0 %v3407
  %4876 = vmatpush.bf16.msra.mxu0 %v3391
  %4877 = vmatpush.bf16.msra.mxu0 %v3375
  %4878 = vmatmul.bf16.gmra.mxu0 %v1182
  %v4879 = vpop.f32.mrf.mxu0
  %v4880 = vadd.f32 %v4866, %v4879
  %v4881 = vpop.f32.mrf.mxu0
  %v4882 = vadd.f32 %v4868, %v4881
  %4883 = vdwg.mxu0
  %4884 = vmatpush.bf16.msra.mxu0 %v3615
  %4885 = vmatpush.bf16.msra.mxu0 %v3599
  %4886 = vmatpush.bf16.msra.mxu0 %v3583
  %4887 = vmatpush.bf16.msra.mxu0 %v3567
  %4888 = vmatpush.bf16.msra.mxu0 %v3551
  %4889 = vmatpush.bf16.msra.mxu0 %v3535
  %4890 = vmatpush.bf16.msra.mxu0 %v3519
  %4891 = vmatpush.bf16.msra.mxu0 %v3503
  %4892 = vmatmul.bf16.gmra.mxu0 %v1183
  %v4893 = vpop.f32.mrf.mxu0
  %v4894 = vadd.f32 %v4880, %v4893
  %v4895 = vpop.f32.mrf.mxu0
  %v4896 = vadd.f32 %v4882, %v4895
  %4897 = vdwg.mxu0
  %4898 = vmatpush.bf16.msra.mxu0 %v4279
  %4899 = vmatpush.bf16.msra.mxu0 %v3727
  %4900 = vmatpush.bf16.msra.mxu0 %v3711
  %4901 = vmatpush.bf16.msra.mxu0 %v3695
  %4902 = vmatpush.bf16.msra.mxu0 %v3679
  %4903 = vmatpush.bf16.msra.mxu0 %v3663
  %4904 = vmatpush.bf16.msra.mxu0 %v3647
  %4905 = vmatpush.bf16.msra.mxu0 %v3631
  %4906 = vmatmul.bf16.gmra.mxu0 %v4246
  %v4907 = vpop.f32.mrf.mxu0
  %v4908 = vadd.f32 %v4894, %v4907
  %v4909 = vpop.f32.mrf.mxu0
  %v4910 = vadd.f32 %v4896, %v4909
  %4911 = vdwg.mxu0
  %4912 = vmatpush.bf16.msra.mxu0 %v3360
  %4913 = vmatpush.bf16.msra.mxu0 %v3344
  %4914 = vmatpush.bf16.msra.mxu0 %v3328
  %4915 = vmatpush.bf16.msra.mxu0 %v3312
  %4916 = vmatpush.bf16.msra.mxu0 %v3296
  %4917 = vmatpush.bf16.msra.mxu0 %v3280
  %4918 = vmatpush.bf16.msra.mxu0 %v3264
  %4919 = vmatpush.bf16.msra.mxu0 %v3248
  %4920 = vmatmul.bf16.gmra.mxu0 %v1181
  %v4921 = vpop.f32.mrf.mxu0
  %v4922 = vadd.f32 %v1704, %v4921
  %v4923 = vpop.f32.mrf.mxu0
  %v4924 = vadd.f32 %v1704, %v4923
  %4925 = vdwg.mxu0
  %4926 = vmatpush.bf16.msra.mxu0 %v3488
  %4927 = vmatpush.bf16.msra.mxu0 %v3472
  %4928 = vmatpush.bf16.msra.mxu0 %v3456
  %4929 = vmatpush.bf16.msra.mxu0 %v3440
  %4930 = vmatpush.bf16.msra.mxu0 %v3424
  %4931 = vmatpush.bf16.msra.mxu0 %v3408
  %4932 = vmatpush.bf16.msra.mxu0 %v3392
  %4933 = vmatpush.bf16.msra.mxu0 %v3376
  %4934 = vmatmul.bf16.gmra.mxu0 %v1182
  %v4935 = vpop.f32.mrf.mxu0
  %v4936 = vadd.f32 %v4922, %v4935
  %v4937 = vpop.f32.mrf.mxu0
  %v4938 = vadd.f32 %v4924, %v4937
  %4939 = vdwg.mxu0
  %4940 = vmatpush.bf16.msra.mxu0 %v3616
  %4941 = vmatpush.bf16.msra.mxu0 %v3600
  %4942 = vmatpush.bf16.msra.mxu0 %v3584
  %4943 = vmatpush.bf16.msra.mxu0 %v3568
  %4944 = vmatpush.bf16.msra.mxu0 %v3552
  %4945 = vmatpush.bf16.msra.mxu0 %v3536
  %4946 = vmatpush.bf16.msra.mxu0 %v3520
  %4947 = vmatpush.bf16.msra.mxu0 %v3504
  %4948 = vmatmul.bf16.gmra.mxu0 %v1183
  %v4949 = vpop.f32.mrf.mxu0
  %v4950 = vadd.f32 %v4936, %v4949
  %v4951 = vpop.f32.mrf.mxu0
  %v4952 = vadd.f32 %v4938, %v4951
  %4953 = vdwg.mxu0
  %4954 = vmatpush.bf16.msra.mxu0 %v4282
  %4955 = vmatpush.bf16.msra.mxu0 %v3728
  %4956 = vmatpush.bf16.msra.mxu0 %v3712
  %4957 = vmatpush.bf16.msra.mxu0 %v3696
  %4958 = vmatpush.bf16.msra.mxu0 %v3680
  %4959 = vmatpush.bf16.msra.mxu0 %v3664
  %4960 = vmatpush.bf16.msra.mxu0 %v3648
  %4961 = vmatpush.bf16.msra.mxu0 %v3632
  %4962 = vmatmul.bf16.gmra.mxu0 %v4246
  %v4963 = vpop.f32.mrf.mxu0
  %v4964 = vadd.f32 %v4950, %v4963
  %v4965 = vpop.f32.mrf.mxu0
  %v4966 = vadd.f32 %v4952, %v4965
  %4967 = vdwg.mxu0
  %4968 = vmatpush.bf16.msra.mxu0 %v3361
  %4969 = vmatpush.bf16.msra.mxu0 %v3345
  %4970 = vmatpush.bf16.msra.mxu0 %v3329
  %4971 = vmatpush.bf16.msra.mxu0 %v3313
  %4972 = vmatpush.bf16.msra.mxu0 %v3297
  %4973 = vmatpush.bf16.msra.mxu0 %v3281
  %4974 = vmatpush.bf16.msra.mxu0 %v3265
  %4975 = vmatpush.bf16.msra.mxu0 %v3249
  %4976 = vmatmul.bf16.gmra.mxu0 %v1181
  %v4977 = vpop.f32.mrf.mxu0
  %v4978 = vadd.f32 %v1705, %v4977
  %v4979 = vpop.f32.mrf.mxu0
  %v4980 = vadd.f32 %v1705, %v4979
  %4981 = vdwg.mxu0
  %4982 = vmatpush.bf16.msra.mxu0 %v3489
  %4983 = vmatpush.bf16.msra.mxu0 %v3473
  %4984 = vmatpush.bf16.msra.mxu0 %v3457
  %4985 = vmatpush.bf16.msra.mxu0 %v3441
  %4986 = vmatpush.bf16.msra.mxu0 %v3425
  %4987 = vmatpush.bf16.msra.mxu0 %v3409
  %4988 = vmatpush.bf16.msra.mxu0 %v3393
  %4989 = vmatpush.bf16.msra.mxu0 %v3377
  %4990 = vmatmul.bf16.gmra.mxu0 %v1182
  %v4991 = vpop.f32.mrf.mxu0
  %v4992 = vadd.f32 %v4978, %v4991
  %v4993 = vpop.f32.mrf.mxu0
  %v4994 = vadd.f32 %v4980, %v4993
  %4995 = vdwg.mxu0
  %4996 = vmatpush.bf16.msra.mxu0 %v3617
  %4997 = vmatpush.bf16.msra.mxu0 %v3601
  %4998 = vmatpush.bf16.msra.mxu0 %v3585
  %4999 = vmatpush.bf16.msra.mxu0 %v3569
  %5000 = vmatpush.bf16.msra.mxu0 %v3553
  %5001 = vmatpush.bf16.msra.mxu0 %v3537
  %5002 = vmatpush.bf16.msra.mxu0 %v3521
  %5003 = vmatpush.bf16.msra.mxu0 %v3505
  %5004 = vmatmul.bf16.gmra.mxu0 %v1183
  %v5005 = vpop.f32.mrf.mxu0
  %v5006 = vadd.f32 %v4992, %v5005
  %v5007 = vpop.f32.mrf.mxu0
  %v5008 = vadd.f32 %v4994, %v5007
  %5009 = vdwg.mxu0
  %5010 = vmatpush.bf16.msra.mxu0 %v4285
  %5011 = vmatpush.bf16.msra.mxu0 %v3729
  %5012 = vmatpush.bf16.msra.mxu0 %v3713
  %5013 = vmatpush.bf16.msra.mxu0 %v3697
  %5014 = vmatpush.bf16.msra.mxu0 %v3681
  %5015 = vmatpush.bf16.msra.mxu0 %v3665
  %5016 = vmatpush.bf16.msra.mxu0 %v3649
  %5017 = vmatpush.bf16.msra.mxu0 %v3633
  %5018 = vmatmul.bf16.gmra.mxu0 %v4246
  %v5019 = vpop.f32.mrf.mxu0
  %v5020 = vadd.f32 %v5006, %v5019
  %v5021 = vpop.f32.mrf.mxu0
  %v5022 = vadd.f32 %v5008, %v5021
  %5023 = vdwg.mxu0
  %5024 = vmatpush.bf16.msra.mxu0 %v3362
  %5025 = vmatpush.bf16.msra.mxu0 %v3346
  %5026 = vmatpush.bf16.msra.mxu0 %v3330
  %5027 = vmatpush.bf16.msra.mxu0 %v3314
  %5028 = vmatpush.bf16.msra.mxu0 %v3298
  %5029 = vmatpush.bf16.msra.mxu0 %v3282
  %5030 = vmatpush.bf16.msra.mxu0 %v3266
  %5031 = vmatpush.bf16.msra.mxu0 %v3250
  %5032 = vmatmul.bf16.gmra.mxu0 %v1181
  %v5033 = vpop.f32.mrf.mxu0
  %v5034 = vadd.f32 %v1706, %v5033
  %v5035 = vpop.f32.mrf.mxu0
  %v5036 = vadd.f32 %v1706, %v5035
  %5037 = vdwg.mxu0
  %5038 = vmatpush.bf16.msra.mxu0 %v3490
  %5039 = vmatpush.bf16.msra.mxu0 %v3474
  %5040 = vmatpush.bf16.msra.mxu0 %v3458
  %5041 = vmatpush.bf16.msra.mxu0 %v3442
  %5042 = vmatpush.bf16.msra.mxu0 %v3426
  %5043 = vmatpush.bf16.msra.mxu0 %v3410
  %5044 = vmatpush.bf16.msra.mxu0 %v3394
  %5045 = vmatpush.bf16.msra.mxu0 %v3378
  %5046 = vmatmul.bf16.gmra.mxu0 %v1182
  %v5047 = vpop.f32.mrf.mxu0
  %v5048 = vadd.f32 %v5034, %v5047
  %v5049 = vpop.f32.mrf.mxu0
  %v5050 = vadd.f32 %v5036, %v5049
  %5051 = vdwg.mxu0
  %5052 = vmatpush.bf16.msra.mxu0 %v3618
  %5053 = vmatpush.bf16.msra.mxu0 %v3602
  %5054 = vmatpush.bf16.msra.mxu0 %v3586
  %5055 = vmatpush.bf16.msra.mxu0 %v3570
  %5056 = vmatpush.bf16.msra.mxu0 %v3554
  %5057 = vmatpush.bf16.msra.mxu0 %v3538
  %5058 = vmatpush.bf16.msra.mxu0 %v3522
  %5059 = vmatpush.bf16.msra.mxu0 %v3506
  %5060 = vmatmul.bf16.gmra.mxu0 %v1183
  %v5061 = vpop.f32.mrf.mxu0
  %v5062 = vadd.f32 %v5048, %v5061
  %v5063 = vpop.f32.mrf.mxu0
  %v5064 = vadd.f32 %v5050, %v5063
  %5065 = vdwg.mxu0
  %5066 = vmatpush.bf16.msra.mxu0 %v4288
  %5067 = vmatpush.bf16.msra.mxu0 %v3730
  %5068 = vmatpush.bf16.msra.mxu0 %v3714
  %5069 = vmatpush.bf16.msra.mxu0 %v3698
  %5070 = vmatpush.bf16.msra.mxu0 %v3682
  %5071 = vmatpush.bf16.msra.mxu0 %v3666
  %5072 = vmatpush.bf16.msra.mxu0 %v3650
  %5073 = vmatpush.bf16.msra.mxu0 %v3634
  %5074 = vmatmul.bf16.gmra.mxu0 %v4246
  %v5075 = vpop.f32.mrf.mxu0
  %v5076 = vadd.f32 %v5062, %v5075
  %v5077 = vpop.f32.mrf.mxu0
  %v5078 = vadd.f32 %v5064, %v5077
  %5079 = vdwg.mxu0
  %5080 = vmatpush.bf16.msra.mxu0 %v3363
  %5081 = vmatpush.bf16.msra.mxu0 %v3347
  %5082 = vmatpush.bf16.msra.mxu0 %v3331
  %5083 = vmatpush.bf16.msra.mxu0 %v3315
  %5084 = vmatpush.bf16.msra.mxu0 %v3299
  %5085 = vmatpush.bf16.msra.mxu0 %v3283
  %5086 = vmatpush.bf16.msra.mxu0 %v3267
  %5087 = vmatpush.bf16.msra.mxu0 %v3251
  %5088 = vmatmul.bf16.gmra.mxu0 %v1181
  %v5089 = vpop.f32.mrf.mxu0
  %v5090 = vadd.f32 %v1707, %v5089
  %v5091 = vpop.f32.mrf.mxu0
  %v5092 = vadd.f32 %v1707, %v5091
  %5093 = vdwg.mxu0
  %5094 = vmatpush.bf16.msra.mxu0 %v3491
  %5095 = vmatpush.bf16.msra.mxu0 %v3475
  %5096 = vmatpush.bf16.msra.mxu0 %v3459
  %5097 = vmatpush.bf16.msra.mxu0 %v3443
  %5098 = vmatpush.bf16.msra.mxu0 %v3427
  %5099 = vmatpush.bf16.msra.mxu0 %v3411
  %5100 = vmatpush.bf16.msra.mxu0 %v3395
  %5101 = vmatpush.bf16.msra.mxu0 %v3379
  %5102 = vmatmul.bf16.gmra.mxu0 %v1182
  %v5103 = vpop.f32.mrf.mxu0
  %v5104 = vadd.f32 %v5090, %v5103
  %v5105 = vpop.f32.mrf.mxu0
  %v5106 = vadd.f32 %v5092, %v5105
  %5107 = vdwg.mxu0
  %5108 = vmatpush.bf16.msra.mxu0 %v3619
  %5109 = vmatpush.bf16.msra.mxu0 %v3603
  %5110 = vmatpush.bf16.msra.mxu0 %v3587
  %5111 = vmatpush.bf16.msra.mxu0 %v3571
  %5112 = vmatpush.bf16.msra.mxu0 %v3555
  %5113 = vmatpush.bf16.msra.mxu0 %v3539
  %5114 = vmatpush.bf16.msra.mxu0 %v3523
  %5115 = vmatpush.bf16.msra.mxu0 %v3507
  %5116 = vmatmul.bf16.gmra.mxu0 %v1183
  %v5117 = vpop.f32.mrf.mxu0
  %v5118 = vadd.f32 %v5104, %v5117
  %v5119 = vpop.f32.mrf.mxu0
  %v5120 = vadd.f32 %v5106, %v5119
  %5121 = vdwg.mxu0
  %5122 = vmatpush.bf16.msra.mxu0 %v4291
  %5123 = vmatpush.bf16.msra.mxu0 %v3731
  %5124 = vmatpush.bf16.msra.mxu0 %v3715
  %5125 = vmatpush.bf16.msra.mxu0 %v3699
  %5126 = vmatpush.bf16.msra.mxu0 %v3683
  %5127 = vmatpush.bf16.msra.mxu0 %v3667
  %5128 = vmatpush.bf16.msra.mxu0 %v3651
  %5129 = vmatpush.bf16.msra.mxu0 %v3635
  %5130 = vmatmul.bf16.gmra.mxu0 %v4246
  %v5131 = vpop.f32.mrf.mxu0
  %v5132 = vadd.f32 %v5118, %v5131
  %v5133 = vpop.f32.mrf.mxu0
  %v5134 = vadd.f32 %v5120, %v5133
  %5135 = vdwg.mxu0
  %5136 = vmatpush.bf16.msra.mxu0 %v3364
  %5137 = vmatpush.bf16.msra.mxu0 %v3348
  %5138 = vmatpush.bf16.msra.mxu0 %v3332
  %5139 = vmatpush.bf16.msra.mxu0 %v3316
  %5140 = vmatpush.bf16.msra.mxu0 %v3300
  %5141 = vmatpush.bf16.msra.mxu0 %v3284
  %5142 = vmatpush.bf16.msra.mxu0 %v3268
  %5143 = vmatpush.bf16.msra.mxu0 %v3252
  %5144 = vmatmul.bf16.gmra.mxu0 %v1181
  %v5145 = vpop.f32.mrf.mxu0
  %v5146 = vadd.f32 %v1708, %v5145
  %v5147 = vpop.f32.mrf.mxu0
  %v5148 = vadd.f32 %v1708, %v5147
  %5149 = vdwg.mxu0
  %5150 = vmatpush.bf16.msra.mxu0 %v3492
  %5151 = vmatpush.bf16.msra.mxu0 %v3476
  %5152 = vmatpush.bf16.msra.mxu0 %v3460
  %5153 = vmatpush.bf16.msra.mxu0 %v3444
  %5154 = vmatpush.bf16.msra.mxu0 %v3428
  %5155 = vmatpush.bf16.msra.mxu0 %v3412
  %5156 = vmatpush.bf16.msra.mxu0 %v3396
  %5157 = vmatpush.bf16.msra.mxu0 %v3380
  %5158 = vmatmul.bf16.gmra.mxu0 %v1182
  %v5159 = vpop.f32.mrf.mxu0
  %v5160 = vadd.f32 %v5146, %v5159
  %v5161 = vpop.f32.mrf.mxu0
  %v5162 = vadd.f32 %v5148, %v5161
  %5163 = vdwg.mxu0
  %5164 = vmatpush.bf16.msra.mxu0 %v3620
  %5165 = vmatpush.bf16.msra.mxu0 %v3604
  %5166 = vmatpush.bf16.msra.mxu0 %v3588
  %5167 = vmatpush.bf16.msra.mxu0 %v3572
  %5168 = vmatpush.bf16.msra.mxu0 %v3556
  %5169 = vmatpush.bf16.msra.mxu0 %v3540
  %5170 = vmatpush.bf16.msra.mxu0 %v3524
  %5171 = vmatpush.bf16.msra.mxu0 %v3508
  %5172 = vmatmul.bf16.gmra.mxu0 %v1183
  %v5173 = vpop.f32.mrf.mxu0
  %v5174 = vadd.f32 %v5160, %v5173
  %v5175 = vpop.f32.mrf.mxu0
  %v5176 = vadd.f32 %v5162, %v5175
  %5177 = vdwg.mxu0
  %5178 = vmatpush.bf16.msra.mxu0 %v4294
  %5179 = vmatpush.bf16.msra.mxu0 %v3732
  %5180 = vmatpush.bf16.msra.mxu0 %v3716
  %5181 = vmatpush.bf16.msra.mxu0 %v3700
  %5182 = vmatpush.bf16.msra.mxu0 %v3684
  %5183 = vmatpush.bf16.msra.mxu0 %v3668
  %5184 = vmatpush.bf16.msra.mxu0 %v3652
  %5185 = vmatpush.bf16.msra.mxu0 %v3636
  %5186 = vmatmul.bf16.gmra.mxu0 %v4246
  %v5187 = vpop.f32.mrf.mxu0
  %v5188 = vadd.f32 %v5174, %v5187
  %v5189 = vpop.f32.mrf.mxu0
  %v5190 = vadd.f32 %v5176, %v5189
  %5191 = vdwg.mxu0
  %v5192 = vtanh.pop %v4348
  %v5193 = vtanh.pop %v4404
  %v5194 = vtanh.pop %v4460
  %v5195 = vtanh.pop %v4516
  %v5196 = vtanh.pop %v4572
  %v5197 = vtanh.pop %v4628
  %v5198 = vtanh.pop %v4684
  %v5199 = vtanh.pop %v4740
  %v5200 = vtanh.pop %v4796
  %v5201 = vtanh.pop %v4852
  %v5202 = vtanh.pop %v4908
  %v5203 = vtanh.pop %v4964
  %v5204 = vtanh.pop %v5020
  %v5205 = vtanh.pop %v5076
  %v5206 = vtanh.pop %v5132
  %v5207 = vtanh.pop %v5188
  %v5208 = vtanh.pop %v4350
  %v5209 = vtanh.pop %v4406
  %v5210 = vtanh.pop %v4462
  %v5211 = vtanh.pop %v4518
  %v5212 = vtanh.pop %v4574
  %v5213 = vtanh.pop %v4630
  %v5214 = vtanh.pop %v4686
  %v5215 = vtanh.pop %v4742
  %v5216 = vtanh.pop %v4798
  %v5217 = vtanh.pop %v4854
  %v5218 = vtanh.pop %v4910
  %v5219 = vtanh.pop %v4966
  %v5220 = vtanh.pop %v5022
  %v5221 = vtanh.pop %v5078
  %v5222 = vtanh.pop %v5134
  %v5223 = vtanh.pop %v5190
  %v5224 = vpack.c.bf16 %v5208, %v5192
  %v5225 = vpack.c.bf16 %v5209, %v5193
  %v5226 = vpack.c.bf16 %v5210, %v5194
  %v5227 = vpack.c.bf16 %v5211, %v5195
  %v5228 = vpack.c.bf16 %v5212, %v5196
  %v5229 = vpack.c.bf16 %v5213, %v5197
  %v5230 = vpack.c.bf16 %v5214, %v5198
  %v5231 = vpack.c.bf16 %v5215, %v5199
  %v5232 = vpack.c.bf16 %v5216, %v5200
  %v5233 = vpack.c.bf16 %v5217, %v5201
  %v5234 = vpack.c.bf16 %v5218, %v5202
  %v5235 = vpack.c.bf16 %v5219, %v5203
  %v5236 = vpack.c.bf16 %v5220, %v5204
  %v5237 = vpack.c.bf16 %v5221, %v5205
  %v5238 = vpack.c.bf16 %v5222, %v5206
  %v5239 = vpack.c.bf16 %v5223, %v5207
  %v5240 = vld [vmem:[%s7] sm:$0xf]
  %v5241 = vld [vmem:[%s7 + $0x4] sm:$0xf]
  %v5242 = vld [vmem:[%s7 + $0x8] sm:$0xf]
  %v5243 = vld [vmem:[%s7 + $0xc] sm:$0xf]
  %v5244 = vld [vmem:[%s7 + $0x10] sm:$0xf]
  %v5245 = vld [vmem:[%s7 + $0x14] sm:$0xf]
  %v5246 = vld [vmem:[%s7 + $0x18] sm:$0xf]
  %v5247 = vld [vmem:[%s7 + $0x1c] sm:$0xf]
  %v5248 = vld [vmem:[%s7 + $0x20] sm:$0xf]
  %v5249 = vld [vmem:[%s7 + $0x24] sm:$0xf]
  %v5250 = vld [vmem:[%s7 + $0x28] sm:$0xf]
  %v5251 = vld [vmem:[%s7 + $0x2c] sm:$0xf]
  %v5252 = vld [vmem:[%s7 + $0x30] sm:$0xf]
  %v5253 = vld [vmem:[%s7 + $0x34] sm:$0xf]
  %v5254 = vld [vmem:[%s7 + $0x38] sm:$0xf]
  %v5255 = vld [vmem:[%s7 + $0x3c] sm:$0xf]
  %v5256 = vld [vmem:[%s7 + $0x40] sm:$0xf]
  %v5257 = vld [vmem:[%s7 + $0x44] sm:$0xf]
  %v5258 = vld [vmem:[%s7 + $0x48] sm:$0xf]
  %v5259 = vld [vmem:[%s7 + $0x4c] sm:$0xf]
  %v5260 = vld [vmem:[%s7 + $0x50] sm:$0xf]
  %v5261 = vld [vmem:[%s7 + $0x54] sm:$0xf]
  %v5262 = vld [vmem:[%s7 + $0x58] sm:$0xf]
  %v5263 = vld [vmem:[%s7 + $0x5c] sm:$0xf]
  %v5264 = vld [vmem:[%s7 + $0x60] sm:$0xf]
  %v5265 = vld [vmem:[%s7 + $0x64] sm:$0xf]
  %v5266 = vld [vmem:[%s7 + $0x68] sm:$0xf]
  %v5267 = vld [vmem:[%s7 + $0x6c] sm:$0xf]
  %v5268 = vld [vmem:[%s7 + $0x70] sm:$0xf]
  %v5269 = vld [vmem:[%s7 + $0x74] sm:$0xf]
  %v5270 = vld [vmem:[%s7 + $0x78] sm:$0xf]
  %v5271 = vld [vmem:[%s7 + $0x7c] sm:$0xf]
  %v5272 = vld [vmem:[%s7 + $0x80] sm:$0xf]
  %v5273 = vld [vmem:[%s7 + $0x84] sm:$0xf]
  %v5274 = vld [vmem:[%s7 + $0x88] sm:$0xf]
  %v5275 = vld [vmem:[%s7 + $0x8c] sm:$0xf]
  %v5276 = vld [vmem:[%s7 + $0x90] sm:$0xf]
  %v5277 = vld [vmem:[%s7 + $0x94] sm:$0xf]
  %v5278 = vld [vmem:[%s7 + $0x98] sm:$0xf]
  %v5279 = vld [vmem:[%s7 + $0x9c] sm:$0xf]
  %v5280 = vld [vmem:[%s7 + $0xa0] sm:$0xf]
  %v5281 = vld [vmem:[%s7 + $0xa4] sm:$0xf]
  %v5282 = vld [vmem:[%s7 + $0xa8] sm:$0xf]
  %v5283 = vld [vmem:[%s7 + $0xac] sm:$0xf]
  %v5284 = vld [vmem:[%s7 + $0xb0] sm:$0xf]
  %v5285 = vld [vmem:[%s7 + $0xb4] sm:$0xf]
  %v5286 = vld [vmem:[%s7 + $0xb8] sm:$0xf]
  %v5287 = vld [vmem:[%s7 + $0xbc] sm:$0xf]
  %v5288 = vld [vmem:[%s7 + $0xc0] sm:$0xf]
  %v5289 = vld [vmem:[%s7 + $0xc4] sm:$0xf]
  %v5290 = vld [vmem:[%s7 + $0xc8] sm:$0xf]
  %v5291 = vld [vmem:[%s7 + $0xcc] sm:$0xf]
  %v5292 = vld [vmem:[%s7 + $0xd0] sm:$0xf]
  %v5293 = vld [vmem:[%s7 + $0xd4] sm:$0xf]
  %v5294 = vld [vmem:[%s7 + $0xd8] sm:$0xf]
  %v5295 = vld [vmem:[%s7 + $0xdc] sm:$0xf]
  %v5296 = vld [vmem:[%s7 + $0xe0] sm:$0xf]
  %v5297 = vld [vmem:[%s7 + $0xe4] sm:$0xf]
  %v5298 = vld [vmem:[%s7 + $0xe8] sm:$0xf]
  %v5299 = vld [vmem:[%s7 + $0xec] sm:$0xf]
  %v5300 = vld [vmem:[%s7 + $0xf0] sm:$0xf]
  %v5301 = vld [vmem:[%s7 + $0xf4] sm:$0xf]
  %v5302 = vld [vmem:[%s7 + $0xf8] sm:$0xf]
  %v5303 = vld [vmem:[%s7 + $0xfc] sm:$0xf]
  %v5304 = vld [vmem:[%s7 + $0x100] sm:$0xf]
  %v5305 = vld [vmem:[%s7 + $0x104] sm:$0xf]
  %v5306 = vld [vmem:[%s7 + $0x108] sm:$0xf]
  %v5307 = vld [vmem:[%s7 + $0x10c] sm:$0xf]
  %v5308 = vld [vmem:[%s7 + $0x110] sm:$0xf]
  %v5309 = vld [vmem:[%s7 + $0x114] sm:$0xf]
  %v5310 = vld [vmem:[%s7 + $0x118] sm:$0xf]
  %v5311 = vld [vmem:[%s7 + $0x11c] sm:$0xf]
  %v5312 = vld [vmem:[%s7 + $0x120] sm:$0xf]
  %v5313 = vld [vmem:[%s7 + $0x124] sm:$0xf]
  %v5314 = vld [vmem:[%s7 + $0x128] sm:$0xf]
  %v5315 = vld [vmem:[%s7 + $0x12c] sm:$0xf]
  %v5316 = vld [vmem:[%s7 + $0x130] sm:$0xf]
  %v5317 = vld [vmem:[%s7 + $0x134] sm:$0xf]
  %v5318 = vld [vmem:[%s7 + $0x138] sm:$0xf]
  %v5319 = vld [vmem:[%s7 + $0x13c] sm:$0xf]
  %v5320 = vld [vmem:[%s7 + $0x140] sm:$0xf]
  %v5321 = vld [vmem:[%s7 + $0x144] sm:$0xf]
  %v5322 = vld [vmem:[%s7 + $0x148] sm:$0xf]
  %v5323 = vld [vmem:[%s7 + $0x14c] sm:$0xf]
  %v5324 = vld [vmem:[%s7 + $0x150] sm:$0xf]
  %v5325 = vld [vmem:[%s7 + $0x154] sm:$0xf]
  %v5326 = vld [vmem:[%s7 + $0x158] sm:$0xf]
  %v5327 = vld [vmem:[%s7 + $0x15c] sm:$0xf]
  %v5328 = vld [vmem:[%s7 + $0x160] sm:$0xf]
  %v5329 = vld [vmem:[%s7 + $0x164] sm:$0xf]
  %v5330 = vld [vmem:[%s7 + $0x168] sm:$0xf]
  %v5331 = vld [vmem:[%s7 + $0x16c] sm:$0xf]
  %v5332 = vld [vmem:[%s7 + $0x170] sm:$0xf]
  %v5333 = vld [vmem:[%s7 + $0x174] sm:$0xf]
  %v5334 = vld [vmem:[%s7 + $0x178] sm:$0xf]
  %v5335 = vld [vmem:[%s7 + $0x17c] sm:$0xf]
  %v5336 = vld [vmem:[%s7 + $0x180] sm:$0xf]
  %v5337 = vld [vmem:[%s7 + $0x184] sm:$0xf]
  %v5338 = vld [vmem:[%s7 + $0x188] sm:$0xf]
  %v5339 = vld [vmem:[%s7 + $0x18c] sm:$0xf]
  %v5340 = vld [vmem:[%s7 + $0x190] sm:$0xf]
  %v5341 = vld [vmem:[%s7 + $0x194] sm:$0xf]
  %v5342 = vld [vmem:[%s7 + $0x198] sm:$0xf]
  %v5343 = vld [vmem:[%s7 + $0x19c] sm:$0xf]
  %v5344 = vld [vmem:[%s7 + $0x1a0] sm:$0xf]
  %v5345 = vld [vmem:[%s7 + $0x1a4] sm:$0xf]
  %v5346 = vld [vmem:[%s7 + $0x1a8] sm:$0xf]
  %v5347 = vld [vmem:[%s7 + $0x1ac] sm:$0xf]
  %v5348 = vld [vmem:[%s7 + $0x1b0] sm:$0xf]
  %v5349 = vld [vmem:[%s7 + $0x1b4] sm:$0xf]
  %v5350 = vld [vmem:[%s7 + $0x1b8] sm:$0xf]
  %v5351 = vld [vmem:[%s7 + $0x1bc] sm:$0xf]
  %v5352 = vld [vmem:[%s7 + $0x1c0] sm:$0xf]
  %v5353 = vld [vmem:[%s7 + $0x1c4] sm:$0xf]
  %v5354 = vld [vmem:[%s7 + $0x1c8] sm:$0xf]
  %v5355 = vld [vmem:[%s7 + $0x1cc] sm:$0xf]
  %v5356 = vld [vmem:[%s7 + $0x1d0] sm:$0xf]
  %v5357 = vld [vmem:[%s7 + $0x1d4] sm:$0xf]
  %v5358 = vld [vmem:[%s7 + $0x1d8] sm:$0xf]
  %v5359 = vld [vmem:[%s7 + $0x1dc] sm:$0xf]
  %v5360 = vld [vmem:[%s7 + $0x1e0] sm:$0xf]
  %v5361 = vld [vmem:[%s7 + $0x1e4] sm:$0xf]
  %v5362 = vld [vmem:[%s7 + $0x1e8] sm:$0xf]
  %v5363 = vld [vmem:[%s7 + $0x1ec] sm:$0xf]
  %v5364 = vld [vmem:[%s7 + $0x1f0] sm:$0xf]
  %v5365 = vld [vmem:[%s7 + $0x1f4] sm:$0xf]
  %v5366 = vld [vmem:[%s7 + $0x1f8] sm:$0xf]
  %v5367 = vld [vmem:[%s7 + $0x1fc] sm:$0xf]
  %v5368 = vld [vmem:[%s7 + $0x200] sm:$0xf]
  %v5369 = vld [vmem:[%s7 + $0x204] sm:$0xf]
  %v5370 = vld [vmem:[%s7 + $0x208] sm:$0xf]
  %v5371 = vld [vmem:[%s7 + $0x20c] sm:$0xf]
  %v5372 = vld [vmem:[%s7 + $0x210] sm:$0xf]
  %v5373 = vld [vmem:[%s7 + $0x214] sm:$0xf]
  %v5374 = vld [vmem:[%s7 + $0x218] sm:$0xf]
  %v5375 = vld [vmem:[%s7 + $0x21c] sm:$0xf]
  %v5376 = vld [vmem:[%s7 + $0x220] sm:$0xf]
  %v5377 = vld [vmem:[%s7 + $0x224] sm:$0xf]
  %v5378 = vld [vmem:[%s7 + $0x228] sm:$0xf]
  %v5379 = vld [vmem:[%s7 + $0x22c] sm:$0xf]
  %v5380 = vld [vmem:[%s7 + $0x230] sm:$0xf]
  %v5381 = vld [vmem:[%s7 + $0x234] sm:$0xf]
  %v5382 = vld [vmem:[%s7 + $0x238] sm:$0xf]
  %v5383 = vld [vmem:[%s7 + $0x23c] sm:$0xf]
  %v5384 = vld [vmem:[%s7 + $0x240] sm:$0xf]
  %v5385 = vld [vmem:[%s7 + $0x244] sm:$0xf]
  %v5386 = vld [vmem:[%s7 + $0x248] sm:$0xf]
  %v5387 = vld [vmem:[%s7 + $0x24c] sm:$0xf]
  %v5388 = vld [vmem:[%s7 + $0x250] sm:$0xf]
  %v5389 = vld [vmem:[%s7 + $0x254] sm:$0xf]
  %v5390 = vld [vmem:[%s7 + $0x258] sm:$0xf]
  %v5391 = vld [vmem:[%s7 + $0x25c] sm:$0xf]
  %v5392 = vld [vmem:[%s7 + $0x260] sm:$0xf]
  %v5393 = vld [vmem:[%s7 + $0x264] sm:$0xf]
  %v5394 = vld [vmem:[%s7 + $0x268] sm:$0xf]
  %v5395 = vld [vmem:[%s7 + $0x26c] sm:$0xf]
  %v5396 = vld [vmem:[%s7 + $0x270] sm:$0xf]
  %v5397 = vld [vmem:[%s7 + $0x274] sm:$0xf]
  %v5398 = vld [vmem:[%s7 + $0x278] sm:$0xf]
  %v5399 = vld [vmem:[%s7 + $0x27c] sm:$0xf]
  %v5400 = vld [vmem:[%s7 + $0x280] sm:$0xf]
  %v5401 = vld [vmem:[%s7 + $0x284] sm:$0xf]
  %v5402 = vld [vmem:[%s7 + $0x288] sm:$0xf]
  %v5403 = vld [vmem:[%s7 + $0x28c] sm:$0xf]
  %v5404 = vld [vmem:[%s7 + $0x290] sm:$0xf]
  %v5405 = vld [vmem:[%s7 + $0x294] sm:$0xf]
  %v5406 = vld [vmem:[%s7 + $0x298] sm:$0xf]
  %v5407 = vld [vmem:[%s7 + $0x29c] sm:$0xf]
  %v5408 = vld [vmem:[%s7 + $0x2a0] sm:$0xf]
  %v5409 = vld [vmem:[%s7 + $0x2a4] sm:$0xf]
  %v5410 = vld [vmem:[%s7 + $0x2a8] sm:$0xf]
  %v5411 = vld [vmem:[%s7 + $0x2ac] sm:$0xf]
  %v5412 = vld [vmem:[%s7 + $0x2b0] sm:$0xf]
  %v5413 = vld [vmem:[%s7 + $0x2b4] sm:$0xf]
  %v5414 = vld [vmem:[%s7 + $0x2b8] sm:$0xf]
  %v5415 = vld [vmem:[%s7 + $0x2bc] sm:$0xf]
  %v5416 = vld [vmem:[%s7 + $0x2c0] sm:$0xf]
  %v5417 = vld [vmem:[%s7 + $0x2c4] sm:$0xf]
  %v5418 = vld [vmem:[%s7 + $0x2c8] sm:$0xf]
  %v5419 = vld [vmem:[%s7 + $0x2cc] sm:$0xf]
  %v5420 = vld [vmem:[%s7 + $0x2d0] sm:$0xf]
  %v5421 = vld [vmem:[%s7 + $0x2d4] sm:$0xf]
  %v5422 = vld [vmem:[%s7 + $0x2d8] sm:$0xf]
  %v5423 = vld [vmem:[%s7 + $0x2dc] sm:$0xf]
  %v5424 = vld [vmem:[%s7 + $0x2e0] sm:$0xf]
  %v5425 = vld [vmem:[%s7 + $0x2e4] sm:$0xf]
  %v5426 = vld [vmem:[%s7 + $0x2e8] sm:$0xf]
  %v5427 = vld [vmem:[%s7 + $0x2ec] sm:$0xf]
  %v5428 = vld [vmem:[%s7 + $0x2f0] sm:$0xf]
  %v5429 = vld [vmem:[%s7 + $0x2f4] sm:$0xf]
  %v5430 = vld [vmem:[%s7 + $0x2f8] sm:$0xf]
  %v5431 = vld [vmem:[%s7 + $0x2fc] sm:$0xf]
  %v5432 = vld [vmem:[%s7 + $0x300] sm:$0xf]
  %v5433 = vld [vmem:[%s7 + $0x304] sm:$0xf]
  %v5434 = vld [vmem:[%s7 + $0x308] sm:$0xf]
  %v5435 = vld [vmem:[%s7 + $0x30c] sm:$0xf]
  %v5436 = vld [vmem:[%s7 + $0x310] sm:$0xf]
  %v5437 = vld [vmem:[%s7 + $0x314] sm:$0xf]
  %v5438 = vld [vmem:[%s7 + $0x318] sm:$0xf]
  %v5439 = vld [vmem:[%s7 + $0x31c] sm:$0xf]
  %v5440 = vld [vmem:[%s7 + $0x320] sm:$0xf]
  %v5441 = vld [vmem:[%s7 + $0x324] sm:$0xf]
  %v5442 = vld [vmem:[%s7 + $0x328] sm:$0xf]
  %v5443 = vld [vmem:[%s7 + $0x32c] sm:$0xf]
  %v5444 = vld [vmem:[%s7 + $0x330] sm:$0xf]
  %v5445 = vld [vmem:[%s7 + $0x334] sm:$0xf]
  %v5446 = vld [vmem:[%s7 + $0x338] sm:$0xf]
  %v5447 = vld [vmem:[%s7 + $0x33c] sm:$0xf]
  %v5448 = vld [vmem:[%s7 + $0x340] sm:$0xf]
  %v5449 = vld [vmem:[%s7 + $0x344] sm:$0xf]
  %v5450 = vld [vmem:[%s7 + $0x348] sm:$0xf]
  %v5451 = vld [vmem:[%s7 + $0x34c] sm:$0xf]
  %v5452 = vld [vmem:[%s7 + $0x350] sm:$0xf]
  %v5453 = vld [vmem:[%s7 + $0x354] sm:$0xf]
  %v5454 = vld [vmem:[%s7 + $0x358] sm:$0xf]
  %v5455 = vld [vmem:[%s7 + $0x35c] sm:$0xf]
  %v5456 = vld [vmem:[%s7 + $0x360] sm:$0xf]
  %v5457 = vld [vmem:[%s7 + $0x364] sm:$0xf]
  %v5458 = vld [vmem:[%s7 + $0x368] sm:$0xf]
  %v5459 = vld [vmem:[%s7 + $0x36c] sm:$0xf]
  %v5460 = vld [vmem:[%s7 + $0x370] sm:$0xf]
  %v5461 = vld [vmem:[%s7 + $0x374] sm:$0xf]
  %v5462 = vld [vmem:[%s7 + $0x378] sm:$0xf]
  %v5463 = vld [vmem:[%s7 + $0x37c] sm:$0xf]
  %v5464 = vld [vmem:[%s7 + $0x380] sm:$0xf]
  %v5465 = vld [vmem:[%s7 + $0x384] sm:$0xf]
  %v5466 = vld [vmem:[%s7 + $0x388] sm:$0xf]
  %v5467 = vld [vmem:[%s7 + $0x38c] sm:$0xf]
  %v5468 = vld [vmem:[%s7 + $0x390] sm:$0xf]
  %v5469 = vld [vmem:[%s7 + $0x394] sm:$0xf]
  %v5470 = vld [vmem:[%s7 + $0x398] sm:$0xf]
  %v5471 = vld [vmem:[%s7 + $0x39c] sm:$0xf]
  %v5472 = vld [vmem:[%s7 + $0x3a0] sm:$0xf]
  %v5473 = vld [vmem:[%s7 + $0x3a4] sm:$0xf]
  %v5474 = vld [vmem:[%s7 + $0x3a8] sm:$0xf]
  %v5475 = vld [vmem:[%s7 + $0x3ac] sm:$0xf]
  %v5476 = vld [vmem:[%s7 + $0x3b0] sm:$0xf]
  %v5477 = vld [vmem:[%s7 + $0x3b4] sm:$0xf]
  %v5478 = vld [vmem:[%s7 + $0x3b8] sm:$0xf]
  %v5479 = vld [vmem:[%s7 + $0x3bc] sm:$0xf]
  %v5480 = vld [vmem:[%s7 + $0x3c0] sm:$0xf]
  %v5481 = vld [vmem:[%s7 + $0x3c4] sm:$0xf]
  %v5482 = vld [vmem:[%s7 + $0x3c8] sm:$0xf]
  %v5483 = vld [vmem:[%s7 + $0x3cc] sm:$0xf]
  %v5484 = vld [vmem:[%s7 + $0x3d0] sm:$0xf]
  %v5485 = vld [vmem:[%s7 + $0x3d4] sm:$0xf]
  %v5486 = vld [vmem:[%s7 + $0x3d8] sm:$0xf]
  %v5487 = vld [vmem:[%s7 + $0x3dc] sm:$0xf]
  %v5488 = vld [vmem:[%s7 + $0x3e0] sm:$0xf]
  %v5489 = vld [vmem:[%s7 + $0x3e4] sm:$0xf]
  %v5490 = vld [vmem:[%s8] sm:$0x1]
  %v5492 = vperm.slane %v5490, 0
  %v5744 = vunpack.c.l.b16 %v5240
  %v5745 = vunpack.c.l.b16 %v5241
  %v5746 = vunpack.c.l.b16 %v5242
  %v5747 = vunpack.c.l.b16 %v5243
  %v5748 = vunpack.c.l.b16 %v5244
  %v5749 = vunpack.c.l.b16 %v5245
  %v5750 = vunpack.c.l.b16 %v5246
  %v5751 = vunpack.c.l.b16 %v5247
  %v5752 = vunpack.c.l.b16 %v5248
  %v5753 = vunpack.c.l.b16 %v5249
  %v5754 = vunpack.c.l.b16 %v5250
  %v5755 = vunpack.c.l.b16 %v5251
  %v5756 = vunpack.c.l.b16 %v5252
  %v5757 = vunpack.c.l.b16 %v5253
  %v5758 = vunpack.c.l.b16 %v5254
  %v5759 = vunpack.c.l.b16 %v5255
  %v5760 = vunpack.c.l.b16 %v5256
  %v5761 = vunpack.c.l.b16 %v5257
  %v5762 = vunpack.c.l.b16 %v5258
  %v5763 = vunpack.c.l.b16 %v5259
  %v5764 = vunpack.c.l.b16 %v5260
  %v5765 = vunpack.c.l.b16 %v5261
  %v5766 = vunpack.c.l.b16 %v5262
  %v5767 = vunpack.c.l.b16 %v5263
  %v5768 = vunpack.c.l.b16 %v5264
  %v5769 = vunpack.c.l.b16 %v5265
  %v5770 = vunpack.c.l.b16 %v5266
  %v5771 = vunpack.c.l.b16 %v5267
  %v5772 = vunpack.c.l.b16 %v5268
  %v5773 = vunpack.c.l.b16 %v5269
  %v5774 = vunpack.c.l.b16 %v5270
  %v5775 = vunpack.c.l.b16 %v5271
  %v5776 = vunpack.c.l.b16 %v5272
  %v5777 = vunpack.c.l.b16 %v5273
  %v5778 = vunpack.c.l.b16 %v5274
  %v5779 = vunpack.c.l.b16 %v5275
  %v5780 = vunpack.c.l.b16 %v5276
  %v5781 = vunpack.c.l.b16 %v5277
  %v5782 = vunpack.c.l.b16 %v5278
  %v5783 = vunpack.c.l.b16 %v5279
  %v5784 = vunpack.c.l.b16 %v5280
  %v5785 = vunpack.c.l.b16 %v5281
  %v5786 = vunpack.c.l.b16 %v5282
  %v5787 = vunpack.c.l.b16 %v5283
  %v5788 = vunpack.c.l.b16 %v5284
  %v5789 = vunpack.c.l.b16 %v5285
  %v5790 = vunpack.c.l.b16 %v5286
  %v5791 = vunpack.c.l.b16 %v5287
  %v5792 = vunpack.c.l.b16 %v5288
  %v5793 = vunpack.c.l.b16 %v5289
  %v5794 = vunpack.c.l.b16 %v5290
  %v5795 = vunpack.c.l.b16 %v5291
  %v5796 = vunpack.c.l.b16 %v5292
  %v5797 = vunpack.c.l.b16 %v5293
  %v5798 = vunpack.c.l.b16 %v5294
  %v5799 = vunpack.c.l.b16 %v5295
  %v5800 = vunpack.c.l.b16 %v5296
  %v5801 = vunpack.c.l.b16 %v5297
  %v5802 = vunpack.c.l.b16 %v5298
  %v5803 = vunpack.c.l.b16 %v5299
  %v5804 = vunpack.c.l.b16 %v5300
  %v5805 = vunpack.c.l.b16 %v5301
  %v5806 = vunpack.c.l.b16 %v5302
  %v5807 = vunpack.c.l.b16 %v5303
  %v5808 = vunpack.c.l.b16 %v5304
  %v5809 = vunpack.c.l.b16 %v5305
  %v5810 = vunpack.c.l.b16 %v5306
  %v5811 = vunpack.c.l.b16 %v5307
  %v5812 = vunpack.c.l.b16 %v5308
  %v5813 = vunpack.c.l.b16 %v5309
  %v5814 = vunpack.c.l.b16 %v5310
  %v5815 = vunpack.c.l.b16 %v5311
  %v5816 = vunpack.c.l.b16 %v5312
  %v5817 = vunpack.c.l.b16 %v5313
  %v5818 = vunpack.c.l.b16 %v5314
  %v5819 = vunpack.c.l.b16 %v5315
  %v5820 = vunpack.c.l.b16 %v5316
  %v5821 = vunpack.c.l.b16 %v5317
  %v5822 = vunpack.c.l.b16 %v5318
  %v5823 = vunpack.c.l.b16 %v5319
  %v5824 = vunpack.c.l.b16 %v5320
  %v5825 = vunpack.c.l.b16 %v5321
  %v5826 = vunpack.c.l.b16 %v5322
  %v5827 = vunpack.c.l.b16 %v5323
  %v5828 = vunpack.c.l.b16 %v5324
  %v5829 = vunpack.c.l.b16 %v5325
  %v5830 = vunpack.c.l.b16 %v5326
  %v5831 = vunpack.c.l.b16 %v5327
  %v5832 = vunpack.c.l.b16 %v5328
  %v5833 = vunpack.c.l.b16 %v5329
  %v5834 = vunpack.c.l.b16 %v5330
  %v5835 = vunpack.c.l.b16 %v5331
  %v5836 = vunpack.c.l.b16 %v5332
  %v5837 = vunpack.c.l.b16 %v5333
  %v5838 = vunpack.c.l.b16 %v5334
  %v5839 = vunpack.c.l.b16 %v5335
  %v5840 = vunpack.c.l.b16 %v5336
  %v5841 = vunpack.c.l.b16 %v5337
  %v5842 = vunpack.c.l.b16 %v5338
  %v5843 = vunpack.c.l.b16 %v5339
  %v5844 = vunpack.c.l.b16 %v5340
  %v5845 = vunpack.c.l.b16 %v5341
  %v5846 = vunpack.c.l.b16 %v5342
  %v5847 = vunpack.c.l.b16 %v5343
  %v5848 = vunpack.c.l.b16 %v5344
  %v5849 = vunpack.c.l.b16 %v5345
  %v5850 = vunpack.c.l.b16 %v5346
  %v5851 = vunpack.c.l.b16 %v5347
  %v5852 = vunpack.c.l.b16 %v5348
  %v5853 = vunpack.c.l.b16 %v5349
  %v5854 = vunpack.c.l.b16 %v5350
  %v5855 = vunpack.c.l.b16 %v5351
  %v5856 = vunpack.c.l.b16 %v5352
  %v5857 = vunpack.c.l.b16 %v5353
  %v5858 = vunpack.c.l.b16 %v5354
  %v5859 = vunpack.c.l.b16 %v5355
  %v5860 = vunpack.c.l.b16 %v5356
  %v5861 = vunpack.c.l.b16 %v5357
  %v5862 = vunpack.c.l.b16 %v5358
  %v5863 = vunpack.c.l.b16 %v5359
  %v5864 = vunpack.c.l.b16 %v5360
  %v5865 = vunpack.c.l.b16 %v5361
  %v5866 = vunpack.c.l.b16 %v5362
  %v5867 = vunpack.c.l.b16 %v5363
  %v5868 = vunpack.c.l.b16 %v5364
  %v5869 = vunpack.c.l.b16 %v5365
  %v5870 = vunpack.c.l.b16 %v5366
  %v5871 = vunpack.c.l.b16 %v5367
  %v5872 = vunpack.c.l.b16 %v5368
  %v5873 = vunpack.c.l.b16 %v5369
  %v5874 = vunpack.c.l.b16 %v5370
  %v5875 = vunpack.c.l.b16 %v5371
  %v5876 = vunpack.c.l.b16 %v5372
  %v5877 = vunpack.c.l.b16 %v5373
  %v5878 = vunpack.c.l.b16 %v5374
  %v5879 = vunpack.c.l.b16 %v5375
  %v5880 = vunpack.c.l.b16 %v5376
  %v5881 = vunpack.c.l.b16 %v5377
  %v5882 = vunpack.c.l.b16 %v5378
  %v5883 = vunpack.c.l.b16 %v5379
  %v5884 = vunpack.c.l.b16 %v5380
  %v5885 = vunpack.c.l.b16 %v5381
  %v5886 = vunpack.c.l.b16 %v5382
  %v5887 = vunpack.c.l.b16 %v5383
  %v5888 = vunpack.c.l.b16 %v5384
  %v5889 = vunpack.c.l.b16 %v5385
  %v5890 = vunpack.c.l.b16 %v5386
  %v5891 = vunpack.c.l.b16 %v5387
  %v5892 = vunpack.c.l.b16 %v5388
  %v5893 = vunpack.c.l.b16 %v5389
  %v5894 = vunpack.c.l.b16 %v5390
  %v5895 = vunpack.c.l.b16 %v5391
  %v5896 = vunpack.c.l.b16 %v5392
  %v5897 = vunpack.c.l.b16 %v5393
  %v5898 = vunpack.c.l.b16 %v5394
  %v5899 = vunpack.c.l.b16 %v5395
  %v5900 = vunpack.c.l.b16 %v5396
  %v5901 = vunpack.c.l.b16 %v5397
  %v5902 = vunpack.c.l.b16 %v5398
  %v5903 = vunpack.c.l.b16 %v5399
  %v5904 = vunpack.c.l.b16 %v5400
  %v5905 = vunpack.c.l.b16 %v5401
  %v5906 = vunpack.c.l.b16 %v5402
  %v5907 = vunpack.c.l.b16 %v5403
  %v5908 = vunpack.c.l.b16 %v5404
  %v5909 = vunpack.c.l.b16 %v5405
  %v5910 = vunpack.c.l.b16 %v5406
  %v5911 = vunpack.c.l.b16 %v5407
  %v5912 = vunpack.c.l.b16 %v5408
  %v5913 = vunpack.c.l.b16 %v5409
  %v5914 = vunpack.c.l.b16 %v5410
  %v5915 = vunpack.c.l.b16 %v5411
  %v5916 = vunpack.c.l.b16 %v5412
  %v5917 = vunpack.c.l.b16 %v5413
  %v5918 = vunpack.c.l.b16 %v5414
  %v5919 = vunpack.c.l.b16 %v5415
  %v5920 = vunpack.c.l.b16 %v5416
  %v5921 = vunpack.c.l.b16 %v5417
  %v5922 = vunpack.c.l.b16 %v5418
  %v5923 = vunpack.c.l.b16 %v5419
  %v5924 = vunpack.c.l.b16 %v5420
  %v5925 = vunpack.c.l.b16 %v5421
  %v5926 = vunpack.c.l.b16 %v5422
  %v5927 = vunpack.c.l.b16 %v5423
  %v5928 = vunpack.c.l.b16 %v5424
  %v5929 = vunpack.c.l.b16 %v5425
  %v5930 = vunpack.c.l.b16 %v5426
  %v5931 = vunpack.c.l.b16 %v5427
  %v5932 = vunpack.c.l.b16 %v5428
  %v5933 = vunpack.c.l.b16 %v5429
  %v5934 = vunpack.c.l.b16 %v5430
  %v5935 = vunpack.c.l.b16 %v5431
  %v5936 = vunpack.c.l.b16 %v5432
  %v5937 = vunpack.c.l.b16 %v5433
  %v5938 = vunpack.c.l.b16 %v5434
  %v5939 = vunpack.c.l.b16 %v5435
  %v5940 = vunpack.c.l.b16 %v5436
  %v5941 = vunpack.c.l.b16 %v5437
  %v5942 = vunpack.c.l.b16 %v5438
  %v5943 = vunpack.c.l.b16 %v5439
  %v5944 = vunpack.c.l.b16 %v5440
  %v5945 = vunpack.c.l.b16 %v5441
  %v5946 = vunpack.c.l.b16 %v5442
  %v5947 = vunpack.c.l.b16 %v5443
  %v5948 = vunpack.c.l.b16 %v5444
  %v5949 = vunpack.c.l.b16 %v5445
  %v5950 = vunpack.c.l.b16 %v5446
  %v5951 = vunpack.c.l.b16 %v5447
  %v5952 = vunpack.c.l.b16 %v5448
  %v5953 = vunpack.c.l.b16 %v5449
  %v5954 = vunpack.c.l.b16 %v5450
  %v5955 = vunpack.c.l.b16 %v5451
  %v5956 = vunpack.c.l.b16 %v5452
  %v5957 = vunpack.c.l.b16 %v5453
  %v5958 = vunpack.c.l.b16 %v5454
  %v5959 = vunpack.c.l.b16 %v5455
  %v5960 = vunpack.c.l.b16 %v5456
  %v5961 = vunpack.c.l.b16 %v5457
  %v5962 = vunpack.c.l.b16 %v5458
  %v5963 = vunpack.c.l.b16 %v5459
  %v5964 = vunpack.c.l.b16 %v5460
  %v5965 = vunpack.c.l.b16 %v5461
  %v5966 = vunpack.c.l.b16 %v5462
  %v5967 = vunpack.c.l.b16 %v5463
  %v5968 = vunpack.c.l.b16 %v5464
  %v5969 = vunpack.c.l.b16 %v5465
  %v5970 = vunpack.c.l.b16 %v5466
  %v5971 = vunpack.c.l.b16 %v5467
  %v5972 = vunpack.c.l.b16 %v5468
  %v5973 = vunpack.c.l.b16 %v5469
  %v5974 = vunpack.c.l.b16 %v5470
  %v5975 = vunpack.c.l.b16 %v5471
  %v5976 = vunpack.c.l.b16 %v5472
  %v5977 = vunpack.c.l.b16 %v5473
  %v5978 = vunpack.c.l.b16 %v5474
  %v5979 = vunpack.c.l.b16 %v5475
  %v5980 = vunpack.c.l.b16 %v5476
  %v5981 = vunpack.c.l.b16 %v5477
  %v5982 = vunpack.c.l.b16 %v5478
  %v5983 = vunpack.c.l.b16 %v5479
  %v5984 = vunpack.c.l.b16 %v5480
  %v5985 = vunpack.c.l.b16 %v5481
  %v5986 = vunpack.c.l.b16 %v5482
  %v5987 = vunpack.c.l.b16 %v5483
  %v5988 = vunpack.c.l.b16 %v5484
  %v5989 = vunpack.c.l.b16 %v5485
  %v5990 = vunpack.c.l.b16 %v5486
  %v5991 = vunpack.c.l.b16 %v5487
  %v5992 = vunpack.c.l.b16 %v5488
  %v5993 = vunpack.c.l.b16 %v5489
  %v5994 = vpack.c.b16 %v5745, %v5744
  %v5995 = vpack.c.b16 %v5747, %v5746
  %v5996 = vpack.c.b16 %v5749, %v5748
  %v5997 = vpack.c.b16 %v5751, %v5750
  %v5998 = vpack.c.b16 %v5753, %v5752
  %v5999 = vpack.c.b16 %v5755, %v5754
  %v6000 = vpack.c.b16 %v5757, %v5756
  %v6001 = vpack.c.b16 %v5759, %v5758
  %v6002 = vpack.c.b16 %v5761, %v5760
  %v6003 = vpack.c.b16 %v5763, %v5762
  %v6004 = vpack.c.b16 %v5765, %v5764
  %v6005 = vpack.c.b16 %v5767, %v5766
  %v6006 = vpack.c.b16 %v5769, %v5768
  %v6007 = vpack.c.b16 %v5771, %v5770
  %v6008 = vpack.c.b16 %v5773, %v5772
  %v6009 = vpack.c.b16 %v5775, %v5774
  %v6010 = vpack.c.b16 %v5777, %v5776
  %v6011 = vpack.c.b16 %v5779, %v5778
  %v6012 = vpack.c.b16 %v5781, %v5780
  %v6013 = vpack.c.b16 %v5783, %v5782
  %v6014 = vpack.c.b16 %v5785, %v5784
  %v6015 = vpack.c.b16 %v5787, %v5786
  %v6016 = vpack.c.b16 %v5789, %v5788
  %v6017 = vpack.c.b16 %v5791, %v5790
  %v6018 = vpack.c.b16 %v5793, %v5792
  %v6019 = vpack.c.b16 %v5795, %v5794
  %v6020 = vpack.c.b16 %v5797, %v5796
  %v6021 = vpack.c.b16 %v5799, %v5798
  %v6022 = vpack.c.b16 %v5801, %v5800
  %v6023 = vpack.c.b16 %v5803, %v5802
  %v6024 = vpack.c.b16 %v5805, %v5804
  %v6025 = vpack.c.b16 %v5807, %v5806
  %v6026 = vpack.c.b16 %v5809, %v5808
  %v6027 = vpack.c.b16 %v5811, %v5810
  %v6028 = vpack.c.b16 %v5813, %v5812
  %v6029 = vpack.c.b16 %v5815, %v5814
  %v6030 = vpack.c.b16 %v5817, %v5816
  %v6031 = vpack.c.b16 %v5819, %v5818
  %v6032 = vpack.c.b16 %v5821, %v5820
  %v6033 = vpack.c.b16 %v5823, %v5822
  %v6034 = vpack.c.b16 %v5825, %v5824
  %v6035 = vpack.c.b16 %v5827, %v5826
  %v6036 = vpack.c.b16 %v5829, %v5828
  %v6037 = vpack.c.b16 %v5831, %v5830
  %v6038 = vpack.c.b16 %v5833, %v5832
  %v6039 = vpack.c.b16 %v5835, %v5834
  %v6040 = vpack.c.b16 %v5837, %v5836
  %v6041 = vpack.c.b16 %v5839, %v5838
  %v6042 = vpack.c.b16 %v5841, %v5840
  %v6043 = vpack.c.b16 %v5843, %v5842
  %v6044 = vpack.c.b16 %v5845, %v5844
  %v6045 = vpack.c.b16 %v5847, %v5846
  %v6046 = vpack.c.b16 %v5849, %v5848
  %v6047 = vpack.c.b16 %v5851, %v5850
  %v6048 = vpack.c.b16 %v5853, %v5852
  %v6049 = vpack.c.b16 %v5855, %v5854
  %v6050 = vpack.c.b16 %v5857, %v5856
  %v6051 = vpack.c.b16 %v5859, %v5858
  %v6052 = vpack.c.b16 %v5861, %v5860
  %v6053 = vpack.c.b16 %v5863, %v5862
  %v6054 = vpack.c.b16 %v5865, %v5864
  %v6055 = vpack.c.b16 %v5867, %v5866
  %v6056 = vpack.c.b16 %v5869, %v5868
  %v6057 = vpack.c.b16 %v5871, %v5870
  %v6058 = vpack.c.b16 %v5873, %v5872
  %v6059 = vpack.c.b16 %v5875, %v5874
  %v6060 = vpack.c.b16 %v5877, %v5876
  %v6061 = vpack.c.b16 %v5879, %v5878
  %v6062 = vpack.c.b16 %v5881, %v5880
  %v6063 = vpack.c.b16 %v5883, %v5882
  %v6064 = vpack.c.b16 %v5885, %v5884
  %v6065 = vpack.c.b16 %v5887, %v5886
  %v6066 = vpack.c.b16 %v5889, %v5888
  %v6067 = vpack.c.b16 %v5891, %v5890
  %v6068 = vpack.c.b16 %v5893, %v5892
  %v6069 = vpack.c.b16 %v5895, %v5894
  %v6070 = vpack.c.b16 %v5897, %v5896
  %v6071 = vpack.c.b16 %v5899, %v5898
  %v6072 = vpack.c.b16 %v5901, %v5900
  %v6073 = vpack.c.b16 %v5903, %v5902
  %v6074 = vpack.c.b16 %v5905, %v5904
  %v6075 = vpack.c.b16 %v5907, %v5906
  %v6076 = vpack.c.b16 %v5909, %v5908
  %v6077 = vpack.c.b16 %v5911, %v5910
  %v6078 = vpack.c.b16 %v5913, %v5912
  %v6079 = vpack.c.b16 %v5915, %v5914
  %v6080 = vpack.c.b16 %v5917, %v5916
  %v6081 = vpack.c.b16 %v5919, %v5918
  %v6082 = vpack.c.b16 %v5921, %v5920
  %v6083 = vpack.c.b16 %v5923, %v5922
  %v6084 = vpack.c.b16 %v5925, %v5924
  %v6085 = vpack.c.b16 %v5927, %v5926
  %v6086 = vpack.c.b16 %v5929, %v5928
  %v6087 = vpack.c.b16 %v5931, %v5930
  %v6088 = vpack.c.b16 %v5933, %v5932
  %v6089 = vpack.c.b16 %v5935, %v5934
  %v6090 = vpack.c.b16 %v5937, %v5936
  %v6091 = vpack.c.b16 %v5939, %v5938
  %v6092 = vpack.c.b16 %v5941, %v5940
  %v6093 = vpack.c.b16 %v5943, %v5942
  %v6094 = vpack.c.b16 %v5945, %v5944
  %v6095 = vpack.c.b16 %v5947, %v5946
  %v6096 = vpack.c.b16 %v5949, %v5948
  %v6097 = vpack.c.b16 %v5951, %v5950
  %v6098 = vpack.c.b16 %v5953, %v5952
  %v6099 = vpack.c.b16 %v5955, %v5954
  %v6100 = vpack.c.b16 %v5957, %v5956
  %v6101 = vpack.c.b16 %v5959, %v5958
  %v6102 = vpack.c.b16 %v5961, %v5960
  %v6103 = vpack.c.b16 %v5963, %v5962
  %v6104 = vpack.c.b16 %v5965, %v5964
  %v6105 = vpack.c.b16 %v5967, %v5966
  %v6106 = vpack.c.b16 %v5969, %v5968
  %v6107 = vpack.c.b16 %v5971, %v5970
  %v6108 = vpack.c.b16 %v5973, %v5972
  %v6109 = vpack.c.b16 %v5975, %v5974
  %v6110 = vpack.c.b16 %v5977, %v5976
  %v6111 = vpack.c.b16 %v5979, %v5978
  %v6112 = vpack.c.b16 %v5981, %v5980
  %v6113 = vpack.c.b16 %v5983, %v5982
  %v6114 = vpack.c.b16 %v5985, %v5984
  %v6115 = vpack.c.b16 %v5987, %v5986
  %v6116 = vpack.c.b16 %v5989, %v5988
  %v6117 = vpack.c.b16 %v5991, %v5990
  %v6118 = vpack.c.b16 %v5993, %v5992
  %vm6244 = vcmask 654336
  %v6246 = vsel %vm6244, %v5239, 0
  %6248 = vmatpush.bf16.msra.mxu0 %v6001
  %6249 = vmatpush.bf16.msra.mxu0 %v6000
  %6250 = vmatpush.bf16.msra.mxu0 %v5999
  %6251 = vmatpush.bf16.msra.mxu0 %v5998
  %6252 = vmatpush.bf16.msra.mxu0 %v5997
  %6253 = vmatpush.bf16.msra.mxu0 %v5996
  %6254 = vmatpush.bf16.msra.mxu0 %v5995
  %6255 = vmatpush.bf16.msra.mxu0 %v5994
  %6256 = vmatmul.bf16.gmra.mxu0 %v5224
  %v6257 = vpop.f32.mrf.mxu0
  %v6258 = vadd.f32 %v5492, %v6257
  %v6259 = vpop.f32.mrf.mxu0
  %v6260 = vadd.f32 %v5492, %v6259
  %6261 = vdwg.mxu0
  %6262 = vmatpush.bf16.msra.mxu0 %v6009
  %6263 = vmatpush.bf16.msra.mxu0 %v6008
  %6264 = vmatpush.bf16.msra.mxu0 %v6007
  %6265 = vmatpush.bf16.msra.mxu0 %v6006
  %6266 = vmatpush.bf16.msra.mxu0 %v6005
  %6267 = vmatpush.bf16.msra.mxu0 %v6004
  %6268 = vmatpush.bf16.msra.mxu0 %v6003
  %6269 = vmatpush.bf16.msra.mxu0 %v6002
  %6270 = vmatmul.bf16.gmra.mxu0 %v5225
  %v6271 = vpop.f32.mrf.mxu0
  %v6272 = vadd.f32 %v6258, %v6271
  %v6273 = vpop.f32.mrf.mxu0
  %v6274 = vadd.f32 %v6260, %v6273
  %6275 = vdwg.mxu0
  %6276 = vmatpush.bf16.msra.mxu0 %v6017
  %6277 = vmatpush.bf16.msra.mxu0 %v6016
  %6278 = vmatpush.bf16.msra.mxu0 %v6015
  %6279 = vmatpush.bf16.msra.mxu0 %v6014
  %6280 = vmatpush.bf16.msra.mxu0 %v6013
  %6281 = vmatpush.bf16.msra.mxu0 %v6012
  %6282 = vmatpush.bf16.msra.mxu0 %v6011
  %6283 = vmatpush.bf16.msra.mxu0 %v6010
  %6284 = vmatmul.bf16.gmra.mxu0 %v5226
  %v6285 = vpop.f32.mrf.mxu0
  %v6286 = vadd.f32 %v6272, %v6285
  %v6287 = vpop.f32.mrf.mxu0
  %v6288 = vadd.f32 %v6274, %v6287
  %6289 = vdwg.mxu0
  %6290 = vmatpush.bf16.msra.mxu0 %v6025
  %6291 = vmatpush.bf16.msra.mxu0 %v6024
  %6292 = vmatpush.bf16.msra.mxu0 %v6023
  %6293 = vmatpush.bf16.msra.mxu0 %v6022
  %6294 = vmatpush.bf16.msra.mxu0 %v6021
  %6295 = vmatpush.bf16.msra.mxu0 %v6020
  %6296 = vmatpush.bf16.msra.mxu0 %v6019
  %6297 = vmatpush.bf16.msra.mxu0 %v6018
  %6298 = vmatmul.bf16.gmra.mxu0 %v5227
  %v6299 = vpop.f32.mrf.mxu0
  %v6300 = vadd.f32 %v6286, %v6299
  %v6301 = vpop.f32.mrf.mxu0
  %v6302 = vadd.f32 %v6288, %v6301
  %6303 = vdwg.mxu0
  %6304 = vmatpush.bf16.msra.mxu0 %v6033
  %6305 = vmatpush.bf16.msra.mxu0 %v6032
  %6306 = vmatpush.bf16.msra.mxu0 %v6031
  %6307 = vmatpush.bf16.msra.mxu0 %v6030
  %6308 = vmatpush.bf16.msra.mxu0 %v6029
  %6309 = vmatpush.bf16.msra.mxu0 %v6028
  %6310 = vmatpush.bf16.msra.mxu0 %v6027
  %6311 = vmatpush.bf16.msra.mxu0 %v6026
  %6312 = vmatmul.bf16.gmra.mxu0 %v5228
  %v6313 = vpop.f32.mrf.mxu0
  %v6314 = vadd.f32 %v6300, %v6313
  %v6315 = vpop.f32.mrf.mxu0
  %v6316 = vadd.f32 %v6302, %v6315
  %6317 = vdwg.mxu0
  %6318 = vmatpush.bf16.msra.mxu0 %v6041
  %6319 = vmatpush.bf16.msra.mxu0 %v6040
  %6320 = vmatpush.bf16.msra.mxu0 %v6039
  %6321 = vmatpush.bf16.msra.mxu0 %v6038
  %6322 = vmatpush.bf16.msra.mxu0 %v6037
  %6323 = vmatpush.bf16.msra.mxu0 %v6036
  %6324 = vmatpush.bf16.msra.mxu0 %v6035
  %6325 = vmatpush.bf16.msra.mxu0 %v6034
  %6326 = vmatmul.bf16.gmra.mxu0 %v5229
  %v6327 = vpop.f32.mrf.mxu0
  %v6328 = vadd.f32 %v6314, %v6327
  %v6329 = vpop.f32.mrf.mxu0
  %v6330 = vadd.f32 %v6316, %v6329
  %6331 = vdwg.mxu0
  %6332 = vmatpush.bf16.msra.mxu0 %v6049
  %6333 = vmatpush.bf16.msra.mxu0 %v6048
  %6334 = vmatpush.bf16.msra.mxu0 %v6047
  %6335 = vmatpush.bf16.msra.mxu0 %v6046
  %6336 = vmatpush.bf16.msra.mxu0 %v6045
  %6337 = vmatpush.bf16.msra.mxu0 %v6044
  %6338 = vmatpush.bf16.msra.mxu0 %v6043
  %6339 = vmatpush.bf16.msra.mxu0 %v6042
  %6340 = vmatmul.bf16.gmra.mxu0 %v5230
  %v6341 = vpop.f32.mrf.mxu0
  %v6342 = vadd.f32 %v6328, %v6341
  %v6343 = vpop.f32.mrf.mxu0
  %v6344 = vadd.f32 %v6330, %v6343
  %6345 = vdwg.mxu0
  %6346 = vmatpush.bf16.msra.mxu0 %v6057
  %6347 = vmatpush.bf16.msra.mxu0 %v6056
  %6348 = vmatpush.bf16.msra.mxu0 %v6055
  %6349 = vmatpush.bf16.msra.mxu0 %v6054
  %6350 = vmatpush.bf16.msra.mxu0 %v6053
  %6351 = vmatpush.bf16.msra.mxu0 %v6052
  %6352 = vmatpush.bf16.msra.mxu0 %v6051
  %6353 = vmatpush.bf16.msra.mxu0 %v6050
  %6354 = vmatmul.bf16.gmra.mxu0 %v5231
  %v6355 = vpop.f32.mrf.mxu0
  %v6356 = vadd.f32 %v6342, %v6355
  %v6357 = vpop.f32.mrf.mxu0
  %v6358 = vadd.f32 %v6344, %v6357
  %6359 = vdwg.mxu0
  %6360 = vmatpush.bf16.msra.mxu0 %v6065
  %6361 = vmatpush.bf16.msra.mxu0 %v6064
  %6362 = vmatpush.bf16.msra.mxu0 %v6063
  %6363 = vmatpush.bf16.msra.mxu0 %v6062
  %6364 = vmatpush.bf16.msra.mxu0 %v6061
  %6365 = vmatpush.bf16.msra.mxu0 %v6060
  %6366 = vmatpush.bf16.msra.mxu0 %v6059
  %6367 = vmatpush.bf16.msra.mxu0 %v6058
  %6368 = vmatmul.bf16.gmra.mxu0 %v5232
  %v6369 = vpop.f32.mrf.mxu0
  %v6370 = vadd.f32 %v6356, %v6369
  %v6371 = vpop.f32.mrf.mxu0
  %v6372 = vadd.f32 %v6358, %v6371
  %6373 = vdwg.mxu0
  %6374 = vmatpush.bf16.msra.mxu0 %v6073
  %6375 = vmatpush.bf16.msra.mxu0 %v6072
  %6376 = vmatpush.bf16.msra.mxu0 %v6071
  %6377 = vmatpush.bf16.msra.mxu0 %v6070
  %6378 = vmatpush.bf16.msra.mxu0 %v6069
  %6379 = vmatpush.bf16.msra.mxu0 %v6068
  %6380 = vmatpush.bf16.msra.mxu0 %v6067
  %6381 = vmatpush.bf16.msra.mxu0 %v6066
  %6382 = vmatmul.bf16.gmra.mxu0 %v5233
  %v6383 = vpop.f32.mrf.mxu0
  %v6384 = vadd.f32 %v6370, %v6383
  %v6385 = vpop.f32.mrf.mxu0
  %v6386 = vadd.f32 %v6372, %v6385
  %6387 = vdwg.mxu0
  %6388 = vmatpush.bf16.msra.mxu0 %v6081
  %6389 = vmatpush.bf16.msra.mxu0 %v6080
  %6390 = vmatpush.bf16.msra.mxu0 %v6079
  %6391 = vmatpush.bf16.msra.mxu0 %v6078
  %6392 = vmatpush.bf16.msra.mxu0 %v6077
  %6393 = vmatpush.bf16.msra.mxu0 %v6076
  %6394 = vmatpush.bf16.msra.mxu0 %v6075
  %6395 = vmatpush.bf16.msra.mxu0 %v6074
  %6396 = vmatmul.bf16.gmra.mxu0 %v5234
  %v6397 = vpop.f32.mrf.mxu0
  %v6398 = vadd.f32 %v6384, %v6397
  %v6399 = vpop.f32.mrf.mxu0
  %v6400 = vadd.f32 %v6386, %v6399
  %6401 = vdwg.mxu0
  %6402 = vmatpush.bf16.msra.mxu0 %v6089
  %6403 = vmatpush.bf16.msra.mxu0 %v6088
  %6404 = vmatpush.bf16.msra.mxu0 %v6087
  %6405 = vmatpush.bf16.msra.mxu0 %v6086
  %6406 = vmatpush.bf16.msra.mxu0 %v6085
  %6407 = vmatpush.bf16.msra.mxu0 %v6084
  %6408 = vmatpush.bf16.msra.mxu0 %v6083
  %6409 = vmatpush.bf16.msra.mxu0 %v6082
  %6410 = vmatmul.bf16.gmra.mxu0 %v5235
  %v6411 = vpop.f32.mrf.mxu0
  %v6412 = vadd.f32 %v6398, %v6411
  %v6413 = vpop.f32.mrf.mxu0
  %v6414 = vadd.f32 %v6400, %v6413
  %6415 = vdwg.mxu0
  %6416 = vmatpush.bf16.msra.mxu0 %v6097
  %6417 = vmatpush.bf16.msra.mxu0 %v6096
  %6418 = vmatpush.bf16.msra.mxu0 %v6095
  %6419 = vmatpush.bf16.msra.mxu0 %v6094
  %6420 = vmatpush.bf16.msra.mxu0 %v6093
  %6421 = vmatpush.bf16.msra.mxu0 %v6092
  %6422 = vmatpush.bf16.msra.mxu0 %v6091
  %6423 = vmatpush.bf16.msra.mxu0 %v6090
  %6424 = vmatmul.bf16.gmra.mxu0 %v5236
  %v6425 = vpop.f32.mrf.mxu0
  %v6426 = vadd.f32 %v6412, %v6425
  %v6427 = vpop.f32.mrf.mxu0
  %v6428 = vadd.f32 %v6414, %v6427
  %6429 = vdwg.mxu0
  %6430 = vmatpush.bf16.msra.mxu0 %v6105
  %6431 = vmatpush.bf16.msra.mxu0 %v6104
  %6432 = vmatpush.bf16.msra.mxu0 %v6103
  %6433 = vmatpush.bf16.msra.mxu0 %v6102
  %6434 = vmatpush.bf16.msra.mxu0 %v6101
  %6435 = vmatpush.bf16.msra.mxu0 %v6100
  %6436 = vmatpush.bf16.msra.mxu0 %v6099
  %6437 = vmatpush.bf16.msra.mxu0 %v6098
  %6438 = vmatmul.bf16.gmra.mxu0 %v5237
  %v6439 = vpop.f32.mrf.mxu0
  %v6440 = vadd.f32 %v6426, %v6439
  %v6441 = vpop.f32.mrf.mxu0
  %v6442 = vadd.f32 %v6428, %v6441
  %6443 = vdwg.mxu0
  %6444 = vmatpush.bf16.msra.mxu0 %v6113
  %6445 = vmatpush.bf16.msra.mxu0 %v6112
  %6446 = vmatpush.bf16.msra.mxu0 %v6111
  %6447 = vmatpush.bf16.msra.mxu0 %v6110
  %6448 = vmatpush.bf16.msra.mxu0 %v6109
  %6449 = vmatpush.bf16.msra.mxu0 %v6108
  %6450 = vmatpush.bf16.msra.mxu0 %v6107
  %6451 = vmatpush.bf16.msra.mxu0 %v6106
  %6452 = vmatmul.bf16.gmra.mxu0 %v5238
  %v6453 = vpop.f32.mrf.mxu0
  %v6454 = vadd.f32 %v6440, %v6453
  %v6455 = vpop.f32.mrf.mxu0
  %v6456 = vadd.f32 %v6442, %v6455
  %6457 = vdwg.mxu0
  %6458 = vmatpush.bf16.msra.mxu0 0
  %6459 = vmatpush.bf16.msra.mxu0 0
  %6460 = vmatpush.bf16.msra.mxu0 0
  %6461 = vmatpush.bf16.msra.mxu0 %v6118
  %6462 = vmatpush.bf16.msra.mxu0 %v6117
  %6463 = vmatpush.bf16.msra.mxu0 %v6116
  %6464 = vmatpush.bf16.msra.mxu0 %v6115
  %6465 = vmatpush.bf16.msra.mxu0 %v6114
  %6466 = vmatmul.bf16.gmra.mxu0 %v6246
  %v6467 = vpop.f32.mrf.mxu0
  %v6468 = vadd.f32 %v6454, %v6467
  %v6469 = vpop.f32.mrf.mxu0
  %v6470 = vadd.f32 %v6456, %v6469
  %6471 = vdwg.mxu0
  %vm6472 = vcmask 64512
  %6473 = vst.msk [vmem:[%s9] sm:$0xff] %vm6472, %v6468
  %6474 = vst.msk [vmem:[%s9 + $0x8] sm:$0xff] %vm6472, %v6470
  // Predicated region
  $region38: #{tpu_custom_call.1} parent=0 // pred_check
    _
  $region39: #{tpu_custom_call.1} parent=0 // pred_check_branch
    %6476 = sbr.rel (0) target = $region41
  $region40: #{tpu_custom_call.1} parent=0 // pred_region
    _
  $region41: #{tpu_custom_call.1} parent=0 // pred_fallthru
    _
  // Predicated region
  $region42: #{tpu_custom_call.1} parent=0 // pred_check
    _
  $region43: #{tpu_custom_call.1} parent=0 // pred_check_branch
    %6478 = sbr.rel (0) target = $region45
  $region44: #{tpu_custom_call.1} parent=0 // pred_region
    _
  $region45: #{tpu_custom_call.1} parent=0 // pred_fallthru
    _

</llo_original>
